<compile_context>
chip_gen: v7x
topology: tpu7x:2x2x1
jax: 0.10.0
libtpu: 0.0.40
codegen_flags: <defaults>
</compile_context>

<pallas_src>
import functools

import jax
import jax.numpy as jnp
from jax import lax
from jax.experimental import pallas as pl
from jax.experimental.pallas import tpu as pltpu


# ----------------------------------------------------------------------------
# Fused kernel: one grid program per batch element.
# ----------------------------------------------------------------------------
def _fused_dsconv_kernel(x_ref, dww_ref, dwb_ref, pww_ref, pwb_ref, o_ref,
                         dwpad_ref, *, k, stride, pad, H1, W1, H2, W2):
    """
    x_ref    : (1, H+2p, W+2p, Cin) f32   zero-padded NHWC input block    [VMEM]
    dww_ref  : (k*k, Cin)           f32   depthwise weights, tap-major    [VMEM]
    dwb_ref  : (1, Cin)             f32   depthwise bias                  [VMEM]
    pww_ref  : (k*k*Cin, Cout)      bf16  2nd-conv weights, im2col order  [VMEM]
    pwb_ref  : (1, Cout)            f32   2nd-conv bias                   [VMEM]
    o_ref    : (1, Cout, H2*W2)     f32   channel-major flattened output  [VMEM]
    dwpad_ref: (H1+2p, W1+2p, Cin)  f32   scratch: zero-padded dw result  [VMEM]
    """
    cin = x_ref.shape[-1]
    wp2 = W1 + 2 * pad

    xpad = x_ref[0]                        # (Hp1, Wp1, Cin), halo delivered by DMA
    dww = dww_ref[...]                     # (k*k, Cin)

    # ---- stage 1: depthwise conv, vectorized over channels (exact f32, VPU) ----
    acc1 = jnp.zeros((H1, W1, cin), jnp.float32)
    for ky in range(k):
        for kx in range(k):
            t = ky * k + kx
            if stride == 1:
                patch = xpad[ky:ky + H1, kx:kx + W1, :]
            else:
                # TODO(synk): for stride>1 pre-decimate xpad into `stride` phase
                # planes once instead of one strided relayout per tap.
                patch = xpad[ky:ky + stride * H1:stride,
                             kx:kx + stride * W1:stride, :]
            acc1 = acc1 + patch * dww[t]            # (H1,W1,Cin) * (Cin,)
    acc1 = acc1 + dwb_ref[0, :]

    # ---- stage 2 prep: interior store + thin zero halo strips only -------------
    # (no full-buffer zero per step; interior is fully overwritten every step)
    if pad > 0:
        dwpad_ref[0:pad, :, :] = jnp.zeros((pad, wp2, cin), jnp.float32)
        dwpad_ref[pad + H1:, :, :] = jnp.zeros((pad, wp2, cin), jnp.float32)
        dwpad_ref[pad:pad + H1, 0:pad, :] = jnp.zeros((H1, pad, cin), jnp.float32)
        dwpad_ref[pad:pad + H1, pad + W1:, :] = jnp.zeros((H1, pad, cin), jnp.float32)
    dwpad_ref[pad:pad + H1, pad:pad + W1, :] = acc1
    dwpad = dwpad_ref[...]

    # ---- stage 2: k*k taps folded into ONE bf16 MXU matmul (f32 accumulate) ----
    slabs = []
    for ky in range(k):
        for kx in range(k):
            slabs.append(dwpad[ky:ky + H2, kx:kx + W2, :])
    lhs = jnp.concatenate(slabs, axis=-1)                  # (H2, W2, k*k*Cin)
    lhs = lhs.reshape(H2 * W2, k * k * cin)                # sublane-merge, cheap
    acc2 = jnp.dot(lhs.astype(jnp.bfloat16), pww_ref[...],
                   preferred_element_type=jnp.float32)     # (H2*W2, Cout) f32
    acc2 = acc2 + pwb_ref[0, :]

    # one small XLU transpose -> lane-dense (Cout, H2*W2) unmasked store
    o_ref[0] = jnp.transpose(acc2).astype(o_ref.dtype)


# ----------------------------------------------------------------------------
# Wrapper
# ----------------------------------------------------------------------------
def depthwise_separable_conv_one(x, params, *, stride, padding):
    """x: (N, Cin, H, W) f32 NCHW (PyTorch layout). Returns (N, Cout, H2, W2)."""
    N, Cin, H, W = x.shape
    dw_w, dw_b = params["dw_w"], params["dw_b"]           # (Cin,k,k), (Cin,)
    pw_w, pw_b = params["pw_w"], params["pw_b"]           # (Cout,Cin,k,k), (Cout,)
    k = dw_w.shape[-1]
    Cout = pw_w.shape[0]

    H1 = (H + 2 * padding - k) // stride + 1
    W1 = (W + 2 * padding - k) // stride + 1
    H2 = H1 + 2 * padding - k + 1
    W2 = W1 + 2 * padding - k + 1
    Hp1, Wp1 = H + 2 * padding, W + 2 * padding

    # Host-side layout plumbing (one fused XLA copy each):
    #   input: NCHW -> zero-padded NHWC (halo arrives via the block DMA).
    x_pad = jnp.pad(jnp.transpose(x, (0, 2, 3, 1)).astype(jnp.float32),
                    ((0, 0), (padding, padding), (padding, padding), (0, 0)))
    dww = jnp.transpose(dw_w, (1, 2, 0)).reshape(k * k, Cin).astype(jnp.float32)
    dwb = dw_b.reshape(1, Cin).astype(jnp.float32)
    # second conv weights in im2col (tap-major, channel-minor) order, MXU-native bf16
    pww = jnp.transpose(pw_w, (2, 3, 1, 0)).reshape(k * k * Cin, Cout).astype(jnp.bfloat16)
    pwb = pw_b.reshape(1, Cout).astype(jnp.float32)

    kern = functools.partial(_fused_dsconv_kernel, k=k, stride=stride,
                             pad=padding, H1=H1, W1=W1, H2=H2, W2=W2)

    flops = N * (H1 * W1 * k * k * Cin * 2 + H2 * W2 * k * k * Cin * Cout * 2)
    bytes_accessed = (x_pad.size * 4 + dww.size * 4 + dwb.size * 4
                      + pww.size * 2 + pwb.size * 4 + N * Cout * H2 * W2 * 4)

    out_flat = pl.pallas_call(
        kern,
        out_shape=jax.ShapeDtypeStruct((N, Cout, H2 * W2), jnp.float32),
        grid=(N,),
        in_specs=[
            pl.BlockSpec((1, Hp1, Wp1, Cin), lambda n: (n, 0, 0, 0)),
            pl.BlockSpec((k * k, Cin), lambda n: (0, 0)),
            pl.BlockSpec((1, Cin), lambda n: (0, 0)),
            pl.BlockSpec((k * k * Cin, Cout), lambda n: (0, 0)),
            pl.BlockSpec((1, Cout), lambda n: (0, 0)),
        ],
        # last two dims (Cout, H2*W2) = (8, 256): lane-dense, unmasked stores
        out_specs=pl.BlockSpec((1, Cout, H2 * W2), lambda n: (n, 0, 0)),
        scratch_shapes=[
            pltpu.VMEM((H1 + 2 * padding, W1 + 2 * padding, Cin), jnp.float32),
        ],
        compiler_params=pltpu.CompilerParams(
            dimension_semantics=("parallel",)),
        cost_estimate=pl.CostEstimate(flops=flops, transcendentals=0,
                                      bytes_accessed=bytes_accessed),
    )(x_pad, dww, dwb, pww, pwb)

    # (N, Cout, H2*W2) -> NCHW is now a pure metadata reshape (no HBM transpose).
    return out_flat.reshape(N, Cout, H2, W2)


# ----------------------------------------------------------------------------
# Params + pure-JAX reference
# ----------------------------------------------------------------------------
def init_params(key, in_channels, out_channels, kernel_size):
    k1, k2, k3, k4 = jax.random.split(key, 4)
    return {
        # depthwise: Conv2d(Cin, Cin, k, groups=Cin) -> weight (Cin, 1, k, k); stored squeezed
        "dw_w": jax.random.normal(k1, (in_channels, kernel_size, kernel_size), jnp.float32) * 0.1,
        "dw_b": jax.random.normal(k2, (in_channels,), jnp.float32) * 0.1,
        # second conv: Conv2d(Cin, Cout, k) -> weight (Cout, Cin, k, k)
        "pw_w": jax.random.normal(k3, (out_channels, in_channels, kernel_size, kernel_size), jnp.float32) * 0.1,
        "pw_b": jax.random.normal(k4, (out_channels,), jnp.float32) * 0.1,
    }


def _reference(x, params, *, stride, padding):
    dn = ("NCHW", "OIHW", "NCHW")
    C = x.shape[1]
    y = lax.conv_general_dilated(
        x, params["dw_w"][:, None, :, :], (stride, stride),
        [(padding, padding), (padding, padding)],
        dimension_numbers=dn, feature_group_count=C,
        precision=lax.Precision.HIGHEST)
    y = y + params["dw_b"][None, :, None, None]
    z = lax.conv_general_dilated(
        y, params["pw_w"], (1, 1),
        [(padding, padding), (padding, padding)],
        dimension_numbers=dn, precision=lax.Precision.HIGHEST)
    return z + params["pw_b"][None, :, None, None]


if __name__ == "__main__":
    N, Cin, Cout, H, W = 2, 4, 8, 16, 16
    kernel_size, stride, padding = 3, 1, 1

    key = jax.random.PRNGKey(0)
    kx_, kp_ = jax.random.split(key)
    x = jax.random.normal(kx_, (N, Cin, H, W), jnp.float32)
    params = init_params(kp_, Cin, Cout, kernel_size)

    fwd = jax.jit(functools.partial(depthwise_separable_conv_one,
                                    stride=stride, padding=padding))
    out = jax.block_until_ready(fwd(x, params))

    ref = _reference(x, params, stride=stride, padding=padding)
    assert out.shape == ref.shape, (out.shape, ref.shape)
    max_err = float(jnp.max(jnp.abs(out - ref)))
    # stage-2 matmul uses native bf16 MXU operands (f32 accumulation), so the
    # tolerance vs the HIGHEST-precision f32 reference is loosened accordingly.
    assert jnp.allclose(out, ref, rtol=2e-2, atol=2e-2), max_err
    print("KERNEL_OK")
</pallas_src>

<mosaic_0001>
module attributes {stable_mosaic.version = 11 : i64} {
  func.func @_fused_dsconv_kernel(%arg0: i32, %arg1: memref<1x18x18x4xf32, #tpu.memory_space<vmem>>, %arg2: memref<9x4xf32, #tpu.memory_space<vmem>>, %arg3: memref<1x4xf32, #tpu.memory_space<vmem>>, %arg4: memref<36x8xbf16, #tpu.memory_space<vmem>>, %arg5: memref<1x8xf32, #tpu.memory_space<vmem>>, %arg6: memref<1x8x256xf32, #tpu.memory_space<vmem>>, %arg7: memref<18x18x4xf32, #tpu.memory_space<vmem>>) attributes {dimension_semantics = [#tpu.dimension_semantics<parallel>], iteration_bounds = array<i64: 2>, scalar_prefetch = 0 : i64, scratch_operands = 1 : i64, tpu.core_type = #tpu.core_type<tc>, window_params = [{transform_indices = @transform_0, window_bounds = array<i64: 1, 18, 18, 4>}, {pipeline_mode = #tpu.pipeline_mode<synchronous>, transform_indices = @transform_1, window_bounds = array<i64: 9, 4>}, {pipeline_mode = #tpu.pipeline_mode<synchronous>, transform_indices = @transform_2, window_bounds = array<i64: 1, 4>}, {pipeline_mode = #tpu.pipeline_mode<synchronous>, transform_indices = @transform_3, window_bounds = array<i64: 36, 8>}, {pipeline_mode = #tpu.pipeline_mode<synchronous>, transform_indices = @transform_4, window_bounds = array<i64: 1, 8>}, {transform_indices = @transform_5, window_bounds = array<i64: 1, 8, 256>}]} {
    %c0 = arith.constant 0 : index
    %c0_0 = arith.constant 0 : index
    %c0_1 = arith.constant 0 : index
    %c0_2 = arith.constant 0 : index
    %0 = vector.load %arg1[%c0, %c0_0, %c0_1, %c0_2] : memref<1x18x18x4xf32, #tpu.memory_space<vmem>>, vector<1x18x18x4xf32>
    %1 = vector.shape_cast %0 : vector<1x18x18x4xf32> to vector<18x18x4xf32>
    %c0_3 = arith.constant 0 : index
    %c0_4 = arith.constant 0 : index
    %2 = vector.load %arg2[%c0_3, %c0_4] : memref<9x4xf32, #tpu.memory_space<vmem>>, vector<9x4xf32>
    %cst = arith.constant 0.000000e+00 : f32
    %3 = vector.broadcast %cst : f32 to vector<16x16x4xf32>
    %4 = vector.extract_strided_slice %1 {offsets = [0, 0, 0], sizes = [16, 16, 4], strides = [1, 1, 1]} : vector<18x18x4xf32> to vector<16x16x4xf32>
    %5 = vector.extract_strided_slice %2 {offsets = [0, 0], sizes = [1, 4], strides = [1, 1]} : vector<9x4xf32> to vector<1x4xf32>
    %6 = vector.shape_cast %5 : vector<1x4xf32> to vector<4xf32>
    %7 = vector.shape_cast %6 : vector<4xf32> to vector<1x1x4xf32>
    %8 = vector.broadcast %7 : vector<1x1x4xf32> to vector<16x16x4xf32>
    %9 = arith.mulf %4, %8 : vector<16x16x4xf32>
    %10 = arith.addf %3, %9 : vector<16x16x4xf32>
    %11 = vector.extract_strided_slice %1 {offsets = [0, 1, 0], sizes = [16, 16, 4], strides = [1, 1, 1]} : vector<18x18x4xf32> to vector<16x16x4xf32>
    %12 = vector.extract_strided_slice %2 {offsets = [1, 0], sizes = [1, 4], strides = [1, 1]} : vector<9x4xf32> to vector<1x4xf32>
    %13 = vector.shape_cast %12 : vector<1x4xf32> to vector<4xf32>
    %14 = vector.shape_cast %13 : vector<4xf32> to vector<1x1x4xf32>
    %15 = vector.broadcast %14 : vector<1x1x4xf32> to vector<16x16x4xf32>
    %16 = arith.mulf %11, %15 : vector<16x16x4xf32>
    %17 = arith.addf %10, %16 : vector<16x16x4xf32>
    %18 = vector.extract_strided_slice %1 {offsets = [0, 2, 0], sizes = [16, 16, 4], strides = [1, 1, 1]} : vector<18x18x4xf32> to vector<16x16x4xf32>
    %19 = vector.extract_strided_slice %2 {offsets = [2, 0], sizes = [1, 4], strides = [1, 1]} : vector<9x4xf32> to vector<1x4xf32>
    %20 = vector.shape_cast %19 : vector<1x4xf32> to vector<4xf32>
    %21 = vector.shape_cast %20 : vector<4xf32> to vector<1x1x4xf32>
    %22 = vector.broadcast %21 : vector<1x1x4xf32> to vector<16x16x4xf32>
    %23 = arith.mulf %18, %22 : vector<16x16x4xf32>
    %24 = arith.addf %17, %23 : vector<16x16x4xf32>
    %25 = vector.extract_strided_slice %1 {offsets = [1, 0, 0], sizes = [16, 16, 4], strides = [1, 1, 1]} : vector<18x18x4xf32> to vector<16x16x4xf32>
    %26 = vector.extract_strided_slice %2 {offsets = [3, 0], sizes = [1, 4], strides = [1, 1]} : vector<9x4xf32> to vector<1x4xf32>
    %27 = vector.shape_cast %26 : vector<1x4xf32> to vector<4xf32>
    %28 = vector.shape_cast %27 : vector<4xf32> to vector<1x1x4xf32>
    %29 = vector.broadcast %28 : vector<1x1x4xf32> to vector<16x16x4xf32>
    %30 = arith.mulf %25, %29 : vector<16x16x4xf32>
    %31 = arith.addf %24, %30 : vector<16x16x4xf32>
    %32 = vector.extract_strided_slice %1 {offsets = [1, 1, 0], sizes = [16, 16, 4], strides = [1, 1, 1]} : vector<18x18x4xf32> to vector<16x16x4xf32>
    %33 = vector.extract_strided_slice %2 {offsets = [4, 0], sizes = [1, 4], strides = [1, 1]} : vector<9x4xf32> to vector<1x4xf32>
    %34 = vector.shape_cast %33 : vector<1x4xf32> to vector<4xf32>
    %35 = vector.shape_cast %34 : vector<4xf32> to vector<1x1x4xf32>
    %36 = vector.broadcast %35 : vector<1x1x4xf32> to vector<16x16x4xf32>
    %37 = arith.mulf %32, %36 : vector<16x16x4xf32>
    %38 = arith.addf %31, %37 : vector<16x16x4xf32>
    %39 = vector.extract_strided_slice %1 {offsets = [1, 2, 0], sizes = [16, 16, 4], strides = [1, 1, 1]} : vector<18x18x4xf32> to vector<16x16x4xf32>
    %40 = vector.extract_strided_slice %2 {offsets = [5, 0], sizes = [1, 4], strides = [1, 1]} : vector<9x4xf32> to vector<1x4xf32>
    %41 = vector.shape_cast %40 : vector<1x4xf32> to vector<4xf32>
    %42 = vector.shape_cast %41 : vector<4xf32> to vector<1x1x4xf32>
    %43 = vector.broadcast %42 : vector<1x1x4xf32> to vector<16x16x4xf32>
    %44 = arith.mulf %39, %43 : vector<16x16x4xf32>
    %45 = arith.addf %38, %44 : vector<16x16x4xf32>
    %46 = vector.extract_strided_slice %1 {offsets = [2, 0, 0], sizes = [16, 16, 4], strides = [1, 1, 1]} : vector<18x18x4xf32> to vector<16x16x4xf32>
    %47 = vector.extract_strided_slice %2 {offsets = [6, 0], sizes = [1, 4], strides = [1, 1]} : vector<9x4xf32> to vector<1x4xf32>
    %48 = vector.shape_cast %47 : vector<1x4xf32> to vector<4xf32>
    %49 = vector.shape_cast %48 : vector<4xf32> to vector<1x1x4xf32>
    %50 = vector.broadcast %49 : vector<1x1x4xf32> to vector<16x16x4xf32>
    %51 = arith.mulf %46, %50 : vector<16x16x4xf32>
    %52 = arith.addf %45, %51 : vector<16x16x4xf32>
    %53 = vector.extract_strided_slice %1 {offsets = [2, 1, 0], sizes = [16, 16, 4], strides = [1, 1, 1]} : vector<18x18x4xf32> to vector<16x16x4xf32>
    %54 = vector.extract_strided_slice %2 {offsets = [7, 0], sizes = [1, 4], strides = [1, 1]} : vector<9x4xf32> to vector<1x4xf32>
    %55 = vector.shape_cast %54 : vector<1x4xf32> to vector<4xf32>
    %56 = vector.shape_cast %55 : vector<4xf32> to vector<1x1x4xf32>
    %57 = vector.broadcast %56 : vector<1x1x4xf32> to vector<16x16x4xf32>
    %58 = arith.mulf %53, %57 : vector<16x16x4xf32>
    %59 = arith.addf %52, %58 : vector<16x16x4xf32>
    %60 = vector.extract_strided_slice %1 {offsets = [2, 2, 0], sizes = [16, 16, 4], strides = [1, 1, 1]} : vector<18x18x4xf32> to vector<16x16x4xf32>
    %61 = vector.extract_strided_slice %2 {offsets = [8, 0], sizes = [1, 4], strides = [1, 1]} : vector<9x4xf32> to vector<1x4xf32>
    %62 = vector.shape_cast %61 : vector<1x4xf32> to vector<4xf32>
    %63 = vector.shape_cast %62 : vector<4xf32> to vector<1x1x4xf32>
    %64 = vector.broadcast %63 : vector<1x1x4xf32> to vector<16x16x4xf32>
    %65 = arith.mulf %60, %64 : vector<16x16x4xf32>
    %66 = arith.addf %59, %65 : vector<16x16x4xf32>
    %c0_5 = arith.constant 0 : index
    %c0_6 = arith.constant 0 : index
    %67 = vector.load %arg3[%c0_5, %c0_6] : memref<1x4xf32, #tpu.memory_space<vmem>>, vector<1x4xf32>
    %68 = vector.shape_cast %67 : vector<1x4xf32> to vector<4xf32>
    %69 = vector.shape_cast %68 : vector<4xf32> to vector<1x1x4xf32>
    %70 = vector.broadcast %69 : vector<1x1x4xf32> to vector<16x16x4xf32>
    %71 = arith.addf %66, %70 : vector<16x16x4xf32>
    %cst_7 = arith.constant 0.000000e+00 : f32
    %72 = vector.broadcast %cst_7 : f32 to vector<1x18x4xf32>
    %c0_8 = arith.constant 0 : index
    %c0_9 = arith.constant 0 : index
    %c0_10 = arith.constant 0 : index
    %73 = vector.load %arg7[%c0_8, %c0_9, %c0_10] : memref<18x18x4xf32, #tpu.memory_space<vmem>>, vector<1x18x4xf32>
    tpu.vector_store %arg7[%c0_8, %c0_9, %c0_10], %72 {strides = array<i32>} : memref<18x18x4xf32, #tpu.memory_space<vmem>>, vector<1x18x4xf32>,
    %cst_11 = arith.constant 0.000000e+00 : f32
    %74 = vector.broadcast %cst_11 : f32 to vector<1x18x4xf32>
    %c17 = arith.constant 17 : index
    %c0_12 = arith.constant 0 : index
    %c0_13 = arith.constant 0 : index
    %75 = vector.load %arg7[%c17, %c0_12, %c0_13] : memref<18x18x4xf32, #tpu.memory_space<vmem>>, vector<1x18x4xf32>
    tpu.vector_store %arg7[%c17, %c0_12, %c0_13], %74 {strides = array<i32>} : memref<18x18x4xf32, #tpu.memory_space<vmem>>, vector<1x18x4xf32>,
    %cst_14 = arith.constant 0.000000e+00 : f32
    %76 = vector.broadcast %cst_14 : f32 to vector<16x1x4xf32>
    %c1 = arith.constant 1 : index
    %c0_15 = arith.constant 0 : index
    %c0_16 = arith.constant 0 : index
    %77 = vector.load %arg7[%c1, %c0_15, %c0_16] : memref<18x18x4xf32, #tpu.memory_space<vmem>>, vector<16x1x4xf32>
    tpu.vector_store %arg7[%c1, %c0_15, %c0_16], %76 {strides = array<i32>} : memref<18x18x4xf32, #tpu.memory_space<vmem>>, vector<16x1x4xf32>,
    %cst_17 = arith.constant 0.000000e+00 : f32
    %78 = vector.broadcast %cst_17 : f32 to vector<16x1x4xf32>
    %c1_18 = arith.constant 1 : index
    %c17_19 = arith.constant 17 : index
    %c0_20 = arith.constant 0 : index
    %79 = vector.load %arg7[%c1_18, %c17_19, %c0_20] : memref<18x18x4xf32, #tpu.memory_space<vmem>>, vector<16x1x4xf32>
    tpu.vector_store %arg7[%c1_18, %c17_19, %c0_20], %78 {strides = array<i32>} : memref<18x18x4xf32, #tpu.memory_space<vmem>>, vector<16x1x4xf32>,
    %c1_21 = arith.constant 1 : index
    %c1_22 = arith.constant 1 : index
    %c0_23 = arith.constant 0 : index
    %80 = vector.load %arg7[%c1_21, %c1_22, %c0_23] : memref<18x18x4xf32, #tpu.memory_space<vmem>>, vector<16x16x4xf32>
    tpu.vector_store %arg7[%c1_21, %c1_22, %c0_23], %71 {strides = array<i32>} : memref<18x18x4xf32, #tpu.memory_space<vmem>>, vector<16x16x4xf32>,
    %c0_24 = arith.constant 0 : index
    %c0_25 = arith.constant 0 : index
    %c0_26 = arith.constant 0 : index
    %81 = vector.load %arg7[%c0_24, %c0_25, %c0_26] : memref<18x18x4xf32, #tpu.memory_space<vmem>>, vector<18x18x4xf32>
    %82 = vector.extract_strided_slice %81 {offsets = [0, 0, 0], sizes = [16, 16, 4], strides = [1, 1, 1]} : vector<18x18x4xf32> to vector<16x16x4xf32>
    %83 = vector.extract_strided_slice %81 {offsets = [0, 1, 0], sizes = [16, 16, 4], strides = [1, 1, 1]} : vector<18x18x4xf32> to vector<16x16x4xf32>
    %84 = vector.extract_strided_slice %81 {offsets = [0, 2, 0], sizes = [16, 16, 4], strides = [1, 1, 1]} : vector<18x18x4xf32> to vector<16x16x4xf32>
    %85 = vector.extract_strided_slice %81 {offsets = [1, 0, 0], sizes = [16, 16, 4], strides = [1, 1, 1]} : vector<18x18x4xf32> to vector<16x16x4xf32>
    %86 = vector.extract_strided_slice %81 {offsets = [1, 1, 0], sizes = [16, 16, 4], strides = [1, 1, 1]} : vector<18x18x4xf32> to vector<16x16x4xf32>
    %87 = vector.extract_strided_slice %81 {offsets = [1, 2, 0], sizes = [16, 16, 4], strides = [1, 1, 1]} : vector<18x18x4xf32> to vector<16x16x4xf32>
    %88 = vector.extract_strided_slice %81 {offsets = [2, 0, 0], sizes = [16, 16, 4], strides = [1, 1, 1]} : vector<18x18x4xf32> to vector<16x16x4xf32>
    %89 = vector.extract_strided_slice %81 {offsets = [2, 1, 0], sizes = [16, 16, 4], strides = [1, 1, 1]} : vector<18x18x4xf32> to vector<16x16x4xf32>
    %90 = vector.extract_strided_slice %81 {offsets = [2, 2, 0], sizes = [16, 16, 4], strides = [1, 1, 1]} : vector<18x18x4xf32> to vector<16x16x4xf32>
    %91 = tpu.concatenate %82, %83, %84, %85, %86, %87, %88, %89, %90 in 2 : vector<16x16x4xf32>, vector<16x16x4xf32>, vector<16x16x4xf32>, vector<16x16x4xf32>, vector<16x16x4xf32>, vector<16x16x4xf32>, vector<16x16x4xf32>, vector<16x16x4xf32>, vector<16x16x4xf32> -> vector<16x16x36xf32>
    %92 = vector.shape_cast %91 : vector<16x16x36xf32> to vector<256x36xf32>
    %93 = arith.truncf %92 : vector<256x36xf32> to vector<256x36xbf16>
    %c0_27 = arith.constant 0 : index
    %c0_28 = arith.constant 0 : index
    %94 = vector.load %arg4[%c0_27, %c0_28] : memref<36x8xbf16, #tpu.memory_space<vmem>>, vector<36x8xbf16>
    %cst_29 = arith.constant dense<0.000000e+00> : vector<256x8xf32>
    %95 = tpu.matmul %93, %94, %cst_29 {dimension_numbers = #tpu.dot_dimension_numbers<[1], [0], [0], [1], [0, 0, 1, 1], [], []>} : vector<256x36xbf16>, vector<36x8xbf16>, vector<256x8xf32> -> vector<256x8xf32>
    %c0_30 = arith.constant 0 : index
    %c0_31 = arith.constant 0 : index
    %96 = vector.load %arg5[%c0_30, %c0_31] : memref<1x8xf32, #tpu.memory_space<vmem>>, vector<1x8xf32>
    %97 = vector.shape_cast %96 : vector<1x8xf32> to vector<8xf32>
    %98 = vector.shape_cast %97 : vector<8xf32> to vector<1x8xf32>
    %99 = vector.broadcast %98 : vector<1x8xf32> to vector<256x8xf32>
    %100 = arith.addf %95, %99 : vector<256x8xf32>
    %101 = tpu.transpose %100, [1, 0] : vector<256x8xf32> -> vector<8x256xf32>
    %c0_32 = arith.constant 0 : index
    %c0_33 = arith.constant 0 : index
    %c0_34 = arith.constant 0 : index
    %102 = vector.load %arg6[%c0_32, %c0_33, %c0_34] : memref<1x8x256xf32, #tpu.memory_space<vmem>>, vector<1x8x256xf32>
    %103 = vector.shape_cast %102 : vector<1x8x256xf32> to vector<8x256xf32>
    %104 = vector.shape_cast %101 : vector<8x256xf32> to vector<1x8x256xf32>
    tpu.vector_store %arg6[%c0_32, %c0_33, %c0_34], %104 {strides = array<i32>} : memref<1x8x256xf32, #tpu.memory_space<vmem>>, vector<1x8x256xf32>,
    return
  }
  func.func @transform_0(%arg0: i32) -> (i32, i32, i32, i32) {
    %c0_i32 = arith.constant 0 : i32
    %c0_i32_0 = arith.constant 0 : i32
    %c0_i32_1 = arith.constant 0 : i32
    %c0_i32_2 = arith.constant 0 : i32
    return %arg0, %c0_i32, %c0_i32_0, %c0_i32_1 : i32, i32, i32, i32
  }
  func.func @transform_1(%arg0: i32) -> (i32, i32) {
    %c0_i32 = arith.constant 0 : i32
    %c0_i32_0 = arith.constant 0 : i32
    %c0_i32_1 = arith.constant 0 : i32
    return %c0_i32, %c0_i32_0 : i32, i32
  }
  func.func @transform_2(%arg0: i32) -> (i32, i32) {
    %c0_i32 = arith.constant 0 : i32
    %c0_i32_0 = arith.constant 0 : i32
    %c0_i32_1 = arith.constant 0 : i32
    return %c0_i32, %c0_i32_0 : i32, i32
  }
  func.func @transform_3(%arg0: i32) -> (i32, i32) {
    %c0_i32 = arith.constant 0 : i32
    %c0_i32_0 = arith.constant 0 : i32
    %c0_i32_1 = arith.constant 0 : i32
    return %c0_i32, %c0_i32_0 : i32, i32
  }
  func.func @transform_4(%arg0: i32) -> (i32, i32) {
    %c0_i32 = arith.constant 0 : i32
    %c0_i32_0 = arith.constant 0 : i32
    %c0_i32_1 = arith.constant 0 : i32
    return %c0_i32, %c0_i32_0 : i32, i32
  }
  func.func @transform_5(%arg0: i32) -> (i32, i32, i32) {
    %c0_i32 = arith.constant 0 : i32
    %c0_i32_0 = arith.constant 0 : i32
    %c0_i32_1 = arith.constant 0 : i32
    return %arg0, %c0_i32, %c0_i32_0 : i32, i32, i32
  }
}

</mosaic_0001>

<llo_original>
// kernel: depthwise_separable_conv_one.1
$region0: #{depthwise_separable_conv_one.1}
  #allocation0 [shape = 'u32[]', space=smem, size = 0x4, offset = 0x4, fixed_abs, tag = 'smem constant byte address 0x4 - core index']
  #allocation1 [shape = 'u32[144,128]{1,0:T(1,128)}', space=vmem, size = 0x12000, scoped, tag = 'internal scratch']
  #allocation2 [shape = 'f32[18,18,4]{2,1,0:T(8,128)}', space=vmem, size = 0x36000, scoped, tag = 'scratch operand']
  %s0 = inlined_call_operand.vmem [shape: f32[2,18,18,4], index: 0, kind: input, shape index: {}]
  %s1 = inlined_call_operand.vmem [shape: f32[9,4], index: 1, kind: input, shape index: {}]
  %s2 = inlined_call_operand.vmem [shape: f32[1,4], index: 2, kind: input, shape index: {}]
  %s3 = inlined_call_operand.vmem [shape: bf16[36,8], index: 3, kind: input, shape index: {}]
  %s4 = inlined_call_operand.vmem [shape: f32[1,8], index: 4, kind: input, shape index: {}]
  %s5 = inlined_call_operand.vmem [shape: f32[2,8,256], index: 5, kind: output, shape index: {}]
  %s6 = sld [smem:[#allocation0]]
  $region53: #{depthwise_separable_conv_one.1} parent=0
    _
  %s8 = ssub.s32 1, %s6
  %s9 = scalar_select 0, %s8, %s6
  loop: start=0, step=1, limit=4
  $region2: #{depthwise_separable_conv_one.1} parent=0 // loop_pre_header
    _
  $region3: #{depthwise_separable_conv_one.1} parent=0 // loop_header
    %s11 = sphi 0, %s15
    %p12 = scmp.ge.s32.totalorder %s11, 4
    %s21 = sphi 0, %s23
    %s24 = sphi 0, %s21
    %s25 = sphi 0, %s24
    %s41 = sphi 0, %s25
    %s45 = sphi 0, %s45
    %s47 = sphi 0, %s45
    %s48 = sphi 0, %s47
    %s62 = sphi 0, %s48
    %s66 = sphi 0, %s66
    %s68 = sphi 0, %s66
    %s69 = sphi 0, %s68
    %s83 = sphi 0, %s69
    %s87 = sphi 0, %s87
    %s89 = sphi 0, %s87
    %s90 = sphi 0, %s89
    %s104 = sphi 0, %s90
    %s108 = sphi 0, %s108
    %s110 = sphi 0, %s108
    %s111 = sphi 0, %s110
    %s125 = sphi 0, %s111
    %s131 = sphi 0, %s133
    %s134 = sphi 0, %s131
    %s135 = sphi 0, %s134
    %s151 = sphi 0, %s135
  $region4: #{depthwise_separable_conv_one.1} parent=0 // loop_header_branch
    %14 = sbr.rel (%p12) target = $region8
  $region5: #{depthwise_separable_conv_one.1} parent=0 // loop_body
    %s16 = ssub.s32 %s11, 1
    %s17 = ssub.s32 %s11, 2
    %s18 = sadd.s32 %s11, 1
    %s19 = ssub.s32 %s11, %s18
    %p20 = scmp.eq.s32.totalorder %s19, 0
    %s22 = sadd.s32 %s21, 1
    %s23 = scalar_select %p20, %s21, %s22
    %p26 = pneg %p20
    %p27 = scmp.eq.s32.totalorder %s11, 1
    %p28 = por %p26, %p27
    %p29 = scmp.ne.s32.totalorder %s21, %s24
    %p30 = scmp.eq.s32.totalorder %s11, 0
    %p31 = por %p29, %p30
    %p32 = scmp.ne.s32.totalorder %s21, %s24
    %p33 = scmp.eq.s32.totalorder %s16, 1
    %p34 = por %p32, %p33
    %p35 = scmp.ne.s32.totalorder %s24, %s25
    %p36 = scmp.eq.s32.totalorder %s16, 0
    %p37 = por %p35, %p36
    %p38 = scmp.ne.s32.totalorder %s24, %s25
    %p39 = scmp.eq.s32.totalorder %s17, 1
    %p40 = por %p38, %p39
    %p42 = scmp.ne.s32.totalorder %s25, %s41
    %p43 = scmp.eq.s32.totalorder %s17, 0
    %p44 = por %p42, %p43
    %s46 = sadd.s32 %s45, 1
    %p49 = scmp.eq.s32.totalorder %s11, 1
    %p50 = scmp.ne.s32.totalorder %s45, %s47
    %p51 = scmp.eq.s32.totalorder %s11, 0
    %p52 = por %p50, %p51
    %p53 = scmp.ne.s32.totalorder %s45, %s47
    %p54 = scmp.eq.s32.totalorder %s16, 1
    %p55 = por %p53, %p54
    %p56 = scmp.ne.s32.totalorder %s47, %s48
    %p57 = scmp.eq.s32.totalorder %s16, 0
    %p58 = por %p56, %p57
    %p59 = scmp.ne.s32.totalorder %s47, %s48
    %p60 = scmp.eq.s32.totalorder %s17, 1
    %p61 = por %p59, %p60
    %p63 = scmp.ne.s32.totalorder %s48, %s62
    %p64 = scmp.eq.s32.totalorder %s17, 0
    %p65 = por %p63, %p64
    %s67 = sadd.s32 %s66, 1
    %p70 = scmp.eq.s32.totalorder %s11, 1
    %p71 = scmp.ne.s32.totalorder %s66, %s68
    %p72 = scmp.eq.s32.totalorder %s11, 0
    %p73 = por %p71, %p72
    %p74 = scmp.ne.s32.totalorder %s66, %s68
    %p75 = scmp.eq.s32.totalorder %s16, 1
    %p76 = por %p74, %p75
    %p77 = scmp.ne.s32.totalorder %s68, %s69
    %p78 = scmp.eq.s32.totalorder %s16, 0
    %p79 = por %p77, %p78
    %p80 = scmp.ne.s32.totalorder %s68, %s69
    %p81 = scmp.eq.s32.totalorder %s17, 1
    %p82 = por %p80, %p81
    %p84 = scmp.ne.s32.totalorder %s69, %s83
    %p85 = scmp.eq.s32.totalorder %s17, 0
    %p86 = por %p84, %p85
    %s88 = sadd.s32 %s87, 1
    %p91 = scmp.eq.s32.totalorder %s11, 1
    %p92 = scmp.ne.s32.totalorder %s87, %s89
    %p93 = scmp.eq.s32.totalorder %s11, 0
    %p94 = por %p92, %p93
    %p95 = scmp.ne.s32.totalorder %s87, %s89
    %p96 = scmp.eq.s32.totalorder %s16, 1
    %p97 = por %p95, %p96
    %p98 = scmp.ne.s32.totalorder %s89, %s90
    %p99 = scmp.eq.s32.totalorder %s16, 0
    %p100 = por %p98, %p99
    %p101 = scmp.ne.s32.totalorder %s89, %s90
    %p102 = scmp.eq.s32.totalorder %s17, 1
    %p103 = por %p101, %p102
    %p105 = scmp.ne.s32.totalorder %s90, %s104
    %p106 = scmp.eq.s32.totalorder %s17, 0
    %p107 = por %p105, %p106
    %s109 = sadd.s32 %s108, 1
    %p112 = scmp.eq.s32.totalorder %s11, 1
    %p113 = scmp.ne.s32.totalorder %s108, %s110
    %p114 = scmp.eq.s32.totalorder %s11, 0
    %p115 = por %p113, %p114
    %p116 = scmp.ne.s32.totalorder %s108, %s110
    %p117 = scmp.eq.s32.totalorder %s16, 1
    %p118 = por %p116, %p117
    %p119 = scmp.ne.s32.totalorder %s110, %s111
    %p120 = scmp.eq.s32.totalorder %s16, 0
    %p121 = por %p119, %p120
    %p122 = scmp.ne.s32.totalorder %s110, %s111
    %p123 = scmp.eq.s32.totalorder %s17, 1
    %p124 = por %p122, %p123
    %p126 = scmp.ne.s32.totalorder %s111, %s125
    %p127 = scmp.eq.s32.totalorder %s17, 0
    %p128 = por %p126, %p127
    %s129 = ssub.s32 %s11, %s18
    %p130 = scmp.eq.s32.totalorder %s129, 0
    %s132 = sadd.s32 %s131, 1
    %s133 = scalar_select %p130, %s131, %s132
    %p136 = pneg %p130
    %p137 = scmp.eq.s32.totalorder %s11, 1
    %p138 = por %p136, %p137
    %p139 = scmp.ne.s32.totalorder %s131, %s134
    %p140 = scmp.eq.s32.totalorder %s11, 0
    %p141 = por %p139, %p140
    %p142 = scmp.ne.s32.totalorder %s131, %s134
    %p143 = scmp.eq.s32.totalorder %s16, 1
    %p144 = por %p142, %p143
    %p145 = scmp.ne.s32.totalorder %s134, %s135
    %p146 = scmp.eq.s32.totalorder %s16, 0
    %p147 = por %p145, %p146
    %p148 = scmp.ne.s32.totalorder %s134, %s135
    %p149 = scmp.eq.s32.totalorder %s17, 1
    %p150 = por %p148, %p149
    %p152 = scmp.ne.s32.totalorder %s135, %s151
    %p153 = scmp.eq.s32.totalorder %s17, 0
    %p154 = por %p152, %p153
    %p155 = scmp.le.s32.totalorder 1, %s11
    %p156 = scmp.lt.s32.totalorder %s11, 3
    %p157 = pnand %p155, %p156
    %p158 = pneg %p157
    // Predicated region
    $region9: #{depthwise_separable_conv_one.1} parent=5 // pred_check
      _
    $region10: #{depthwise_separable_conv_one.1} parent=5 // pred_check_branch
      %160 = sbr.rel (%p157) target = $region12
    $region11: #{depthwise_separable_conv_one.1} parent=5 // pred_region
      %s161 = ssub.s32 %s11, 1
      // Predicated region
      $region13: #{depthwise_separable_conv_one.1} parent=11 // pred_check
        %p162 = pneg %p58
      $region14: #{depthwise_separable_conv_one.1} parent=11 // pred_check_branch
        %164 = sbr.rel (%p162) target = $region16
      $region15: #{depthwise_separable_conv_one.1} parent=11 // pred_region
        _
      $region16: #{depthwise_separable_conv_one.1} parent=11 // pred_fallthru
        _
      // Predicated region
      $region17: #{depthwise_separable_conv_one.1} parent=11 // pred_check
        %p165 = pneg %p79
      $region18: #{depthwise_separable_conv_one.1} parent=11 // pred_check_branch
        %167 = sbr.rel (%p165) target = $region20
      $region19: #{depthwise_separable_conv_one.1} parent=11 // pred_region
        _
      $region20: #{depthwise_separable_conv_one.1} parent=11 // pred_fallthru
        _
      // Predicated region
      $region21: #{depthwise_separable_conv_one.1} parent=11 // pred_check
        %p168 = pneg %p100
      $region22: #{depthwise_separable_conv_one.1} parent=11 // pred_check_branch
        %170 = sbr.rel (%p168) target = $region24
      $region23: #{depthwise_separable_conv_one.1} parent=11 // pred_region
        _
      $region24: #{depthwise_separable_conv_one.1} parent=11 // pred_fallthru
        _
      // Predicated region
      $region25: #{depthwise_separable_conv_one.1} parent=11 // pred_check
        %p171 = pneg %p121
      $region26: #{depthwise_separable_conv_one.1} parent=11 // pred_check_branch
        %173 = sbr.rel (%p171) target = $region28
      $region27: #{depthwise_separable_conv_one.1} parent=11 // pred_region
        _
      $region28: #{depthwise_separable_conv_one.1} parent=11 // pred_fallthru
        _
    $region12: #{depthwise_separable_conv_one.1} parent=5 // pred_fallthru
      _
    %p174 = scmp.lt.s32.totalorder %s11, 2
    // Predicated region
    $region29: #{depthwise_separable_conv_one.1} parent=5 // pred_check
      %p175 = pneg %p174
    $region30: #{depthwise_separable_conv_one.1} parent=5 // pred_check_branch
      %177 = sbr.rel (%p175) target = $region32
    $region31: #{depthwise_separable_conv_one.1} parent=5 // pred_region
      // Predicated region
      $region33: #{depthwise_separable_conv_one.1} parent=31 // pred_check
        %p178 = pneg %p31
      $region34: #{depthwise_separable_conv_one.1} parent=31 // pred_check_branch
        %180 = sbr.rel (%p178) target = $region36
      $region35: #{depthwise_separable_conv_one.1} parent=31 // pred_region
        %p181 = scmp.lt.s32.totalorder %s11, 1
        %s182 = scalar_select %p181, %s11, 1
        %s183 = smul.addr %s182, 54
        %s184 = smul.addr %s183, 8
        %s185 = scalar_lea.vmem %s0, %s184
      $region36: #{depthwise_separable_conv_one.1} parent=31 // pred_fallthru
        _
    $region32: #{depthwise_separable_conv_one.1} parent=5 // pred_fallthru
      _
    %p186 = scmp.le.s32.totalorder 1, %s11
    %p187 = scmp.lt.s32.totalorder %s11, 3
    %p188 = pnand %p186, %p187
    %p189 = pneg %p188
    // Predicated region
    $region37: #{depthwise_separable_conv_one.1} parent=5 // pred_check
      _
    $region38: #{depthwise_separable_conv_one.1} parent=5 // pred_check_branch
      %191 = sbr.rel (%p188) target = $region40
    $region39: #{depthwise_separable_conv_one.1} parent=5 // pred_region
      %s192 = ssub.s32 %s11, 1
      %p193 = scmp.lt.s32.totalorder %s16, 1
      %s194 = scalar_select %p193, %s16, 1
      %s195 = smul.addr %s194, 54
      %s196 = smul.addr %s195, 8
      %s197 = scalar_lea.vmem %s0, %s196
      %p198 = pneg %p37
      %p199 = pneg %p34
      %p200 = pneg %p58
      %p201 = pneg %p55
      %p202 = pneg %p79
      %p203 = pneg %p76
      %p204 = pneg %p100
      %p205 = pneg %p97
      %p206 = pneg %p121
      %p207 = pneg %p118
      %p208 = pneg %p147
      %p209 = pneg %p144
      %p210 = scmp.lt.s32.totalorder %s16, 1
      %s211 = scalar_select %p210, %s16, 1
      %s212 = smul.addr %s211, 2
      %s213 = smul.addr %s212, 8
      %s214 = scalar_lea.vmem %s5, %s213
      %p215 = scmp.lt.s32.totalorder %s16, 1
      %s216 = scalar_select %p215, %s16, 1
      %s217 = smul.addr %s216, 54
      %s218 = smul.addr %s217, 8
      %s219 = scalar_lea.vmem %s0, %s218
      %p220 = scmp.lt.s32.totalorder %s16, 1
      %s221 = scalar_select %p220, %s16, 1
      %s222 = smul.addr %s221, 2
      %s223 = smul.addr %s222, 8
      %s224 = scalar_lea.vmem %s5, %s223
      %v226 = vld [vmem:[%s219] sm:$0xff]
      %v227 = vld [vmem:[%s219 + $0x8] sm:$0xff]
      %v228 = vld [vmem:[%s219 + $0x10] sm:$0x3]
      %v229 = vld [vmem:[%s219 + $0x18] sm:$0xff]
      %v230 = vld [vmem:[%s219 + $0x20] sm:$0xff]
      %v231 = vld [vmem:[%s219 + $0x28] sm:$0x3]
      %v232 = vld [vmem:[%s219 + $0x30] sm:$0xff]
      %v233 = vld [vmem:[%s219 + $0x38] sm:$0xff]
      %v234 = vld [vmem:[%s219 + $0x40] sm:$0x3]
      %v235 = vld [vmem:[%s219 + $0x48] sm:$0xff]
      %v236 = vld [vmem:[%s219 + $0x50] sm:$0xff]
      %v237 = vld [vmem:[%s219 + $0x58] sm:$0x3]
      %v238 = vld [vmem:[%s219 + $0x60] sm:$0xff]
      %v239 = vld [vmem:[%s219 + $0x68] sm:$0xff]
      %v240 = vld [vmem:[%s219 + $0x70] sm:$0x3]
      %v241 = vld [vmem:[%s219 + $0x78] sm:$0xff]
      %v242 = vld [vmem:[%s219 + $0x80] sm:$0xff]
      %v243 = vld [vmem:[%s219 + $0x88] sm:$0x3]
      %v244 = vld [vmem:[%s219 + $0x90] sm:$0xff]
      %v245 = vld [vmem:[%s219 + $0x98] sm:$0xff]
      %v246 = vld [vmem:[%s219 + $0xa0] sm:$0x3]
      %v247 = vld [vmem:[%s219 + $0xa8] sm:$0xff]
      %v248 = vld [vmem:[%s219 + $0xb0] sm:$0xff]
      %v249 = vld [vmem:[%s219 + $0xb8] sm:$0x3]
      %v250 = vld [vmem:[%s219 + $0xc0] sm:$0xff]
      %v251 = vld [vmem:[%s219 + $0xc8] sm:$0xff]
      %v252 = vld [vmem:[%s219 + $0xd0] sm:$0x3]
      %v253 = vld [vmem:[%s219 + $0xd8] sm:$0xff]
      %v254 = vld [vmem:[%s219 + $0xe0] sm:$0xff]
      %v255 = vld [vmem:[%s219 + $0xe8] sm:$0x3]
      %v256 = vld [vmem:[%s219 + $0xf0] sm:$0xff]
      %v257 = vld [vmem:[%s219 + $0xf8] sm:$0xff]
      %v258 = vld [vmem:[%s219 + $0x100] sm:$0x3]
      %v259 = vld [vmem:[%s219 + $0x108] sm:$0xff]
      %v260 = vld [vmem:[%s219 + $0x110] sm:$0xff]
      %v261 = vld [vmem:[%s219 + $0x118] sm:$0x3]
      %v262 = vld [vmem:[%s219 + $0x120] sm:$0xff]
      %v263 = vld [vmem:[%s219 + $0x128] sm:$0xff]
      %v264 = vld [vmem:[%s219 + $0x130] sm:$0x3]
      %v265 = vld [vmem:[%s219 + $0x138] sm:$0xff]
      %v266 = vld [vmem:[%s219 + $0x140] sm:$0xff]
      %v267 = vld [vmem:[%s219 + $0x148] sm:$0x3]
      %v268 = vld [vmem:[%s219 + $0x150] sm:$0xff]
      %v269 = vld [vmem:[%s219 + $0x158] sm:$0xff]
      %v270 = vld [vmem:[%s219 + $0x160] sm:$0x3]
      %v271 = vld [vmem:[%s219 + $0x168] sm:$0xff]
      %v272 = vld [vmem:[%s219 + $0x170] sm:$0xff]
      %v273 = vld [vmem:[%s219 + $0x178] sm:$0x3]
      %v274 = vld [vmem:[%s219 + $0x180] sm:$0xff]
      %v275 = vld [vmem:[%s219 + $0x188] sm:$0xff]
      %v276 = vld [vmem:[%s219 + $0x190] sm:$0x3]
      %v277 = vld [vmem:[%s219 + $0x198] sm:$0xff]
      %v278 = vld [vmem:[%s219 + $0x1a0] sm:$0xff]
      %v279 = vld [vmem:[%s219 + $0x1a8] sm:$0x3]
      %v280 = vld [vmem:[%s1] sm:$0xff]
      %v281 = vld [vmem:[%s1 + $0x8] sm:$0x1]
      %v282 = vlaneseq
      %v283 = vshrl.u32 %v282, 7
      %v284 = vsub.s32 0, %v283
      %v285 = vrot.slane %v280, %v284
      %v286 = vmul.f32 %v226, %v285
      %v287 = vmul.f32 %v227, %v285
      %v288 = vmul.f32 %v229, %v285
      %v289 = vmul.f32 %v230, %v285
      %v290 = vmul.f32 %v232, %v285
      %v291 = vmul.f32 %v233, %v285
      %v292 = vmul.f32 %v235, %v285
      %v293 = vmul.f32 %v236, %v285
      %v294 = vmul.f32 %v238, %v285
      %v295 = vmul.f32 %v239, %v285
      %v296 = vmul.f32 %v241, %v285
      %v297 = vmul.f32 %v242, %v285
      %v298 = vmul.f32 %v244, %v285
      %v299 = vmul.f32 %v245, %v285
      %v300 = vmul.f32 %v247, %v285
      %v301 = vmul.f32 %v248, %v285
      %v302 = vmul.f32 %v250, %v285
      %v303 = vmul.f32 %v251, %v285
      %v304 = vmul.f32 %v253, %v285
      %v305 = vmul.f32 %v254, %v285
      %v306 = vmul.f32 %v256, %v285
      %v307 = vmul.f32 %v257, %v285
      %v308 = vmul.f32 %v259, %v285
      %v309 = vmul.f32 %v260, %v285
      %v310 = vmul.f32 %v262, %v285
      %v311 = vmul.f32 %v263, %v285
      %v312 = vmul.f32 %v265, %v285
      %v313 = vmul.f32 %v266, %v285
      %v314 = vmul.f32 %v268, %v285
      %v315 = vmul.f32 %v269, %v285
      %v316 = vmul.f32 %v271, %v285
      %v317 = vmul.f32 %v272, %v285
      %v318 = vadd.f32 %v286, 0.0
      %v319 = vadd.f32 %v287, 0.0
      %v320 = vadd.f32 %v288, 0.0
      %v321 = vadd.f32 %v289, 0.0
      %v322 = vadd.f32 %v290, 0.0
      %v323 = vadd.f32 %v291, 0.0
      %v324 = vadd.f32 %v292, 0.0
      %v325 = vadd.f32 %v293, 0.0
      %v326 = vadd.f32 %v294, 0.0
      %v327 = vadd.f32 %v295, 0.0
      %v328 = vadd.f32 %v296, 0.0
      %v329 = vadd.f32 %v297, 0.0
      %v330 = vadd.f32 %v298, 0.0
      %v331 = vadd.f32 %v299, 0.0
      %v332 = vadd.f32 %v300, 0.0
      %v333 = vadd.f32 %v301, 0.0
      %v334 = vadd.f32 %v302, 0.0
      %v335 = vadd.f32 %v303, 0.0
      %v336 = vadd.f32 %v304, 0.0
      %v337 = vadd.f32 %v305, 0.0
      %v338 = vadd.f32 %v306, 0.0
      %v339 = vadd.f32 %v307, 0.0
      %v340 = vadd.f32 %v308, 0.0
      %v341 = vadd.f32 %v309, 0.0
      %v342 = vadd.f32 %v310, 0.0
      %v343 = vadd.f32 %v311, 0.0
      %v344 = vadd.f32 %v312, 0.0
      %v345 = vadd.f32 %v313, 0.0
      %v346 = vadd.f32 %v314, 0.0
      %v347 = vadd.f32 %v315, 0.0
      %v348 = vadd.f32 %v316, 0.0
      %v349 = vadd.f32 %v317, 0.0
      %v350 = vlaneseq
      %v351 = vshrl.u32 %v350, 7
      %v352 = vsub.s32 1, %v351
      %v353 = vrot.slane %v280, %v352
      %v354 = vmul.f32 %v226, %v353
      %v355 = vmul.f32 %v227, %v353
      %v356 = vmul.f32 %v228, %v353
      %v357 = vmul.f32 %v229, %v353
      %v358 = vmul.f32 %v230, %v353
      %v359 = vmul.f32 %v231, %v353
      %v360 = vmul.f32 %v232, %v353
      %v361 = vmul.f32 %v233, %v353
      %v362 = vmul.f32 %v234, %v353
      %v363 = vmul.f32 %v235, %v353
      %v364 = vmul.f32 %v236, %v353
      %v365 = vmul.f32 %v237, %v353
      %v366 = vmul.f32 %v238, %v353
      %v367 = vmul.f32 %v239, %v353
      %v368 = vmul.f32 %v240, %v353
      %v369 = vmul.f32 %v241, %v353
      %v370 = vmul.f32 %v242, %v353
      %v371 = vmul.f32 %v243, %v353
      %v372 = vmul.f32 %v244, %v353
      %v373 = vmul.f32 %v245, %v353
      %v374 = vmul.f32 %v246, %v353
      %v375 = vmul.f32 %v247, %v353
      %v376 = vmul.f32 %v248, %v353
      %v377 = vmul.f32 %v249, %v353
      %v378 = vmul.f32 %v250, %v353
      %v379 = vmul.f32 %v251, %v353
      %v380 = vmul.f32 %v252, %v353
      %v381 = vmul.f32 %v253, %v353
      %v382 = vmul.f32 %v254, %v353
      %v383 = vmul.f32 %v255, %v353
      %v384 = vmul.f32 %v256, %v353
      %v385 = vmul.f32 %v257, %v353
      %v386 = vmul.f32 %v258, %v353
      %v387 = vmul.f32 %v259, %v353
      %v388 = vmul.f32 %v260, %v353
      %v389 = vmul.f32 %v261, %v353
      %v390 = vmul.f32 %v262, %v353
      %v391 = vmul.f32 %v263, %v353
      %v392 = vmul.f32 %v264, %v353
      %v393 = vmul.f32 %v265, %v353
      %v394 = vmul.f32 %v266, %v353
      %v395 = vmul.f32 %v267, %v353
      %v396 = vmul.f32 %v268, %v353
      %v397 = vmul.f32 %v269, %v353
      %v398 = vmul.f32 %v270, %v353
      %v399 = vmul.f32 %v271, %v353
      %v400 = vmul.f32 %v272, %v353
      %v401 = vmul.f32 %v273, %v353
      %vm450 = vcmask 1046528
      %v451 = vrot.slane %v354, 1
      %v452 = vrot.slane %v355, 1
      %v453 = vsel %vm450, %v451, %v452
      %v454 = vrot.slane %v356, 1
      %v455 = vsel %vm450, %v452, %v454
      %v456 = vrot.slane %v357, 1
      %v457 = vrot.slane %v358, 1
      %v458 = vsel %vm450, %v456, %v457
      %v459 = vrot.slane %v359, 1
      %v460 = vsel %vm450, %v457, %v459
      %v461 = vrot.slane %v360, 1
      %v462 = vrot.slane %v361, 1
      %v463 = vsel %vm450, %v461, %v462
      %v464 = vrot.slane %v362, 1
      %v465 = vsel %vm450, %v462, %v464
      %v466 = vrot.slane %v363, 1
      %v467 = vrot.slane %v364, 1
      %v468 = vsel %vm450, %v466, %v467
      %v469 = vrot.slane %v365, 1
      %v470 = vsel %vm450, %v467, %v469
      %v471 = vrot.slane %v366, 1
      %v472 = vrot.slane %v367, 1
      %v473 = vsel %vm450, %v471, %v472
      %v474 = vrot.slane %v368, 1
      %v475 = vsel %vm450, %v472, %v474
      %v476 = vrot.slane %v369, 1
      %v477 = vrot.slane %v370, 1
      %v478 = vsel %vm450, %v476, %v477
      %v479 = vrot.slane %v371, 1
      %v480 = vsel %vm450, %v477, %v479
      %v481 = vrot.slane %v372, 1
      %v482 = vrot.slane %v373, 1
      %v483 = vsel %vm450, %v481, %v482
      %v484 = vrot.slane %v374, 1
      %v485 = vsel %vm450, %v482, %v484
      %v486 = vrot.slane %v375, 1
      %v487 = vrot.slane %v376, 1
      %v488 = vsel %vm450, %v486, %v487
      %v489 = vrot.slane %v377, 1
      %v490 = vsel %vm450, %v487, %v489
      %v491 = vrot.slane %v378, 1
      %v492 = vrot.slane %v379, 1
      %v493 = vsel %vm450, %v491, %v492
      %v494 = vrot.slane %v380, 1
      %v495 = vsel %vm450, %v492, %v494
      %v496 = vrot.slane %v381, 1
      %v497 = vrot.slane %v382, 1
      %v498 = vsel %vm450, %v496, %v497
      %v499 = vrot.slane %v383, 1
      %v500 = vsel %vm450, %v497, %v499
      %v501 = vrot.slane %v384, 1
      %v502 = vrot.slane %v385, 1
      %v503 = vsel %vm450, %v501, %v502
      %v504 = vrot.slane %v386, 1
      %v505 = vsel %vm450, %v502, %v504
      %v506 = vrot.slane %v387, 1
      %v507 = vrot.slane %v388, 1
      %v508 = vsel %vm450, %v506, %v507
      %v509 = vrot.slane %v389, 1
      %v510 = vsel %vm450, %v507, %v509
      %v511 = vrot.slane %v390, 1
      %v512 = vrot.slane %v391, 1
      %v513 = vsel %vm450, %v511, %v512
      %v514 = vrot.slane %v392, 1
      %v515 = vsel %vm450, %v512, %v514
      %v516 = vrot.slane %v393, 1
      %v517 = vrot.slane %v394, 1
      %v518 = vsel %vm450, %v516, %v517
      %v519 = vrot.slane %v395, 1
      %v520 = vsel %vm450, %v517, %v519
      %v521 = vrot.slane %v396, 1
      %v522 = vrot.slane %v397, 1
      %v523 = vsel %vm450, %v521, %v522
      %v524 = vrot.slane %v398, 1
      %v525 = vsel %vm450, %v522, %v524
      %v526 = vrot.slane %v399, 1
      %v527 = vrot.slane %v400, 1
      %v528 = vsel %vm450, %v526, %v527
      %v529 = vrot.slane %v401, 1
      %v530 = vsel %vm450, %v527, %v529
      %v563 = vadd.f32 %v318, %v453
      %v564 = vadd.f32 %v319, %v455
      %v565 = vadd.f32 %v320, %v458
      %v566 = vadd.f32 %v321, %v460
      %v567 = vadd.f32 %v322, %v463
      %v568 = vadd.f32 %v323, %v465
      %v569 = vadd.f32 %v324, %v468
      %v570 = vadd.f32 %v325, %v470
      %v571 = vadd.f32 %v326, %v473
      %v572 = vadd.f32 %v327, %v475
      %v573 = vadd.f32 %v328, %v478
      %v574 = vadd.f32 %v329, %v480
      %v575 = vadd.f32 %v330, %v483
      %v576 = vadd.f32 %v331, %v485
      %v577 = vadd.f32 %v332, %v488
      %v578 = vadd.f32 %v333, %v490
      %v579 = vadd.f32 %v334, %v493
      %v580 = vadd.f32 %v335, %v495
      %v581 = vadd.f32 %v336, %v498
      %v582 = vadd.f32 %v337, %v500
      %v583 = vadd.f32 %v338, %v503
      %v584 = vadd.f32 %v339, %v505
      %v585 = vadd.f32 %v340, %v508
      %v586 = vadd.f32 %v341, %v510
      %v587 = vadd.f32 %v342, %v513
      %v588 = vadd.f32 %v343, %v515
      %v589 = vadd.f32 %v344, %v518
      %v590 = vadd.f32 %v345, %v520
      %v591 = vadd.f32 %v346, %v523
      %v592 = vadd.f32 %v347, %v525
      %v593 = vadd.f32 %v348, %v528
      %v594 = vadd.f32 %v349, %v530
      %v595 = vlaneseq
      %v596 = vshrl.u32 %v595, 7
      %v597 = vsub.s32 2, %v596
      %v598 = vrot.slane %v280, %v597
      %v599 = vmul.f32 %v226, %v598
      %v600 = vmul.f32 %v227, %v598
      %v601 = vmul.f32 %v228, %v598
      %v602 = vmul.f32 %v229, %v598
      %v603 = vmul.f32 %v230, %v598
      %v604 = vmul.f32 %v231, %v598
      %v605 = vmul.f32 %v232, %v598
      %v606 = vmul.f32 %v233, %v598
      %v607 = vmul.f32 %v234, %v598
      %v608 = vmul.f32 %v235, %v598
      %v609 = vmul.f32 %v236, %v598
      %v610 = vmul.f32 %v237, %v598
      %v611 = vmul.f32 %v238, %v598
      %v612 = vmul.f32 %v239, %v598
      %v613 = vmul.f32 %v240, %v598
      %v614 = vmul.f32 %v241, %v598
      %v615 = vmul.f32 %v242, %v598
      %v616 = vmul.f32 %v243, %v598
      %v617 = vmul.f32 %v244, %v598
      %v618 = vmul.f32 %v245, %v598
      %v619 = vmul.f32 %v246, %v598
      %v620 = vmul.f32 %v247, %v598
      %v621 = vmul.f32 %v248, %v598
      %v622 = vmul.f32 %v249, %v598
      %v623 = vmul.f32 %v250, %v598
      %v624 = vmul.f32 %v251, %v598
      %v625 = vmul.f32 %v252, %v598
      %v626 = vmul.f32 %v253, %v598
      %v627 = vmul.f32 %v254, %v598
      %v628 = vmul.f32 %v255, %v598
      %v629 = vmul.f32 %v256, %v598
      %v630 = vmul.f32 %v257, %v598
      %v631 = vmul.f32 %v258, %v598
      %v632 = vmul.f32 %v259, %v598
      %v633 = vmul.f32 %v260, %v598
      %v634 = vmul.f32 %v261, %v598
      %v635 = vmul.f32 %v262, %v598
      %v636 = vmul.f32 %v263, %v598
      %v637 = vmul.f32 %v264, %v598
      %v638 = vmul.f32 %v265, %v598
      %v639 = vmul.f32 %v266, %v598
      %v640 = vmul.f32 %v267, %v598
      %v641 = vmul.f32 %v268, %v598
      %v642 = vmul.f32 %v269, %v598
      %v643 = vmul.f32 %v270, %v598
      %v644 = vmul.f32 %v271, %v598
      %v645 = vmul.f32 %v272, %v598
      %v646 = vmul.f32 %v273, %v598
      %vm695 = vcmask 1045504
      %v696 = vrot.slane %v599, 2
      %v697 = vrot.slane %v600, 2
      %v698 = vsel %vm695, %v696, %v697
      %v699 = vrot.slane %v601, 2
      %v700 = vsel %vm695, %v697, %v699
      %v701 = vrot.slane %v602, 2
      %v702 = vrot.slane %v603, 2
      %v703 = vsel %vm695, %v701, %v702
      %v704 = vrot.slane %v604, 2
      %v705 = vsel %vm695, %v702, %v704
      %v706 = vrot.slane %v605, 2
      %v707 = vrot.slane %v606, 2
      %v708 = vsel %vm695, %v706, %v707
      %v709 = vrot.slane %v607, 2
      %v710 = vsel %vm695, %v707, %v709
      %v711 = vrot.slane %v608, 2
      %v712 = vrot.slane %v609, 2
      %v713 = vsel %vm695, %v711, %v712
      %v714 = vrot.slane %v610, 2
      %v715 = vsel %vm695, %v712, %v714
      %v716 = vrot.slane %v611, 2
      %v717 = vrot.slane %v612, 2
      %v718 = vsel %vm695, %v716, %v717
      %v719 = vrot.slane %v613, 2
      %v720 = vsel %vm695, %v717, %v719
      %v721 = vrot.slane %v614, 2
      %v722 = vrot.slane %v615, 2
      %v723 = vsel %vm695, %v721, %v722
      %v724 = vrot.slane %v616, 2
      %v725 = vsel %vm695, %v722, %v724
      %v726 = vrot.slane %v617, 2
      %v727 = vrot.slane %v618, 2
      %v728 = vsel %vm695, %v726, %v727
      %v729 = vrot.slane %v619, 2
      %v730 = vsel %vm695, %v727, %v729
      %v731 = vrot.slane %v620, 2
      %v732 = vrot.slane %v621, 2
      %v733 = vsel %vm695, %v731, %v732
      %v734 = vrot.slane %v622, 2
      %v735 = vsel %vm695, %v732, %v734
      %v736 = vrot.slane %v623, 2
      %v737 = vrot.slane %v624, 2
      %v738 = vsel %vm695, %v736, %v737
      %v739 = vrot.slane %v625, 2
      %v740 = vsel %vm695, %v737, %v739
      %v741 = vrot.slane %v626, 2
      %v742 = vrot.slane %v627, 2
      %v743 = vsel %vm695, %v741, %v742
      %v744 = vrot.slane %v628, 2
      %v745 = vsel %vm695, %v742, %v744
      %v746 = vrot.slane %v629, 2
      %v747 = vrot.slane %v630, 2
      %v748 = vsel %vm695, %v746, %v747
      %v749 = vrot.slane %v631, 2
      %v750 = vsel %vm695, %v747, %v749
      %v751 = vrot.slane %v632, 2
      %v752 = vrot.slane %v633, 2
      %v753 = vsel %vm695, %v751, %v752
      %v754 = vrot.slane %v634, 2
      %v755 = vsel %vm695, %v752, %v754
      %v756 = vrot.slane %v635, 2
      %v757 = vrot.slane %v636, 2
      %v758 = vsel %vm695, %v756, %v757
      %v759 = vrot.slane %v637, 2
      %v760 = vsel %vm695, %v757, %v759
      %v761 = vrot.slane %v638, 2
      %v762 = vrot.slane %v639, 2
      %v763 = vsel %vm695, %v761, %v762
      %v764 = vrot.slane %v640, 2
      %v765 = vsel %vm695, %v762, %v764
      %v766 = vrot.slane %v641, 2
      %v767 = vrot.slane %v642, 2
      %v768 = vsel %vm695, %v766, %v767
      %v769 = vrot.slane %v643, 2
      %v770 = vsel %vm695, %v767, %v769
      %v771 = vrot.slane %v644, 2
      %v772 = vrot.slane %v645, 2
      %v773 = vsel %vm695, %v771, %v772
      %v774 = vrot.slane %v646, 2
      %v775 = vsel %vm695, %v772, %v774
      %v808 = vadd.f32 %v563, %v698
      %v809 = vadd.f32 %v564, %v700
      %v810 = vadd.f32 %v565, %v703
      %v811 = vadd.f32 %v566, %v705
      %v812 = vadd.f32 %v567, %v708
      %v813 = vadd.f32 %v568, %v710
      %v814 = vadd.f32 %v569, %v713
      %v815 = vadd.f32 %v570, %v715
      %v816 = vadd.f32 %v571, %v718
      %v817 = vadd.f32 %v572, %v720
      %v818 = vadd.f32 %v573, %v723
      %v819 = vadd.f32 %v574, %v725
      %v820 = vadd.f32 %v575, %v728
      %v821 = vadd.f32 %v576, %v730
      %v822 = vadd.f32 %v577, %v733
      %v823 = vadd.f32 %v578, %v735
      %v824 = vadd.f32 %v579, %v738
      %v825 = vadd.f32 %v580, %v740
      %v826 = vadd.f32 %v581, %v743
      %v827 = vadd.f32 %v582, %v745
      %v828 = vadd.f32 %v583, %v748
      %v829 = vadd.f32 %v584, %v750
      %v830 = vadd.f32 %v585, %v753
      %v831 = vadd.f32 %v586, %v755
      %v832 = vadd.f32 %v587, %v758
      %v833 = vadd.f32 %v588, %v760
      %v834 = vadd.f32 %v589, %v763
      %v835 = vadd.f32 %v590, %v765
      %v836 = vadd.f32 %v591, %v768
      %v837 = vadd.f32 %v592, %v770
      %v838 = vadd.f32 %v593, %v773
      %v839 = vadd.f32 %v594, %v775
      %v840 = vlaneseq
      %v841 = vshrl.u32 %v840, 7
      %v842 = vsub.s32 3, %v841
      %v843 = vrot.slane %v280, %v842
      %v844 = vmul.f32 %v229, %v843
      %v845 = vmul.f32 %v230, %v843
      %v846 = vmul.f32 %v232, %v843
      %v847 = vmul.f32 %v233, %v843
      %v848 = vmul.f32 %v235, %v843
      %v849 = vmul.f32 %v236, %v843
      %v850 = vmul.f32 %v238, %v843
      %v851 = vmul.f32 %v239, %v843
      %v852 = vmul.f32 %v241, %v843
      %v853 = vmul.f32 %v242, %v843
      %v854 = vmul.f32 %v244, %v843
      %v855 = vmul.f32 %v245, %v843
      %v856 = vmul.f32 %v247, %v843
      %v857 = vmul.f32 %v248, %v843
      %v858 = vmul.f32 %v250, %v843
      %v859 = vmul.f32 %v251, %v843
      %v860 = vmul.f32 %v253, %v843
      %v861 = vmul.f32 %v254, %v843
      %v862 = vmul.f32 %v256, %v843
      %v863 = vmul.f32 %v257, %v843
      %v864 = vmul.f32 %v259, %v843
      %v865 = vmul.f32 %v260, %v843
      %v866 = vmul.f32 %v262, %v843
      %v867 = vmul.f32 %v263, %v843
      %v868 = vmul.f32 %v265, %v843
      %v869 = vmul.f32 %v266, %v843
      %v870 = vmul.f32 %v268, %v843
      %v871 = vmul.f32 %v269, %v843
      %v872 = vmul.f32 %v271, %v843
      %v873 = vmul.f32 %v272, %v843
      %v874 = vmul.f32 %v274, %v843
      %v875 = vmul.f32 %v275, %v843
      %v876 = vadd.f32 %v808, %v844
      %v877 = vadd.f32 %v809, %v845
      %v878 = vadd.f32 %v810, %v846
      %v879 = vadd.f32 %v811, %v847
      %v880 = vadd.f32 %v812, %v848
      %v881 = vadd.f32 %v813, %v849
      %v882 = vadd.f32 %v814, %v850
      %v883 = vadd.f32 %v815, %v851
      %v884 = vadd.f32 %v816, %v852
      %v885 = vadd.f32 %v817, %v853
      %v886 = vadd.f32 %v818, %v854
      %v887 = vadd.f32 %v819, %v855
      %v888 = vadd.f32 %v820, %v856
      %v889 = vadd.f32 %v821, %v857
      %v890 = vadd.f32 %v822, %v858
      %v891 = vadd.f32 %v823, %v859
      %v892 = vadd.f32 %v824, %v860
      %v893 = vadd.f32 %v825, %v861
      %v894 = vadd.f32 %v826, %v862
      %v895 = vadd.f32 %v827, %v863
      %v896 = vadd.f32 %v828, %v864
      %v897 = vadd.f32 %v829, %v865
      %v898 = vadd.f32 %v830, %v866
      %v899 = vadd.f32 %v831, %v867
      %v900 = vadd.f32 %v832, %v868
      %v901 = vadd.f32 %v833, %v869
      %v902 = vadd.f32 %v834, %v870
      %v903 = vadd.f32 %v835, %v871
      %v904 = vadd.f32 %v836, %v872
      %v905 = vadd.f32 %v837, %v873
      %v906 = vadd.f32 %v838, %v874
      %v907 = vadd.f32 %v839, %v875
      %v908 = vlaneseq
      %v909 = vshrl.u32 %v908, 7
      %v910 = vsub.s32 4, %v909
      %v911 = vrot.slane %v280, %v910
      %v912 = vmul.f32 %v229, %v911
      %v913 = vmul.f32 %v230, %v911
      %v914 = vmul.f32 %v231, %v911
      %v915 = vmul.f32 %v232, %v911
      %v916 = vmul.f32 %v233, %v911
      %v917 = vmul.f32 %v234, %v911
      %v918 = vmul.f32 %v235, %v911
      %v919 = vmul.f32 %v236, %v911
      %v920 = vmul.f32 %v237, %v911
      %v921 = vmul.f32 %v238, %v911
      %v922 = vmul.f32 %v239, %v911
      %v923 = vmul.f32 %v240, %v911
      %v924 = vmul.f32 %v241, %v911
      %v925 = vmul.f32 %v242, %v911
      %v926 = vmul.f32 %v243, %v911
      %v927 = vmul.f32 %v244, %v911
      %v928 = vmul.f32 %v245, %v911
      %v929 = vmul.f32 %v246, %v911
      %v930 = vmul.f32 %v247, %v911
      %v931 = vmul.f32 %v248, %v911
      %v932 = vmul.f32 %v249, %v911
      %v933 = vmul.f32 %v250, %v911
      %v934 = vmul.f32 %v251, %v911
      %v935 = vmul.f32 %v252, %v911
      %v936 = vmul.f32 %v253, %v911
      %v937 = vmul.f32 %v254, %v911
      %v938 = vmul.f32 %v255, %v911
      %v939 = vmul.f32 %v256, %v911
      %v940 = vmul.f32 %v257, %v911
      %v941 = vmul.f32 %v258, %v911
      %v942 = vmul.f32 %v259, %v911
      %v943 = vmul.f32 %v260, %v911
      %v944 = vmul.f32 %v261, %v911
      %v945 = vmul.f32 %v262, %v911
      %v946 = vmul.f32 %v263, %v911
      %v947 = vmul.f32 %v264, %v911
      %v948 = vmul.f32 %v265, %v911
      %v949 = vmul.f32 %v266, %v911
      %v950 = vmul.f32 %v267, %v911
      %v951 = vmul.f32 %v268, %v911
      %v952 = vmul.f32 %v269, %v911
      %v953 = vmul.f32 %v270, %v911
      %v954 = vmul.f32 %v271, %v911
      %v955 = vmul.f32 %v272, %v911
      %v956 = vmul.f32 %v273, %v911
      %v957 = vmul.f32 %v274, %v911
      %v958 = vmul.f32 %v275, %v911
      %v959 = vmul.f32 %v276, %v911
      %v1008 = vrot.slane %v912, 1
      %v1009 = vrot.slane %v913, 1
      %v1010 = vsel %vm450, %v1008, %v1009
      %v1011 = vrot.slane %v914, 1
      %v1012 = vsel %vm450, %v1009, %v1011
      %v1013 = vrot.slane %v915, 1
      %v1014 = vrot.slane %v916, 1
      %v1015 = vsel %vm450, %v1013, %v1014
      %v1016 = vrot.slane %v917, 1
      %v1017 = vsel %vm450, %v1014, %v1016
      %v1018 = vrot.slane %v918, 1
      %v1019 = vrot.slane %v919, 1
      %v1020 = vsel %vm450, %v1018, %v1019
      %v1021 = vrot.slane %v920, 1
      %v1022 = vsel %vm450, %v1019, %v1021
      %v1023 = vrot.slane %v921, 1
      %v1024 = vrot.slane %v922, 1
      %v1025 = vsel %vm450, %v1023, %v1024
      %v1026 = vrot.slane %v923, 1
      %v1027 = vsel %vm450, %v1024, %v1026
      %v1028 = vrot.slane %v924, 1
      %v1029 = vrot.slane %v925, 1
      %v1030 = vsel %vm450, %v1028, %v1029
      %v1031 = vrot.slane %v926, 1
      %v1032 = vsel %vm450, %v1029, %v1031
      %v1033 = vrot.slane %v927, 1
      %v1034 = vrot.slane %v928, 1
      %v1035 = vsel %vm450, %v1033, %v1034
      %v1036 = vrot.slane %v929, 1
      %v1037 = vsel %vm450, %v1034, %v1036
      %v1038 = vrot.slane %v930, 1
      %v1039 = vrot.slane %v931, 1
      %v1040 = vsel %vm450, %v1038, %v1039
      %v1041 = vrot.slane %v932, 1
      %v1042 = vsel %vm450, %v1039, %v1041
      %v1043 = vrot.slane %v933, 1
      %v1044 = vrot.slane %v934, 1
      %v1045 = vsel %vm450, %v1043, %v1044
      %v1046 = vrot.slane %v935, 1
      %v1047 = vsel %vm450, %v1044, %v1046
      %v1048 = vrot.slane %v936, 1
      %v1049 = vrot.slane %v937, 1
      %v1050 = vsel %vm450, %v1048, %v1049
      %v1051 = vrot.slane %v938, 1
      %v1052 = vsel %vm450, %v1049, %v1051
      %v1053 = vrot.slane %v939, 1
      %v1054 = vrot.slane %v940, 1
      %v1055 = vsel %vm450, %v1053, %v1054
      %v1056 = vrot.slane %v941, 1
      %v1057 = vsel %vm450, %v1054, %v1056
      %v1058 = vrot.slane %v942, 1
      %v1059 = vrot.slane %v943, 1
      %v1060 = vsel %vm450, %v1058, %v1059
      %v1061 = vrot.slane %v944, 1
      %v1062 = vsel %vm450, %v1059, %v1061
      %v1063 = vrot.slane %v945, 1
      %v1064 = vrot.slane %v946, 1
      %v1065 = vsel %vm450, %v1063, %v1064
      %v1066 = vrot.slane %v947, 1
      %v1067 = vsel %vm450, %v1064, %v1066
      %v1068 = vrot.slane %v948, 1
      %v1069 = vrot.slane %v949, 1
      %v1070 = vsel %vm450, %v1068, %v1069
      %v1071 = vrot.slane %v950, 1
      %v1072 = vsel %vm450, %v1069, %v1071
      %v1073 = vrot.slane %v951, 1
      %v1074 = vrot.slane %v952, 1
      %v1075 = vsel %vm450, %v1073, %v1074
      %v1076 = vrot.slane %v953, 1
      %v1077 = vsel %vm450, %v1074, %v1076
      %v1078 = vrot.slane %v954, 1
      %v1079 = vrot.slane %v955, 1
      %v1080 = vsel %vm450, %v1078, %v1079
      %v1081 = vrot.slane %v956, 1
      %v1082 = vsel %vm450, %v1079, %v1081
      %v1083 = vrot.slane %v957, 1
      %v1084 = vrot.slane %v958, 1
      %v1085 = vsel %vm450, %v1083, %v1084
      %v1086 = vrot.slane %v959, 1
      %v1087 = vsel %vm450, %v1084, %v1086
      %v1120 = vadd.f32 %v876, %v1010
      %v1121 = vadd.f32 %v877, %v1012
      %v1122 = vadd.f32 %v878, %v1015
      %v1123 = vadd.f32 %v879, %v1017
      %v1124 = vadd.f32 %v880, %v1020
      %v1125 = vadd.f32 %v881, %v1022
      %v1126 = vadd.f32 %v882, %v1025
      %v1127 = vadd.f32 %v883, %v1027
      %v1128 = vadd.f32 %v884, %v1030
      %v1129 = vadd.f32 %v885, %v1032
      %v1130 = vadd.f32 %v886, %v1035
      %v1131 = vadd.f32 %v887, %v1037
      %v1132 = vadd.f32 %v888, %v1040
      %v1133 = vadd.f32 %v889, %v1042
      %v1134 = vadd.f32 %v890, %v1045
      %v1135 = vadd.f32 %v891, %v1047
      %v1136 = vadd.f32 %v892, %v1050
      %v1137 = vadd.f32 %v893, %v1052
      %v1138 = vadd.f32 %v894, %v1055
      %v1139 = vadd.f32 %v895, %v1057
      %v1140 = vadd.f32 %v896, %v1060
      %v1141 = vadd.f32 %v897, %v1062
      %v1142 = vadd.f32 %v898, %v1065
      %v1143 = vadd.f32 %v899, %v1067
      %v1144 = vadd.f32 %v900, %v1070
      %v1145 = vadd.f32 %v901, %v1072
      %v1146 = vadd.f32 %v902, %v1075
      %v1147 = vadd.f32 %v903, %v1077
      %v1148 = vadd.f32 %v904, %v1080
      %v1149 = vadd.f32 %v905, %v1082
      %v1150 = vadd.f32 %v906, %v1085
      %v1151 = vadd.f32 %v907, %v1087
      %v1152 = vlaneseq
      %v1153 = vshrl.u32 %v1152, 7
      %v1154 = vsub.s32 5, %v1153
      %v1155 = vrot.slane %v280, %v1154
      %v1156 = vmul.f32 %v229, %v1155
      %v1157 = vmul.f32 %v230, %v1155
      %v1158 = vmul.f32 %v231, %v1155
      %v1159 = vmul.f32 %v232, %v1155
      %v1160 = vmul.f32 %v233, %v1155
      %v1161 = vmul.f32 %v234, %v1155
      %v1162 = vmul.f32 %v235, %v1155
      %v1163 = vmul.f32 %v236, %v1155
      %v1164 = vmul.f32 %v237, %v1155
      %v1165 = vmul.f32 %v238, %v1155
      %v1166 = vmul.f32 %v239, %v1155
      %v1167 = vmul.f32 %v240, %v1155
      %v1168 = vmul.f32 %v241, %v1155
      %v1169 = vmul.f32 %v242, %v1155
      %v1170 = vmul.f32 %v243, %v1155
      %v1171 = vmul.f32 %v244, %v1155
      %v1172 = vmul.f32 %v245, %v1155
      %v1173 = vmul.f32 %v246, %v1155
      %v1174 = vmul.f32 %v247, %v1155
      %v1175 = vmul.f32 %v248, %v1155
      %v1176 = vmul.f32 %v249, %v1155
      %v1177 = vmul.f32 %v250, %v1155
      %v1178 = vmul.f32 %v251, %v1155
      %v1179 = vmul.f32 %v252, %v1155
      %v1180 = vmul.f32 %v253, %v1155
      %v1181 = vmul.f32 %v254, %v1155
      %v1182 = vmul.f32 %v255, %v1155
      %v1183 = vmul.f32 %v256, %v1155
      %v1184 = vmul.f32 %v257, %v1155
      %v1185 = vmul.f32 %v258, %v1155
      %v1186 = vmul.f32 %v259, %v1155
      %v1187 = vmul.f32 %v260, %v1155
      %v1188 = vmul.f32 %v261, %v1155
      %v1189 = vmul.f32 %v262, %v1155
      %v1190 = vmul.f32 %v263, %v1155
      %v1191 = vmul.f32 %v264, %v1155
      %v1192 = vmul.f32 %v265, %v1155
      %v1193 = vmul.f32 %v266, %v1155
      %v1194 = vmul.f32 %v267, %v1155
      %v1195 = vmul.f32 %v268, %v1155
      %v1196 = vmul.f32 %v269, %v1155
      %v1197 = vmul.f32 %v270, %v1155
      %v1198 = vmul.f32 %v271, %v1155
      %v1199 = vmul.f32 %v272, %v1155
      %v1200 = vmul.f32 %v273, %v1155
      %v1201 = vmul.f32 %v274, %v1155
      %v1202 = vmul.f32 %v275, %v1155
      %v1203 = vmul.f32 %v276, %v1155
      %v1252 = vrot.slane %v1156, 2
      %v1253 = vrot.slane %v1157, 2
      %v1254 = vsel %vm695, %v1252, %v1253
      %v1255 = vrot.slane %v1158, 2
      %v1256 = vsel %vm695, %v1253, %v1255
      %v1257 = vrot.slane %v1159, 2
      %v1258 = vrot.slane %v1160, 2
      %v1259 = vsel %vm695, %v1257, %v1258
      %v1260 = vrot.slane %v1161, 2
      %v1261 = vsel %vm695, %v1258, %v1260
      %v1262 = vrot.slane %v1162, 2
      %v1263 = vrot.slane %v1163, 2
      %v1264 = vsel %vm695, %v1262, %v1263
      %v1265 = vrot.slane %v1164, 2
      %v1266 = vsel %vm695, %v1263, %v1265
      %v1267 = vrot.slane %v1165, 2
      %v1268 = vrot.slane %v1166, 2
      %v1269 = vsel %vm695, %v1267, %v1268
      %v1270 = vrot.slane %v1167, 2
      %v1271 = vsel %vm695, %v1268, %v1270
      %v1272 = vrot.slane %v1168, 2
      %v1273 = vrot.slane %v1169, 2
      %v1274 = vsel %vm695, %v1272, %v1273
      %v1275 = vrot.slane %v1170, 2
      %v1276 = vsel %vm695, %v1273, %v1275
      %v1277 = vrot.slane %v1171, 2
      %v1278 = vrot.slane %v1172, 2
      %v1279 = vsel %vm695, %v1277, %v1278
      %v1280 = vrot.slane %v1173, 2
      %v1281 = vsel %vm695, %v1278, %v1280
      %v1282 = vrot.slane %v1174, 2
      %v1283 = vrot.slane %v1175, 2
      %v1284 = vsel %vm695, %v1282, %v1283
      %v1285 = vrot.slane %v1176, 2
      %v1286 = vsel %vm695, %v1283, %v1285
      %v1287 = vrot.slane %v1177, 2
      %v1288 = vrot.slane %v1178, 2
      %v1289 = vsel %vm695, %v1287, %v1288
      %v1290 = vrot.slane %v1179, 2
      %v1291 = vsel %vm695, %v1288, %v1290
      %v1292 = vrot.slane %v1180, 2
      %v1293 = vrot.slane %v1181, 2
      %v1294 = vsel %vm695, %v1292, %v1293
      %v1295 = vrot.slane %v1182, 2
      %v1296 = vsel %vm695, %v1293, %v1295
      %v1297 = vrot.slane %v1183, 2
      %v1298 = vrot.slane %v1184, 2
      %v1299 = vsel %vm695, %v1297, %v1298
      %v1300 = vrot.slane %v1185, 2
      %v1301 = vsel %vm695, %v1298, %v1300
      %v1302 = vrot.slane %v1186, 2
      %v1303 = vrot.slane %v1187, 2
      %v1304 = vsel %vm695, %v1302, %v1303
      %v1305 = vrot.slane %v1188, 2
      %v1306 = vsel %vm695, %v1303, %v1305
      %v1307 = vrot.slane %v1189, 2
      %v1308 = vrot.slane %v1190, 2
      %v1309 = vsel %vm695, %v1307, %v1308
      %v1310 = vrot.slane %v1191, 2
      %v1311 = vsel %vm695, %v1308, %v1310
      %v1312 = vrot.slane %v1192, 2
      %v1313 = vrot.slane %v1193, 2
      %v1314 = vsel %vm695, %v1312, %v1313
      %v1315 = vrot.slane %v1194, 2
      %v1316 = vsel %vm695, %v1313, %v1315
      %v1317 = vrot.slane %v1195, 2
      %v1318 = vrot.slane %v1196, 2
      %v1319 = vsel %vm695, %v1317, %v1318
      %v1320 = vrot.slane %v1197, 2
      %v1321 = vsel %vm695, %v1318, %v1320
      %v1322 = vrot.slane %v1198, 2
      %v1323 = vrot.slane %v1199, 2
      %v1324 = vsel %vm695, %v1322, %v1323
      %v1325 = vrot.slane %v1200, 2
      %v1326 = vsel %vm695, %v1323, %v1325
      %v1327 = vrot.slane %v1201, 2
      %v1328 = vrot.slane %v1202, 2
      %v1329 = vsel %vm695, %v1327, %v1328
      %v1330 = vrot.slane %v1203, 2
      %v1331 = vsel %vm695, %v1328, %v1330
      %v1364 = vadd.f32 %v1120, %v1254
      %v1365 = vadd.f32 %v1121, %v1256
      %v1366 = vadd.f32 %v1122, %v1259
      %v1367 = vadd.f32 %v1123, %v1261
      %v1368 = vadd.f32 %v1124, %v1264
      %v1369 = vadd.f32 %v1125, %v1266
      %v1370 = vadd.f32 %v1126, %v1269
      %v1371 = vadd.f32 %v1127, %v1271
      %v1372 = vadd.f32 %v1128, %v1274
      %v1373 = vadd.f32 %v1129, %v1276
      %v1374 = vadd.f32 %v1130, %v1279
      %v1375 = vadd.f32 %v1131, %v1281
      %v1376 = vadd.f32 %v1132, %v1284
      %v1377 = vadd.f32 %v1133, %v1286
      %v1378 = vadd.f32 %v1134, %v1289
      %v1379 = vadd.f32 %v1135, %v1291
      %v1380 = vadd.f32 %v1136, %v1294
      %v1381 = vadd.f32 %v1137, %v1296
      %v1382 = vadd.f32 %v1138, %v1299
      %v1383 = vadd.f32 %v1139, %v1301
      %v1384 = vadd.f32 %v1140, %v1304
      %v1385 = vadd.f32 %v1141, %v1306
      %v1386 = vadd.f32 %v1142, %v1309
      %v1387 = vadd.f32 %v1143, %v1311
      %v1388 = vadd.f32 %v1144, %v1314
      %v1389 = vadd.f32 %v1145, %v1316
      %v1390 = vadd.f32 %v1146, %v1319
      %v1391 = vadd.f32 %v1147, %v1321
      %v1392 = vadd.f32 %v1148, %v1324
      %v1393 = vadd.f32 %v1149, %v1326
      %v1394 = vadd.f32 %v1150, %v1329
      %v1395 = vadd.f32 %v1151, %v1331
      %v1396 = vlaneseq
      %v1397 = vshrl.u32 %v1396, 7
      %v1398 = vsub.s32 6, %v1397
      %v1399 = vrot.slane %v280, %v1398
      %v1400 = vmul.f32 %v232, %v1399
      %v1401 = vmul.f32 %v233, %v1399
      %v1402 = vmul.f32 %v235, %v1399
      %v1403 = vmul.f32 %v236, %v1399
      %v1404 = vmul.f32 %v238, %v1399
      %v1405 = vmul.f32 %v239, %v1399
      %v1406 = vmul.f32 %v241, %v1399
      %v1407 = vmul.f32 %v242, %v1399
      %v1408 = vmul.f32 %v244, %v1399
      %v1409 = vmul.f32 %v245, %v1399
      %v1410 = vmul.f32 %v247, %v1399
      %v1411 = vmul.f32 %v248, %v1399
      %v1412 = vmul.f32 %v250, %v1399
      %v1413 = vmul.f32 %v251, %v1399
      %v1414 = vmul.f32 %v253, %v1399
      %v1415 = vmul.f32 %v254, %v1399
      %v1416 = vmul.f32 %v256, %v1399
      %v1417 = vmul.f32 %v257, %v1399
      %v1418 = vmul.f32 %v259, %v1399
      %v1419 = vmul.f32 %v260, %v1399
      %v1420 = vmul.f32 %v262, %v1399
      %v1421 = vmul.f32 %v263, %v1399
      %v1422 = vmul.f32 %v265, %v1399
      %v1423 = vmul.f32 %v266, %v1399
      %v1424 = vmul.f32 %v268, %v1399
      %v1425 = vmul.f32 %v269, %v1399
      %v1426 = vmul.f32 %v271, %v1399
      %v1427 = vmul.f32 %v272, %v1399
      %v1428 = vmul.f32 %v274, %v1399
      %v1429 = vmul.f32 %v275, %v1399
      %v1430 = vmul.f32 %v277, %v1399
      %v1431 = vmul.f32 %v278, %v1399
      %v1432 = vadd.f32 %v1364, %v1400
      %v1433 = vadd.f32 %v1365, %v1401
      %v1434 = vadd.f32 %v1366, %v1402
      %v1435 = vadd.f32 %v1367, %v1403
      %v1436 = vadd.f32 %v1368, %v1404
      %v1437 = vadd.f32 %v1369, %v1405
      %v1438 = vadd.f32 %v1370, %v1406
      %v1439 = vadd.f32 %v1371, %v1407
      %v1440 = vadd.f32 %v1372, %v1408
      %v1441 = vadd.f32 %v1373, %v1409
      %v1442 = vadd.f32 %v1374, %v1410
      %v1443 = vadd.f32 %v1375, %v1411
      %v1444 = vadd.f32 %v1376, %v1412
      %v1445 = vadd.f32 %v1377, %v1413
      %v1446 = vadd.f32 %v1378, %v1414
      %v1447 = vadd.f32 %v1379, %v1415
      %v1448 = vadd.f32 %v1380, %v1416
      %v1449 = vadd.f32 %v1381, %v1417
      %v1450 = vadd.f32 %v1382, %v1418
      %v1451 = vadd.f32 %v1383, %v1419
      %v1452 = vadd.f32 %v1384, %v1420
      %v1453 = vadd.f32 %v1385, %v1421
      %v1454 = vadd.f32 %v1386, %v1422
      %v1455 = vadd.f32 %v1387, %v1423
      %v1456 = vadd.f32 %v1388, %v1424
      %v1457 = vadd.f32 %v1389, %v1425
      %v1458 = vadd.f32 %v1390, %v1426
      %v1459 = vadd.f32 %v1391, %v1427
      %v1460 = vadd.f32 %v1392, %v1428
      %v1461 = vadd.f32 %v1393, %v1429
      %v1462 = vadd.f32 %v1394, %v1430
      %v1463 = vadd.f32 %v1395, %v1431
      %v1464 = vlaneseq
      %v1465 = vshrl.u32 %v1464, 7
      %v1466 = vsub.s32 7, %v1465
      %v1467 = vrot.slane %v280, %v1466
      %v1468 = vmul.f32 %v232, %v1467
      %v1469 = vmul.f32 %v233, %v1467
      %v1470 = vmul.f32 %v234, %v1467
      %v1471 = vmul.f32 %v235, %v1467
      %v1472 = vmul.f32 %v236, %v1467
      %v1473 = vmul.f32 %v237, %v1467
      %v1474 = vmul.f32 %v238, %v1467
      %v1475 = vmul.f32 %v239, %v1467
      %v1476 = vmul.f32 %v240, %v1467
      %v1477 = vmul.f32 %v241, %v1467
      %v1478 = vmul.f32 %v242, %v1467
      %v1479 = vmul.f32 %v243, %v1467
      %v1480 = vmul.f32 %v244, %v1467
      %v1481 = vmul.f32 %v245, %v1467
      %v1482 = vmul.f32 %v246, %v1467
      %v1483 = vmul.f32 %v247, %v1467
      %v1484 = vmul.f32 %v248, %v1467
      %v1485 = vmul.f32 %v249, %v1467
      %v1486 = vmul.f32 %v250, %v1467
      %v1487 = vmul.f32 %v251, %v1467
      %v1488 = vmul.f32 %v252, %v1467
      %v1489 = vmul.f32 %v253, %v1467
      %v1490 = vmul.f32 %v254, %v1467
      %v1491 = vmul.f32 %v255, %v1467
      %v1492 = vmul.f32 %v256, %v1467
      %v1493 = vmul.f32 %v257, %v1467
      %v1494 = vmul.f32 %v258, %v1467
      %v1495 = vmul.f32 %v259, %v1467
      %v1496 = vmul.f32 %v260, %v1467
      %v1497 = vmul.f32 %v261, %v1467
      %v1498 = vmul.f32 %v262, %v1467
      %v1499 = vmul.f32 %v263, %v1467
      %v1500 = vmul.f32 %v264, %v1467
      %v1501 = vmul.f32 %v265, %v1467
      %v1502 = vmul.f32 %v266, %v1467
      %v1503 = vmul.f32 %v267, %v1467
      %v1504 = vmul.f32 %v268, %v1467
      %v1505 = vmul.f32 %v269, %v1467
      %v1506 = vmul.f32 %v270, %v1467
      %v1507 = vmul.f32 %v271, %v1467
      %v1508 = vmul.f32 %v272, %v1467
      %v1509 = vmul.f32 %v273, %v1467
      %v1510 = vmul.f32 %v274, %v1467
      %v1511 = vmul.f32 %v275, %v1467
      %v1512 = vmul.f32 %v276, %v1467
      %v1513 = vmul.f32 %v277, %v1467
      %v1514 = vmul.f32 %v278, %v1467
      %v1515 = vmul.f32 %v279, %v1467
      %v1564 = vrot.slane %v1468, 1
      %v1565 = vrot.slane %v1469, 1
      %v1566 = vsel %vm450, %v1564, %v1565
      %v1567 = vrot.slane %v1470, 1
      %v1568 = vsel %vm450, %v1565, %v1567
      %v1569 = vrot.slane %v1471, 1
      %v1570 = vrot.slane %v1472, 1
      %v1571 = vsel %vm450, %v1569, %v1570
      %v1572 = vrot.slane %v1473, 1
      %v1573 = vsel %vm450, %v1570, %v1572
      %v1574 = vrot.slane %v1474, 1
      %v1575 = vrot.slane %v1475, 1
      %v1576 = vsel %vm450, %v1574, %v1575
      %v1577 = vrot.slane %v1476, 1
      %v1578 = vsel %vm450, %v1575, %v1577
      %v1579 = vrot.slane %v1477, 1
      %v1580 = vrot.slane %v1478, 1
      %v1581 = vsel %vm450, %v1579, %v1580
      %v1582 = vrot.slane %v1479, 1
      %v1583 = vsel %vm450, %v1580, %v1582
      %v1584 = vrot.slane %v1480, 1
      %v1585 = vrot.slane %v1481, 1
      %v1586 = vsel %vm450, %v1584, %v1585
      %v1587 = vrot.slane %v1482, 1
      %v1588 = vsel %vm450, %v1585, %v1587
      %v1589 = vrot.slane %v1483, 1
      %v1590 = vrot.slane %v1484, 1
      %v1591 = vsel %vm450, %v1589, %v1590
      %v1592 = vrot.slane %v1485, 1
      %v1593 = vsel %vm450, %v1590, %v1592
      %v1594 = vrot.slane %v1486, 1
      %v1595 = vrot.slane %v1487, 1
      %v1596 = vsel %vm450, %v1594, %v1595
      %v1597 = vrot.slane %v1488, 1
      %v1598 = vsel %vm450, %v1595, %v1597
      %v1599 = vrot.slane %v1489, 1
      %v1600 = vrot.slane %v1490, 1
      %v1601 = vsel %vm450, %v1599, %v1600
      %v1602 = vrot.slane %v1491, 1
      %v1603 = vsel %vm450, %v1600, %v1602
      %v1604 = vrot.slane %v1492, 1
      %v1605 = vrot.slane %v1493, 1
      %v1606 = vsel %vm450, %v1604, %v1605
      %v1607 = vrot.slane %v1494, 1
      %v1608 = vsel %vm450, %v1605, %v1607
      %v1609 = vrot.slane %v1495, 1
      %v1610 = vrot.slane %v1496, 1
      %v1611 = vsel %vm450, %v1609, %v1610
      %v1612 = vrot.slane %v1497, 1
      %v1613 = vsel %vm450, %v1610, %v1612
      %v1614 = vrot.slane %v1498, 1
      %v1615 = vrot.slane %v1499, 1
      %v1616 = vsel %vm450, %v1614, %v1615
      %v1617 = vrot.slane %v1500, 1
      %v1618 = vsel %vm450, %v1615, %v1617
      %v1619 = vrot.slane %v1501, 1
      %v1620 = vrot.slane %v1502, 1
      %v1621 = vsel %vm450, %v1619, %v1620
      %v1622 = vrot.slane %v1503, 1
      %v1623 = vsel %vm450, %v1620, %v1622
      %v1624 = vrot.slane %v1504, 1
      %v1625 = vrot.slane %v1505, 1
      %v1626 = vsel %vm450, %v1624, %v1625
      %v1627 = vrot.slane %v1506, 1
      %v1628 = vsel %vm450, %v1625, %v1627
      %v1629 = vrot.slane %v1507, 1
      %v1630 = vrot.slane %v1508, 1
      %v1631 = vsel %vm450, %v1629, %v1630
      %v1632 = vrot.slane %v1509, 1
      %v1633 = vsel %vm450, %v1630, %v1632
      %v1634 = vrot.slane %v1510, 1
      %v1635 = vrot.slane %v1511, 1
      %v1636 = vsel %vm450, %v1634, %v1635
      %v1637 = vrot.slane %v1512, 1
      %v1638 = vsel %vm450, %v1635, %v1637
      %v1639 = vrot.slane %v1513, 1
      %v1640 = vrot.slane %v1514, 1
      %v1641 = vsel %vm450, %v1639, %v1640
      %v1642 = vrot.slane %v1515, 1
      %v1643 = vsel %vm450, %v1640, %v1642
      %v1676 = vadd.f32 %v1432, %v1566
      %v1677 = vadd.f32 %v1433, %v1568
      %v1678 = vadd.f32 %v1434, %v1571
      %v1679 = vadd.f32 %v1435, %v1573
      %v1680 = vadd.f32 %v1436, %v1576
      %v1681 = vadd.f32 %v1437, %v1578
      %v1682 = vadd.f32 %v1438, %v1581
      %v1683 = vadd.f32 %v1439, %v1583
      %v1684 = vadd.f32 %v1440, %v1586
      %v1685 = vadd.f32 %v1441, %v1588
      %v1686 = vadd.f32 %v1442, %v1591
      %v1687 = vadd.f32 %v1443, %v1593
      %v1688 = vadd.f32 %v1444, %v1596
      %v1689 = vadd.f32 %v1445, %v1598
      %v1690 = vadd.f32 %v1446, %v1601
      %v1691 = vadd.f32 %v1447, %v1603
      %v1692 = vadd.f32 %v1448, %v1606
      %v1693 = vadd.f32 %v1449, %v1608
      %v1694 = vadd.f32 %v1450, %v1611
      %v1695 = vadd.f32 %v1451, %v1613
      %v1696 = vadd.f32 %v1452, %v1616
      %v1697 = vadd.f32 %v1453, %v1618
      %v1698 = vadd.f32 %v1454, %v1621
      %v1699 = vadd.f32 %v1455, %v1623
      %v1700 = vadd.f32 %v1456, %v1626
      %v1701 = vadd.f32 %v1457, %v1628
      %v1702 = vadd.f32 %v1458, %v1631
      %v1703 = vadd.f32 %v1459, %v1633
      %v1704 = vadd.f32 %v1460, %v1636
      %v1705 = vadd.f32 %v1461, %v1638
      %v1706 = vadd.f32 %v1462, %v1641
      %v1707 = vadd.f32 %v1463, %v1643
      %v1708 = vlaneseq
      %v1709 = vshrl.u32 %v1708, 7
      %v1710 = vsub.s32 0, %v1709
      %v1711 = vrot.slane %v281, %v1710
      %v1712 = vmul.f32 %v232, %v1711
      %v1713 = vmul.f32 %v233, %v1711
      %v1714 = vmul.f32 %v234, %v1711
      %v1715 = vmul.f32 %v235, %v1711
      %v1716 = vmul.f32 %v236, %v1711
      %v1717 = vmul.f32 %v237, %v1711
      %v1718 = vmul.f32 %v238, %v1711
      %v1719 = vmul.f32 %v239, %v1711
      %v1720 = vmul.f32 %v240, %v1711
      %v1721 = vmul.f32 %v241, %v1711
      %v1722 = vmul.f32 %v242, %v1711
      %v1723 = vmul.f32 %v243, %v1711
      %v1724 = vmul.f32 %v244, %v1711
      %v1725 = vmul.f32 %v245, %v1711
      %v1726 = vmul.f32 %v246, %v1711
      %v1727 = vmul.f32 %v247, %v1711
      %v1728 = vmul.f32 %v248, %v1711
      %v1729 = vmul.f32 %v249, %v1711
      %v1730 = vmul.f32 %v250, %v1711
      %v1731 = vmul.f32 %v251, %v1711
      %v1732 = vmul.f32 %v252, %v1711
      %v1733 = vmul.f32 %v253, %v1711
      %v1734 = vmul.f32 %v254, %v1711
      %v1735 = vmul.f32 %v255, %v1711
      %v1736 = vmul.f32 %v256, %v1711
      %v1737 = vmul.f32 %v257, %v1711
      %v1738 = vmul.f32 %v258, %v1711
      %v1739 = vmul.f32 %v259, %v1711
      %v1740 = vmul.f32 %v260, %v1711
      %v1741 = vmul.f32 %v261, %v1711
      %v1742 = vmul.f32 %v262, %v1711
      %v1743 = vmul.f32 %v263, %v1711
      %v1744 = vmul.f32 %v264, %v1711
      %v1745 = vmul.f32 %v265, %v1711
      %v1746 = vmul.f32 %v266, %v1711
      %v1747 = vmul.f32 %v267, %v1711
      %v1748 = vmul.f32 %v268, %v1711
      %v1749 = vmul.f32 %v269, %v1711
      %v1750 = vmul.f32 %v270, %v1711
      %v1751 = vmul.f32 %v271, %v1711
      %v1752 = vmul.f32 %v272, %v1711
      %v1753 = vmul.f32 %v273, %v1711
      %v1754 = vmul.f32 %v274, %v1711
      %v1755 = vmul.f32 %v275, %v1711
      %v1756 = vmul.f32 %v276, %v1711
      %v1757 = vmul.f32 %v277, %v1711
      %v1758 = vmul.f32 %v278, %v1711
      %v1759 = vmul.f32 %v279, %v1711
      %v1808 = vrot.slane %v1712, 2
      %v1809 = vrot.slane %v1713, 2
      %v1810 = vsel %vm695, %v1808, %v1809
      %v1811 = vrot.slane %v1714, 2
      %v1812 = vsel %vm695, %v1809, %v1811
      %v1813 = vrot.slane %v1715, 2
      %v1814 = vrot.slane %v1716, 2
      %v1815 = vsel %vm695, %v1813, %v1814
      %v1816 = vrot.slane %v1717, 2
      %v1817 = vsel %vm695, %v1814, %v1816
      %v1818 = vrot.slane %v1718, 2
      %v1819 = vrot.slane %v1719, 2
      %v1820 = vsel %vm695, %v1818, %v1819
      %v1821 = vrot.slane %v1720, 2
      %v1822 = vsel %vm695, %v1819, %v1821
      %v1823 = vrot.slane %v1721, 2
      %v1824 = vrot.slane %v1722, 2
      %v1825 = vsel %vm695, %v1823, %v1824
      %v1826 = vrot.slane %v1723, 2
      %v1827 = vsel %vm695, %v1824, %v1826
      %v1828 = vrot.slane %v1724, 2
      %v1829 = vrot.slane %v1725, 2
      %v1830 = vsel %vm695, %v1828, %v1829
      %v1831 = vrot.slane %v1726, 2
      %v1832 = vsel %vm695, %v1829, %v1831
      %v1833 = vrot.slane %v1727, 2
      %v1834 = vrot.slane %v1728, 2
      %v1835 = vsel %vm695, %v1833, %v1834
      %v1836 = vrot.slane %v1729, 2
      %v1837 = vsel %vm695, %v1834, %v1836
      %v1838 = vrot.slane %v1730, 2
      %v1839 = vrot.slane %v1731, 2
      %v1840 = vsel %vm695, %v1838, %v1839
      %v1841 = vrot.slane %v1732, 2
      %v1842 = vsel %vm695, %v1839, %v1841
      %v1843 = vrot.slane %v1733, 2
      %v1844 = vrot.slane %v1734, 2
      %v1845 = vsel %vm695, %v1843, %v1844
      %v1846 = vrot.slane %v1735, 2
      %v1847 = vsel %vm695, %v1844, %v1846
      %v1848 = vrot.slane %v1736, 2
      %v1849 = vrot.slane %v1737, 2
      %v1850 = vsel %vm695, %v1848, %v1849
      %v1851 = vrot.slane %v1738, 2
      %v1852 = vsel %vm695, %v1849, %v1851
      %v1853 = vrot.slane %v1739, 2
      %v1854 = vrot.slane %v1740, 2
      %v1855 = vsel %vm695, %v1853, %v1854
      %v1856 = vrot.slane %v1741, 2
      %v1857 = vsel %vm695, %v1854, %v1856
      %v1858 = vrot.slane %v1742, 2
      %v1859 = vrot.slane %v1743, 2
      %v1860 = vsel %vm695, %v1858, %v1859
      %v1861 = vrot.slane %v1744, 2
      %v1862 = vsel %vm695, %v1859, %v1861
      %v1863 = vrot.slane %v1745, 2
      %v1864 = vrot.slane %v1746, 2
      %v1865 = vsel %vm695, %v1863, %v1864
      %v1866 = vrot.slane %v1747, 2
      %v1867 = vsel %vm695, %v1864, %v1866
      %v1868 = vrot.slane %v1748, 2
      %v1869 = vrot.slane %v1749, 2
      %v1870 = vsel %vm695, %v1868, %v1869
      %v1871 = vrot.slane %v1750, 2
      %v1872 = vsel %vm695, %v1869, %v1871
      %v1873 = vrot.slane %v1751, 2
      %v1874 = vrot.slane %v1752, 2
      %v1875 = vsel %vm695, %v1873, %v1874
      %v1876 = vrot.slane %v1753, 2
      %v1877 = vsel %vm695, %v1874, %v1876
      %v1878 = vrot.slane %v1754, 2
      %v1879 = vrot.slane %v1755, 2
      %v1880 = vsel %vm695, %v1878, %v1879
      %v1881 = vrot.slane %v1756, 2
      %v1882 = vsel %vm695, %v1879, %v1881
      %v1883 = vrot.slane %v1757, 2
      %v1884 = vrot.slane %v1758, 2
      %v1885 = vsel %vm695, %v1883, %v1884
      %v1886 = vrot.slane %v1759, 2
      %v1887 = vsel %vm695, %v1884, %v1886
      %v1920 = vadd.f32 %v1676, %v1810
      %v1921 = vadd.f32 %v1677, %v1812
      %v1922 = vadd.f32 %v1678, %v1815
      %v1923 = vadd.f32 %v1679, %v1817
      %v1924 = vadd.f32 %v1680, %v1820
      %v1925 = vadd.f32 %v1681, %v1822
      %v1926 = vadd.f32 %v1682, %v1825
      %v1927 = vadd.f32 %v1683, %v1827
      %v1928 = vadd.f32 %v1684, %v1830
      %v1929 = vadd.f32 %v1685, %v1832
      %v1930 = vadd.f32 %v1686, %v1835
      %v1931 = vadd.f32 %v1687, %v1837
      %v1932 = vadd.f32 %v1688, %v1840
      %v1933 = vadd.f32 %v1689, %v1842
      %v1934 = vadd.f32 %v1690, %v1845
      %v1935 = vadd.f32 %v1691, %v1847
      %v1936 = vadd.f32 %v1692, %v1850
      %v1937 = vadd.f32 %v1693, %v1852
      %v1938 = vadd.f32 %v1694, %v1855
      %v1939 = vadd.f32 %v1695, %v1857
      %v1940 = vadd.f32 %v1696, %v1860
      %v1941 = vadd.f32 %v1697, %v1862
      %v1942 = vadd.f32 %v1698, %v1865
      %v1943 = vadd.f32 %v1699, %v1867
      %v1944 = vadd.f32 %v1700, %v1870
      %v1945 = vadd.f32 %v1701, %v1872
      %v1946 = vadd.f32 %v1702, %v1875
      %v1947 = vadd.f32 %v1703, %v1877
      %v1948 = vadd.f32 %v1704, %v1880
      %v1949 = vadd.f32 %v1705, %v1882
      %v1950 = vadd.f32 %v1706, %v1885
      %v1951 = vadd.f32 %v1707, %v1887
      %v1952 = vld [vmem:[%s2] sm:$0x1]
      %v1954 = vlaneseq
      %v1955 = vshrl.u32 %v1954, 7
      %v1956 = vsub.s32 0, %v1955
      %v1957 = vrot.slane %v1952, %v1956
      %v1959 = vadd.f32 %v1920, %v1957
      %v1960 = vadd.f32 %v1921, %v1957
      %v1961 = vadd.f32 %v1922, %v1957
      %v1962 = vadd.f32 %v1923, %v1957
      %v1963 = vadd.f32 %v1924, %v1957
      %v1964 = vadd.f32 %v1925, %v1957
      %v1965 = vadd.f32 %v1926, %v1957
      %v1966 = vadd.f32 %v1927, %v1957
      %v1967 = vadd.f32 %v1928, %v1957
      %v1968 = vadd.f32 %v1929, %v1957
      %v1969 = vadd.f32 %v1930, %v1957
      %v1970 = vadd.f32 %v1931, %v1957
      %v1971 = vadd.f32 %v1932, %v1957
      %v1972 = vadd.f32 %v1933, %v1957
      %v1973 = vadd.f32 %v1934, %v1957
      %v1974 = vadd.f32 %v1935, %v1957
      %v1975 = vadd.f32 %v1936, %v1957
      %v1976 = vadd.f32 %v1937, %v1957
      %v1977 = vadd.f32 %v1938, %v1957
      %v1978 = vadd.f32 %v1939, %v1957
      %v1979 = vadd.f32 %v1940, %v1957
      %v1980 = vadd.f32 %v1941, %v1957
      %v1981 = vadd.f32 %v1942, %v1957
      %v1982 = vadd.f32 %v1943, %v1957
      %v1983 = vadd.f32 %v1944, %v1957
      %v1984 = vadd.f32 %v1945, %v1957
      %v1985 = vadd.f32 %v1946, %v1957
      %v1986 = vadd.f32 %v1947, %v1957
      %v1987 = vadd.f32 %v1948, %v1957
      %v1988 = vadd.f32 %v1949, %v1957
      %v1989 = vadd.f32 %v1950, %v1957
      %v1990 = vadd.f32 %v1951, %v1957
      %vm1991 = vcmask 31744
      %1992 = vst.msk [vmem:[#allocation2] sm:$0xff] %vm1991, 0.0
      %1993 = vst.msk [vmem:[#allocation2 + $0x8] sm:$0xff] %vm1991, 0.0
      %vm1994 = vcmask 25600
      %1995 = vst.msk [vmem:[#allocation2 + $0x10] sm:$0x3] %vm1994, 0.0
      %s1996 = scalar_lea.vmem [#allocation2], 408
      %1997 = vst.msk [vmem:[%s1996] sm:$0xff] %vm1991, 0.0
      %1998 = vst.msk [vmem:[%s1996 + $0x8] sm:$0xff] %vm1991, 0.0
      %1999 = vst.msk [vmem:[%s1996 + $0x10] sm:$0x3] %vm1994, 0.0
      %s2000 = scalar_lea.vmem [#allocation2], 24
      %vm2001 = vcmask 24576
      %2002 = vst.msk [vmem:[%s2000] sm:$0x1] %vm2001, 0.0
      %2003 = vst.msk [vmem:[%s2000 + $0x18] sm:$0x1] %vm2001, 0.0
      %2004 = vst.msk [vmem:[%s2000 + $0x30] sm:$0x1] %vm2001, 0.0
      %2005 = vst.msk [vmem:[%s2000 + $0x48] sm:$0x1] %vm2001, 0.0
      %2006 = vst.msk [vmem:[%s2000 + $0x60] sm:$0x1] %vm2001, 0.0
      %2007 = vst.msk [vmem:[%s2000 + $0x78] sm:$0x1] %vm2001, 0.0
      %2008 = vst.msk [vmem:[%s2000 + $0x90] sm:$0x1] %vm2001, 0.0
      %2009 = vst.msk [vmem:[%s2000 + $0xa8] sm:$0x1] %vm2001, 0.0
      %2010 = vst.msk [vmem:[%s2000 + $0xc0] sm:$0x1] %vm2001, 0.0
      %2011 = vst.msk [vmem:[%s2000 + $0xd8] sm:$0x1] %vm2001, 0.0
      %2012 = vst.msk [vmem:[%s2000 + $0xf0] sm:$0x1] %vm2001, 0.0
      %2013 = vst.msk [vmem:[%s2000 + $0x108] sm:$0x1] %vm2001, 0.0
      %2014 = vst.msk [vmem:[%s2000 + $0x120] sm:$0x1] %vm2001, 0.0
      %2015 = vst.msk [vmem:[%s2000 + $0x138] sm:$0x1] %vm2001, 0.0
      %2016 = vst.msk [vmem:[%s2000 + $0x150] sm:$0x1] %vm2001, 0.0
      %2017 = vst.msk [vmem:[%s2000 + $0x168] sm:$0x1] %vm2001, 0.0
      %2018 = vst.msk [vmem:[%s2000 + $0x11] sm:$0x1] %vm2001, 0.0
      %2019 = vst.msk [vmem:[%s2000 + $0x29] sm:$0x1] %vm2001, 0.0
      %2020 = vst.msk [vmem:[%s2000 + $0x41] sm:$0x1] %vm2001, 0.0
      %2021 = vst.msk [vmem:[%s2000 + $0x59] sm:$0x1] %vm2001, 0.0
      %2022 = vst.msk [vmem:[%s2000 + $0x71] sm:$0x1] %vm2001, 0.0
      %2023 = vst.msk [vmem:[%s2000 + $0x89] sm:$0x1] %vm2001, 0.0
      %2024 = vst.msk [vmem:[%s2000 + $0xa1] sm:$0x1] %vm2001, 0.0
      %2025 = vst.msk [vmem:[%s2000 + $0xb9] sm:$0x1] %vm2001, 0.0
      %2026 = vst.msk [vmem:[%s2000 + $0xd1] sm:$0x1] %vm2001, 0.0
      %2027 = vst.msk [vmem:[%s2000 + $0xe9] sm:$0x1] %vm2001, 0.0
      %2028 = vst.msk [vmem:[%s2000 + $0x101] sm:$0x1] %vm2001, 0.0
      %2029 = vst.msk [vmem:[%s2000 + $0x119] sm:$0x1] %vm2001, 0.0
      %2030 = vst.msk [vmem:[%s2000 + $0x131] sm:$0x1] %vm2001, 0.0
      %2031 = vst.msk [vmem:[%s2000 + $0x149] sm:$0x1] %vm2001, 0.0
      %2032 = vst.msk [vmem:[%s2000 + $0x161] sm:$0x1] %vm2001, 0.0
      %2033 = vst.msk [vmem:[%s2000 + $0x179] sm:$0x1] %vm2001, 0.0
      %2034 = vst.msk [vmem:[%s2000 + $0x1] sm:$0xff] %vm1991, %v1959
      %2035 = vst.msk [vmem:[%s2000 + $0x9] sm:$0xff] %vm1991, %v1960
      %2036 = vst.msk [vmem:[%s2000 + $0x19] sm:$0xff] %vm1991, %v1961
      %2037 = vst.msk [vmem:[%s2000 + $0x21] sm:$0xff] %vm1991, %v1962
      %2038 = vst.msk [vmem:[%s2000 + $0x31] sm:$0xff] %vm1991, %v1963
      %2039 = vst.msk [vmem:[%s2000 + $0x39] sm:$0xff] %vm1991, %v1964
      %2040 = vst.msk [vmem:[%s2000 + $0x49] sm:$0xff] %vm1991, %v1965
      %2041 = vst.msk [vmem:[%s2000 + $0x51] sm:$0xff] %vm1991, %v1966
      %2042 = vst.msk [vmem:[%s2000 + $0x61] sm:$0xff] %vm1991, %v1967
      %2043 = vst.msk [vmem:[%s2000 + $0x69] sm:$0xff] %vm1991, %v1968
      %2044 = vst.msk [vmem:[%s2000 + $0x79] sm:$0xff] %vm1991, %v1969
      %2045 = vst.msk [vmem:[%s2000 + $0x81] sm:$0xff] %vm1991, %v1970
      %2046 = vst.msk [vmem:[%s2000 + $0x91] sm:$0xff] %vm1991, %v1971
      %2047 = vst.msk [vmem:[%s2000 + $0x99] sm:$0xff] %vm1991, %v1972
      %2048 = vst.msk [vmem:[%s2000 + $0xa9] sm:$0xff] %vm1991, %v1973
      %2049 = vst.msk [vmem:[%s2000 + $0xb1] sm:$0xff] %vm1991, %v1974
      %2050 = vst.msk [vmem:[%s2000 + $0xc1] sm:$0xff] %vm1991, %v1975
      %2051 = vst.msk [vmem:[%s2000 + $0xc9] sm:$0xff] %vm1991, %v1976
      %2052 = vst.msk [vmem:[%s2000 + $0xd9] sm:$0xff] %vm1991, %v1977
      %2053 = vst.msk [vmem:[%s2000 + $0xe1] sm:$0xff] %vm1991, %v1978
      %2054 = vst.msk [vmem:[%s2000 + $0xf1] sm:$0xff] %vm1991, %v1979
      %2055 = vst.msk [vmem:[%s2000 + $0xf9] sm:$0xff] %vm1991, %v1980
      %2056 = vst.msk [vmem:[%s2000 + $0x109] sm:$0xff] %vm1991, %v1981
      %2057 = vst.msk [vmem:[%s2000 + $0x111] sm:$0xff] %vm1991, %v1982
      %2058 = vst.msk [vmem:[%s2000 + $0x121] sm:$0xff] %vm1991, %v1983
      %2059 = vst.msk [vmem:[%s2000 + $0x129] sm:$0xff] %vm1991, %v1984
      %2060 = vst.msk [vmem:[%s2000 + $0x139] sm:$0xff] %vm1991, %v1985
      %2061 = vst.msk [vmem:[%s2000 + $0x141] sm:$0xff] %vm1991, %v1986
      %2062 = vst.msk [vmem:[%s2000 + $0x151] sm:$0xff] %vm1991, %v1987
      %2063 = vst.msk [vmem:[%s2000 + $0x159] sm:$0xff] %vm1991, %v1988
      %2064 = vst.msk [vmem:[%s2000 + $0x169] sm:$0xff] %vm1991, %v1989
      %2065 = vst.msk [vmem:[%s2000 + $0x171] sm:$0xff] %vm1991, %v1990
      %v2066 = vld [vmem:[#allocation2] sm:$0xff]
      %v2067 = vld [vmem:[#allocation2 + $0x8] sm:$0xff]
      %v2068 = vld [vmem:[#allocation2 + $0x10] sm:$0x3]
      %v2069 = vld [vmem:[#allocation2 + $0x18] sm:$0xff]
      %v2070 = vld [vmem:[#allocation2 + $0x20] sm:$0xff]
      %v2071 = vld [vmem:[#allocation2 + $0x28] sm:$0x3]
      %v2072 = vld [vmem:[#allocation2 + $0x30] sm:$0xff]
      %v2073 = vld [vmem:[#allocation2 + $0x38] sm:$0xff]
      %v2074 = vld [vmem:[#allocation2 + $0x40] sm:$0x3]
      %v2075 = vld [vmem:[#allocation2 + $0x48] sm:$0xff]
      %v2076 = vld [vmem:[#allocation2 + $0x50] sm:$0xff]
      %v2077 = vld [vmem:[#allocation2 + $0x58] sm:$0x3]
      %v2078 = vld [vmem:[#allocation2 + $0x60] sm:$0xff]
      %v2079 = vld [vmem:[#allocation2 + $0x68] sm:$0xff]
      %v2080 = vld [vmem:[#allocation2 + $0x70] sm:$0x3]
      %v2081 = vld [vmem:[#allocation2 + $0x78] sm:$0xff]
      %v2082 = vld [vmem:[#allocation2 + $0x80] sm:$0xff]
      %v2083 = vld [vmem:[#allocation2 + $0x88] sm:$0x3]
      %v2084 = vld [vmem:[#allocation2 + $0x90] sm:$0xff]
      %v2085 = vld [vmem:[#allocation2 + $0x98] sm:$0xff]
      %v2086 = vld [vmem:[#allocation2 + $0xa0] sm:$0x3]
      %v2087 = vld [vmem:[#allocation2 + $0xa8] sm:$0xff]
      %v2088 = vld [vmem:[#allocation2 + $0xb0] sm:$0xff]
      %v2089 = vld [vmem:[#allocation2 + $0xb8] sm:$0x3]
      %v2090 = vld [vmem:[#allocation2 + $0xc0] sm:$0xff]
      %v2091 = vld [vmem:[#allocation2 + $0xc8] sm:$0xff]
      %v2092 = vld [vmem:[#allocation2 + $0xd0] sm:$0x3]
      %v2093 = vld [vmem:[#allocation2 + $0xd8] sm:$0xff]
      %v2094 = vld [vmem:[#allocation2 + $0xe0] sm:$0xff]
      %v2095 = vld [vmem:[#allocation2 + $0xe8] sm:$0x3]
      %v2096 = vld [vmem:[#allocation2 + $0xf0] sm:$0xff]
      %v2097 = vld [vmem:[#allocation2 + $0xf8] sm:$0xff]
      %v2098 = vld [vmem:[#allocation2 + $0x100] sm:$0x3]
      %v2099 = vld [vmem:[#allocation2 + $0x108] sm:$0xff]
      %v2100 = vld [vmem:[#allocation2 + $0x110] sm:$0xff]
      %v2101 = vld [vmem:[#allocation2 + $0x118] sm:$0x3]
      %v2102 = vld [vmem:[#allocation2 + $0x120] sm:$0xff]
      %v2103 = vld [vmem:[#allocation2 + $0x128] sm:$0xff]
      %v2104 = vld [vmem:[#allocation2 + $0x130] sm:$0x3]
      %v2105 = vld [vmem:[#allocation2 + $0x138] sm:$0xff]
      %v2106 = vld [vmem:[#allocation2 + $0x140] sm:$0xff]
      %v2107 = vld [vmem:[#allocation2 + $0x148] sm:$0x3]
      %v2108 = vld [vmem:[#allocation2 + $0x150] sm:$0xff]
      %v2109 = vld [vmem:[#allocation2 + $0x158] sm:$0xff]
      %v2110 = vld [vmem:[#allocation2 + $0x160] sm:$0x3]
      %v2111 = vld [vmem:[#allocation2 + $0x168] sm:$0xff]
      %v2112 = vld [vmem:[#allocation2 + $0x170] sm:$0xff]
      %v2113 = vld [vmem:[#allocation2 + $0x178] sm:$0x3]
      %v2114 = vld [vmem:[#allocation2 + $0x180] sm:$0xff]
      %v2115 = vld [vmem:[#allocation2 + $0x188] sm:$0xff]
      %v2116 = vld [vmem:[#allocation2 + $0x190] sm:$0x3]
      %v2117 = vld [vmem:[#allocation2 + $0x198] sm:$0xff]
      %v2118 = vld [vmem:[#allocation2 + $0x1a0] sm:$0xff]
      %v2119 = vld [vmem:[#allocation2 + $0x1a8] sm:$0x3]
      %v2168 = vrot.slane %v2066, 1
      %v2169 = vrot.slane %v2067, 1
      %v2170 = vsel %vm450, %v2168, %v2169
      %v2171 = vrot.slane %v2068, 1
      %v2172 = vsel %vm450, %v2169, %v2171
      %v2173 = vrot.slane %v2069, 1
      %v2174 = vrot.slane %v2070, 1
      %v2175 = vsel %vm450, %v2173, %v2174
      %v2176 = vrot.slane %v2071, 1
      %v2177 = vsel %vm450, %v2174, %v2176
      %v2178 = vrot.slane %v2072, 1
      %v2179 = vrot.slane %v2073, 1
      %v2180 = vsel %vm450, %v2178, %v2179
      %v2181 = vrot.slane %v2074, 1
      %v2182 = vsel %vm450, %v2179, %v2181
      %v2183 = vrot.slane %v2075, 1
      %v2184 = vrot.slane %v2076, 1
      %v2185 = vsel %vm450, %v2183, %v2184
      %v2186 = vrot.slane %v2077, 1
      %v2187 = vsel %vm450, %v2184, %v2186
      %v2188 = vrot.slane %v2078, 1
      %v2189 = vrot.slane %v2079, 1
      %v2190 = vsel %vm450, %v2188, %v2189
      %v2191 = vrot.slane %v2080, 1
      %v2192 = vsel %vm450, %v2189, %v2191
      %v2193 = vrot.slane %v2081, 1
      %v2194 = vrot.slane %v2082, 1
      %v2195 = vsel %vm450, %v2193, %v2194
      %v2196 = vrot.slane %v2083, 1
      %v2197 = vsel %vm450, %v2194, %v2196
      %v2198 = vrot.slane %v2084, 1
      %v2199 = vrot.slane %v2085, 1
      %v2200 = vsel %vm450, %v2198, %v2199
      %v2201 = vrot.slane %v2086, 1
      %v2202 = vsel %vm450, %v2199, %v2201
      %v2203 = vrot.slane %v2087, 1
      %v2204 = vrot.slane %v2088, 1
      %v2205 = vsel %vm450, %v2203, %v2204
      %v2206 = vrot.slane %v2089, 1
      %v2207 = vsel %vm450, %v2204, %v2206
      %v2208 = vrot.slane %v2090, 1
      %v2209 = vrot.slane %v2091, 1
      %v2210 = vsel %vm450, %v2208, %v2209
      %v2211 = vrot.slane %v2092, 1
      %v2212 = vsel %vm450, %v2209, %v2211
      %v2213 = vrot.slane %v2093, 1
      %v2214 = vrot.slane %v2094, 1
      %v2215 = vsel %vm450, %v2213, %v2214
      %v2216 = vrot.slane %v2095, 1
      %v2217 = vsel %vm450, %v2214, %v2216
      %v2218 = vrot.slane %v2096, 1
      %v2219 = vrot.slane %v2097, 1
      %v2220 = vsel %vm450, %v2218, %v2219
      %v2221 = vrot.slane %v2098, 1
      %v2222 = vsel %vm450, %v2219, %v2221
      %v2223 = vrot.slane %v2099, 1
      %v2224 = vrot.slane %v2100, 1
      %v2225 = vsel %vm450, %v2223, %v2224
      %v2226 = vrot.slane %v2101, 1
      %v2227 = vsel %vm450, %v2224, %v2226
      %v2228 = vrot.slane %v2102, 1
      %v2229 = vrot.slane %v2103, 1
      %v2230 = vsel %vm450, %v2228, %v2229
      %v2231 = vrot.slane %v2104, 1
      %v2232 = vsel %vm450, %v2229, %v2231
      %v2233 = vrot.slane %v2105, 1
      %v2234 = vrot.slane %v2106, 1
      %v2235 = vsel %vm450, %v2233, %v2234
      %v2236 = vrot.slane %v2107, 1
      %v2237 = vsel %vm450, %v2234, %v2236
      %v2238 = vrot.slane %v2108, 1
      %v2239 = vrot.slane %v2109, 1
      %v2240 = vsel %vm450, %v2238, %v2239
      %v2241 = vrot.slane %v2110, 1
      %v2242 = vsel %vm450, %v2239, %v2241
      %v2243 = vrot.slane %v2111, 1
      %v2244 = vrot.slane %v2112, 1
      %v2245 = vsel %vm450, %v2243, %v2244
      %v2246 = vrot.slane %v2113, 1
      %v2247 = vsel %vm450, %v2244, %v2246
      %2248 = vrot.lane.b32.xlu0 %v2170, 4
      %v2249 = vpop.permute.xlu0 %2248
      %2250 = vrot.lane.b32.xlu0 %v2172, 4
      %v2251 = vpop.permute.xlu0 %2250
      %2252 = vrot.lane.b32.xlu0 %v2175, 4
      %v2253 = vpop.permute.xlu0 %2252
      %2254 = vrot.lane.b32.xlu0 %v2177, 4
      %v2255 = vpop.permute.xlu0 %2254
      %2256 = vrot.lane.b32.xlu0 %v2180, 4
      %v2257 = vpop.permute.xlu0 %2256
      %2258 = vrot.lane.b32.xlu0 %v2182, 4
      %v2259 = vpop.permute.xlu0 %2258
      %2260 = vrot.lane.b32.xlu0 %v2185, 4
      %v2261 = vpop.permute.xlu0 %2260
      %2262 = vrot.lane.b32.xlu0 %v2187, 4
      %v2263 = vpop.permute.xlu0 %2262
      %2264 = vrot.lane.b32.xlu0 %v2190, 4
      %v2265 = vpop.permute.xlu0 %2264
      %2266 = vrot.lane.b32.xlu0 %v2192, 4
      %v2267 = vpop.permute.xlu0 %2266
      %2268 = vrot.lane.b32.xlu0 %v2195, 4
      %v2269 = vpop.permute.xlu0 %2268
      %2270 = vrot.lane.b32.xlu0 %v2197, 4
      %v2271 = vpop.permute.xlu0 %2270
      %2272 = vrot.lane.b32.xlu0 %v2200, 4
      %v2273 = vpop.permute.xlu0 %2272
      %2274 = vrot.lane.b32.xlu0 %v2202, 4
      %v2275 = vpop.permute.xlu0 %2274
      %2276 = vrot.lane.b32.xlu0 %v2205, 4
      %v2277 = vpop.permute.xlu0 %2276
      %2278 = vrot.lane.b32.xlu0 %v2207, 4
      %v2279 = vpop.permute.xlu0 %2278
      %2280 = vrot.lane.b32.xlu0 %v2210, 4
      %v2281 = vpop.permute.xlu0 %2280
      %2282 = vrot.lane.b32.xlu0 %v2212, 4
      %v2283 = vpop.permute.xlu0 %2282
      %2284 = vrot.lane.b32.xlu0 %v2215, 4
      %v2285 = vpop.permute.xlu0 %2284
      %2286 = vrot.lane.b32.xlu0 %v2217, 4
      %v2287 = vpop.permute.xlu0 %2286
      %2288 = vrot.lane.b32.xlu0 %v2220, 4
      %v2289 = vpop.permute.xlu0 %2288
      %2290 = vrot.lane.b32.xlu0 %v2222, 4
      %v2291 = vpop.permute.xlu0 %2290
      %2292 = vrot.lane.b32.xlu0 %v2225, 4
      %v2293 = vpop.permute.xlu0 %2292
      %2294 = vrot.lane.b32.xlu0 %v2227, 4
      %v2295 = vpop.permute.xlu0 %2294
      %2296 = vrot.lane.b32.xlu0 %v2230, 4
      %v2297 = vpop.permute.xlu0 %2296
      %2298 = vrot.lane.b32.xlu0 %v2232, 4
      %v2299 = vpop.permute.xlu0 %2298
      %2300 = vrot.lane.b32.xlu0 %v2235, 4
      %v2301 = vpop.permute.xlu0 %2300
      %2302 = vrot.lane.b32.xlu0 %v2237, 4
      %v2303 = vpop.permute.xlu0 %2302
      %2304 = vrot.lane.b32.xlu0 %v2240, 4
      %v2305 = vpop.permute.xlu0 %2304
      %2306 = vrot.lane.b32.xlu0 %v2242, 4
      %v2307 = vpop.permute.xlu0 %2306
      %2308 = vrot.lane.b32.xlu0 %v2245, 4
      %v2309 = vpop.permute.xlu0 %2308
      %2310 = vrot.lane.b32.xlu0 %v2247, 4
      %v2311 = vpop.permute.xlu0 %2310
      %v2344 = vrot.slane %v2066, 2
      %v2345 = vrot.slane %v2067, 2
      %v2346 = vsel %vm695, %v2344, %v2345
      %v2347 = vrot.slane %v2068, 2
      %v2348 = vsel %vm695, %v2345, %v2347
      %v2349 = vrot.slane %v2069, 2
      %v2350 = vrot.slane %v2070, 2
      %v2351 = vsel %vm695, %v2349, %v2350
      %v2352 = vrot.slane %v2071, 2
      %v2353 = vsel %vm695, %v2350, %v2352
      %v2354 = vrot.slane %v2072, 2
      %v2355 = vrot.slane %v2073, 2
      %v2356 = vsel %vm695, %v2354, %v2355
      %v2357 = vrot.slane %v2074, 2
      %v2358 = vsel %vm695, %v2355, %v2357
      %v2359 = vrot.slane %v2075, 2
      %v2360 = vrot.slane %v2076, 2
      %v2361 = vsel %vm695, %v2359, %v2360
      %v2362 = vrot.slane %v2077, 2
      %v2363 = vsel %vm695, %v2360, %v2362
      %v2364 = vrot.slane %v2078, 2
      %v2365 = vrot.slane %v2079, 2
      %v2366 = vsel %vm695, %v2364, %v2365
      %v2367 = vrot.slane %v2080, 2
      %v2368 = vsel %vm695, %v2365, %v2367
      %v2369 = vrot.slane %v2081, 2
      %v2370 = vrot.slane %v2082, 2
      %v2371 = vsel %vm695, %v2369, %v2370
      %v2372 = vrot.slane %v2083, 2
      %v2373 = vsel %vm695, %v2370, %v2372
      %v2374 = vrot.slane %v2084, 2
      %v2375 = vrot.slane %v2085, 2
      %v2376 = vsel %vm695, %v2374, %v2375
      %v2377 = vrot.slane %v2086, 2
      %v2378 = vsel %vm695, %v2375, %v2377
      %v2379 = vrot.slane %v2087, 2
      %v2380 = vrot.slane %v2088, 2
      %v2381 = vsel %vm695, %v2379, %v2380
      %v2382 = vrot.slane %v2089, 2
      %v2383 = vsel %vm695, %v2380, %v2382
      %v2384 = vrot.slane %v2090, 2
      %v2385 = vrot.slane %v2091, 2
      %v2386 = vsel %vm695, %v2384, %v2385
      %v2387 = vrot.slane %v2092, 2
      %v2388 = vsel %vm695, %v2385, %v2387
      %v2389 = vrot.slane %v2093, 2
      %v2390 = vrot.slane %v2094, 2
      %v2391 = vsel %vm695, %v2389, %v2390
      %v2392 = vrot.slane %v2095, 2
      %v2393 = vsel %vm695, %v2390, %v2392
      %v2394 = vrot.slane %v2096, 2
      %v2395 = vrot.slane %v2097, 2
      %v2396 = vsel %vm695, %v2394, %v2395
      %v2397 = vrot.slane %v2098, 2
      %v2398 = vsel %vm695, %v2395, %v2397
      %v2399 = vrot.slane %v2099, 2
      %v2400 = vrot.slane %v2100, 2
      %v2401 = vsel %vm695, %v2399, %v2400
      %v2402 = vrot.slane %v2101, 2
      %v2403 = vsel %vm695, %v2400, %v2402
      %v2404 = vrot.slane %v2102, 2
      %v2405 = vrot.slane %v2103, 2
      %v2406 = vsel %vm695, %v2404, %v2405
      %v2407 = vrot.slane %v2104, 2
      %v2408 = vsel %vm695, %v2405, %v2407
      %v2409 = vrot.slane %v2105, 2
      %v2410 = vrot.slane %v2106, 2
      %v2411 = vsel %vm695, %v2409, %v2410
      %v2412 = vrot.slane %v2107, 2
      %v2413 = vsel %vm695, %v2410, %v2412
      %v2414 = vrot.slane %v2108, 2
      %v2415 = vrot.slane %v2109, 2
      %v2416 = vsel %vm695, %v2414, %v2415
      %v2417 = vrot.slane %v2110, 2
      %v2418 = vsel %vm695, %v2415, %v2417
      %v2419 = vrot.slane %v2111, 2
      %v2420 = vrot.slane %v2112, 2
      %v2421 = vsel %vm695, %v2419, %v2420
      %v2422 = vrot.slane %v2113, 2
      %v2423 = vsel %vm695, %v2420, %v2422
      %2424 = vrot.lane.b32.xlu0 %v2346, 8
      %v2425 = vpop.permute.xlu0 %2424
      %2426 = vrot.lane.b32.xlu0 %v2348, 8
      %v2427 = vpop.permute.xlu0 %2426
      %2428 = vrot.lane.b32.xlu0 %v2351, 8
      %v2429 = vpop.permute.xlu0 %2428
      %2430 = vrot.lane.b32.xlu0 %v2353, 8
      %v2431 = vpop.permute.xlu0 %2430
      %2432 = vrot.lane.b32.xlu0 %v2356, 8
      %v2433 = vpop.permute.xlu0 %2432
      %2434 = vrot.lane.b32.xlu0 %v2358, 8
      %v2435 = vpop.permute.xlu0 %2434
      %2436 = vrot.lane.b32.xlu0 %v2361, 8
      %v2437 = vpop.permute.xlu0 %2436
      %2438 = vrot.lane.b32.xlu0 %v2363, 8
      %v2439 = vpop.permute.xlu0 %2438
      %2440 = vrot.lane.b32.xlu0 %v2366, 8
      %v2441 = vpop.permute.xlu0 %2440
      %2442 = vrot.lane.b32.xlu0 %v2368, 8
      %v2443 = vpop.permute.xlu0 %2442
      %2444 = vrot.lane.b32.xlu0 %v2371, 8
      %v2445 = vpop.permute.xlu0 %2444
      %2446 = vrot.lane.b32.xlu0 %v2373, 8
      %v2447 = vpop.permute.xlu0 %2446
      %2448 = vrot.lane.b32.xlu0 %v2376, 8
      %v2449 = vpop.permute.xlu0 %2448
      %2450 = vrot.lane.b32.xlu0 %v2378, 8
      %v2451 = vpop.permute.xlu0 %2450
      %2452 = vrot.lane.b32.xlu0 %v2381, 8
      %v2453 = vpop.permute.xlu0 %2452
      %2454 = vrot.lane.b32.xlu0 %v2383, 8
      %v2455 = vpop.permute.xlu0 %2454
      %2456 = vrot.lane.b32.xlu0 %v2386, 8
      %v2457 = vpop.permute.xlu0 %2456
      %2458 = vrot.lane.b32.xlu0 %v2388, 8
      %v2459 = vpop.permute.xlu0 %2458
      %2460 = vrot.lane.b32.xlu0 %v2391, 8
      %v2461 = vpop.permute.xlu0 %2460
      %2462 = vrot.lane.b32.xlu0 %v2393, 8
      %v2463 = vpop.permute.xlu0 %2462
      %2464 = vrot.lane.b32.xlu0 %v2396, 8
      %v2465 = vpop.permute.xlu0 %2464
      %2466 = vrot.lane.b32.xlu0 %v2398, 8
      %v2467 = vpop.permute.xlu0 %2466
      %2468 = vrot.lane.b32.xlu0 %v2401, 8
      %v2469 = vpop.permute.xlu0 %2468
      %2470 = vrot.lane.b32.xlu0 %v2403, 8
      %v2471 = vpop.permute.xlu0 %2470
      %2472 = vrot.lane.b32.xlu0 %v2406, 8
      %v2473 = vpop.permute.xlu0 %2472
      %2474 = vrot.lane.b32.xlu0 %v2408, 8
      %v2475 = vpop.permute.xlu0 %2474
      %2476 = vrot.lane.b32.xlu0 %v2411, 8
      %v2477 = vpop.permute.xlu0 %2476
      %2478 = vrot.lane.b32.xlu0 %v2413, 8
      %v2479 = vpop.permute.xlu0 %2478
      %2480 = vrot.lane.b32.xlu0 %v2416, 8
      %v2481 = vpop.permute.xlu0 %2480
      %2482 = vrot.lane.b32.xlu0 %v2418, 8
      %v2483 = vpop.permute.xlu0 %2482
      %2484 = vrot.lane.b32.xlu0 %v2421, 8
      %v2485 = vpop.permute.xlu0 %2484
      %2486 = vrot.lane.b32.xlu0 %v2423, 8
      %v2487 = vpop.permute.xlu0 %2486
      %2522 = vrot.lane.b32.xlu0 %v2069, 12
      %v2523 = vpop.permute.xlu0 %2522
      %2524 = vrot.lane.b32.xlu0 %v2070, 12
      %v2525 = vpop.permute.xlu0 %2524
      %2526 = vrot.lane.b32.xlu0 %v2072, 12
      %v2527 = vpop.permute.xlu0 %2526
      %2528 = vrot.lane.b32.xlu0 %v2073, 12
      %v2529 = vpop.permute.xlu0 %2528
      %2530 = vrot.lane.b32.xlu0 %v2075, 12
      %v2531 = vpop.permute.xlu0 %2530
      %2532 = vrot.lane.b32.xlu0 %v2076, 12
      %v2533 = vpop.permute.xlu0 %2532
      %2534 = vrot.lane.b32.xlu0 %v2078, 12
      %v2535 = vpop.permute.xlu0 %2534
      %2536 = vrot.lane.b32.xlu0 %v2079, 12
      %v2537 = vpop.permute.xlu0 %2536
      %2538 = vrot.lane.b32.xlu0 %v2081, 12
      %v2539 = vpop.permute.xlu0 %2538
      %2540 = vrot.lane.b32.xlu0 %v2082, 12
      %v2541 = vpop.permute.xlu0 %2540
      %2542 = vrot.lane.b32.xlu0 %v2084, 12
      %v2543 = vpop.permute.xlu0 %2542
      %2544 = vrot.lane.b32.xlu0 %v2085, 12
      %v2545 = vpop.permute.xlu0 %2544
      %2546 = vrot.lane.b32.xlu0 %v2087, 12
      %v2547 = vpop.permute.xlu0 %2546
      %2548 = vrot.lane.b32.xlu0 %v2088, 12
      %v2549 = vpop.permute.xlu0 %2548
      %2550 = vrot.lane.b32.xlu0 %v2090, 12
      %v2551 = vpop.permute.xlu0 %2550
      %2552 = vrot.lane.b32.xlu0 %v2091, 12
      %v2553 = vpop.permute.xlu0 %2552
      %2554 = vrot.lane.b32.xlu0 %v2093, 12
      %v2555 = vpop.permute.xlu0 %2554
      %2556 = vrot.lane.b32.xlu0 %v2094, 12
      %v2557 = vpop.permute.xlu0 %2556
      %2558 = vrot.lane.b32.xlu0 %v2096, 12
      %v2559 = vpop.permute.xlu0 %2558
      %2560 = vrot.lane.b32.xlu0 %v2097, 12
      %v2561 = vpop.permute.xlu0 %2560
      %2562 = vrot.lane.b32.xlu0 %v2099, 12
      %v2563 = vpop.permute.xlu0 %2562
      %2564 = vrot.lane.b32.xlu0 %v2100, 12
      %v2565 = vpop.permute.xlu0 %2564
      %2566 = vrot.lane.b32.xlu0 %v2102, 12
      %v2567 = vpop.permute.xlu0 %2566
      %2568 = vrot.lane.b32.xlu0 %v2103, 12
      %v2569 = vpop.permute.xlu0 %2568
      %2570 = vrot.lane.b32.xlu0 %v2105, 12
      %v2571 = vpop.permute.xlu0 %2570
      %2572 = vrot.lane.b32.xlu0 %v2106, 12
      %v2573 = vpop.permute.xlu0 %2572
      %2574 = vrot.lane.b32.xlu0 %v2108, 12
      %v2575 = vpop.permute.xlu0 %2574
      %2576 = vrot.lane.b32.xlu0 %v2109, 12
      %v2577 = vpop.permute.xlu0 %2576
      %2578 = vrot.lane.b32.xlu0 %v2111, 12
      %v2579 = vpop.permute.xlu0 %2578
      %2580 = vrot.lane.b32.xlu0 %v2112, 12
      %v2581 = vpop.permute.xlu0 %2580
      %2582 = vrot.lane.b32.xlu0 %v2114, 12
      %v2583 = vpop.permute.xlu0 %2582
      %2584 = vrot.lane.b32.xlu0 %v2115, 12
      %v2585 = vpop.permute.xlu0 %2584
      %v2619 = vrot.slane %v2114, 1
      %v2620 = vrot.slane %v2115, 1
      %v2621 = vsel %vm450, %v2619, %v2620
      %v2622 = vrot.slane %v2116, 1
      %v2623 = vsel %vm450, %v2620, %v2622
      %2624 = vrot.lane.b32.xlu0 %v2175, 16
      %v2625 = vpop.permute.xlu0 %2624
      %2626 = vrot.lane.b32.xlu0 %v2177, 16
      %v2627 = vpop.permute.xlu0 %2626
      %2628 = vrot.lane.b32.xlu0 %v2180, 16
      %v2629 = vpop.permute.xlu0 %2628
      %2630 = vrot.lane.b32.xlu0 %v2182, 16
      %v2631 = vpop.permute.xlu0 %2630
      %2632 = vrot.lane.b32.xlu0 %v2185, 16
      %v2633 = vpop.permute.xlu0 %2632
      %2634 = vrot.lane.b32.xlu0 %v2187, 16
      %v2635 = vpop.permute.xlu0 %2634
      %2636 = vrot.lane.b32.xlu0 %v2190, 16
      %v2637 = vpop.permute.xlu0 %2636
      %2638 = vrot.lane.b32.xlu0 %v2192, 16
      %v2639 = vpop.permute.xlu0 %2638
      %2640 = vrot.lane.b32.xlu0 %v2195, 16
      %v2641 = vpop.permute.xlu0 %2640
      %2642 = vrot.lane.b32.xlu0 %v2197, 16
      %v2643 = vpop.permute.xlu0 %2642
      %2644 = vrot.lane.b32.xlu0 %v2200, 16
      %v2645 = vpop.permute.xlu0 %2644
      %2646 = vrot.lane.b32.xlu0 %v2202, 16
      %v2647 = vpop.permute.xlu0 %2646
      %2648 = vrot.lane.b32.xlu0 %v2205, 16
      %v2649 = vpop.permute.xlu0 %2648
      %2650 = vrot.lane.b32.xlu0 %v2207, 16
      %v2651 = vpop.permute.xlu0 %2650
      %2652 = vrot.lane.b32.xlu0 %v2210, 16
      %v2653 = vpop.permute.xlu0 %2652
      %2654 = vrot.lane.b32.xlu0 %v2212, 16
      %v2655 = vpop.permute.xlu0 %2654
      %2656 = vrot.lane.b32.xlu0 %v2215, 16
      %v2657 = vpop.permute.xlu0 %2656
      %2658 = vrot.lane.b32.xlu0 %v2217, 16
      %v2659 = vpop.permute.xlu0 %2658
      %2660 = vrot.lane.b32.xlu0 %v2220, 16
      %v2661 = vpop.permute.xlu0 %2660
      %2662 = vrot.lane.b32.xlu0 %v2222, 16
      %v2663 = vpop.permute.xlu0 %2662
      %2664 = vrot.lane.b32.xlu0 %v2225, 16
      %v2665 = vpop.permute.xlu0 %2664
      %2666 = vrot.lane.b32.xlu0 %v2227, 16
      %v2667 = vpop.permute.xlu0 %2666
      %2668 = vrot.lane.b32.xlu0 %v2230, 16
      %v2669 = vpop.permute.xlu0 %2668
      %2670 = vrot.lane.b32.xlu0 %v2232, 16
      %v2671 = vpop.permute.xlu0 %2670
      %2672 = vrot.lane.b32.xlu0 %v2235, 16
      %v2673 = vpop.permute.xlu0 %2672
      %2674 = vrot.lane.b32.xlu0 %v2237, 16
      %v2675 = vpop.permute.xlu0 %2674
      %2676 = vrot.lane.b32.xlu0 %v2240, 16
      %v2677 = vpop.permute.xlu0 %2676
      %2678 = vrot.lane.b32.xlu0 %v2242, 16
      %v2679 = vpop.permute.xlu0 %2678
      %2680 = vrot.lane.b32.xlu0 %v2245, 16
      %v2681 = vpop.permute.xlu0 %2680
      %2682 = vrot.lane.b32.xlu0 %v2247, 16
      %v2683 = vpop.permute.xlu0 %2682
      %2684 = vrot.lane.b32.xlu0 %v2621, 16
      %v2685 = vpop.permute.xlu0 %2684
      %2686 = vrot.lane.b32.xlu0 %v2623, 16
      %v2687 = vpop.permute.xlu0 %2686
      %v2720 = vrot.slane %v2114, 2
      %v2721 = vrot.slane %v2115, 2
      %v2722 = vsel %vm695, %v2720, %v2721
      %v2723 = vrot.slane %v2116, 2
      %v2724 = vsel %vm695, %v2721, %v2723
      %2725 = vrot.lane.b32.xlu0 %v2351, 20
      %v2726 = vpop.permute.xlu0 %2725
      %2727 = vrot.lane.b32.xlu0 %v2353, 20
      %v2728 = vpop.permute.xlu0 %2727
      %2729 = vrot.lane.b32.xlu0 %v2356, 20
      %v2730 = vpop.permute.xlu0 %2729
      %2731 = vrot.lane.b32.xlu0 %v2358, 20
      %v2732 = vpop.permute.xlu0 %2731
      %2733 = vrot.lane.b32.xlu0 %v2361, 20
      %v2734 = vpop.permute.xlu0 %2733
      %2735 = vrot.lane.b32.xlu0 %v2363, 20
      %v2736 = vpop.permute.xlu0 %2735
      %2737 = vrot.lane.b32.xlu0 %v2366, 20
      %v2738 = vpop.permute.xlu0 %2737
      %2739 = vrot.lane.b32.xlu0 %v2368, 20
      %v2740 = vpop.permute.xlu0 %2739
      %2741 = vrot.lane.b32.xlu0 %v2371, 20
      %v2742 = vpop.permute.xlu0 %2741
      %2743 = vrot.lane.b32.xlu0 %v2373, 20
      %v2744 = vpop.permute.xlu0 %2743
      %2745 = vrot.lane.b32.xlu0 %v2376, 20
      %v2746 = vpop.permute.xlu0 %2745
      %2747 = vrot.lane.b32.xlu0 %v2378, 20
      %v2748 = vpop.permute.xlu0 %2747
      %2749 = vrot.lane.b32.xlu0 %v2381, 20
      %v2750 = vpop.permute.xlu0 %2749
      %2751 = vrot.lane.b32.xlu0 %v2383, 20
      %v2752 = vpop.permute.xlu0 %2751
      %2753 = vrot.lane.b32.xlu0 %v2386, 20
      %v2754 = vpop.permute.xlu0 %2753
      %2755 = vrot.lane.b32.xlu0 %v2388, 20
      %v2756 = vpop.permute.xlu0 %2755
      %2757 = vrot.lane.b32.xlu0 %v2391, 20
      %v2758 = vpop.permute.xlu0 %2757
      %2759 = vrot.lane.b32.xlu0 %v2393, 20
      %v2760 = vpop.permute.xlu0 %2759
      %2761 = vrot.lane.b32.xlu0 %v2396, 20
      %v2762 = vpop.permute.xlu0 %2761
      %2763 = vrot.lane.b32.xlu0 %v2398, 20
      %v2764 = vpop.permute.xlu0 %2763
      %2765 = vrot.lane.b32.xlu0 %v2401, 20
      %v2766 = vpop.permute.xlu0 %2765
      %2767 = vrot.lane.b32.xlu0 %v2403, 20
      %v2768 = vpop.permute.xlu0 %2767
      %2769 = vrot.lane.b32.xlu0 %v2406, 20
      %v2770 = vpop.permute.xlu0 %2769
      %2771 = vrot.lane.b32.xlu0 %v2408, 20
      %v2772 = vpop.permute.xlu0 %2771
      %2773 = vrot.lane.b32.xlu0 %v2411, 20
      %v2774 = vpop.permute.xlu0 %2773
      %2775 = vrot.lane.b32.xlu0 %v2413, 20
      %v2776 = vpop.permute.xlu0 %2775
      %2777 = vrot.lane.b32.xlu0 %v2416, 20
      %v2778 = vpop.permute.xlu0 %2777
      %2779 = vrot.lane.b32.xlu0 %v2418, 20
      %v2780 = vpop.permute.xlu0 %2779
      %2781 = vrot.lane.b32.xlu0 %v2421, 20
      %v2782 = vpop.permute.xlu0 %2781
      %2783 = vrot.lane.b32.xlu0 %v2423, 20
      %v2784 = vpop.permute.xlu0 %2783
      %2785 = vrot.lane.b32.xlu0 %v2722, 20
      %v2786 = vpop.permute.xlu0 %2785
      %2787 = vrot.lane.b32.xlu0 %v2724, 20
      %v2788 = vpop.permute.xlu0 %2787
      %2823 = vrot.lane.b32.xlu0 %v2072, 24
      %v2824 = vpop.permute.xlu0 %2823
      %2825 = vrot.lane.b32.xlu0 %v2073, 24
      %v2826 = vpop.permute.xlu0 %2825
      %2827 = vrot.lane.b32.xlu0 %v2075, 24
      %v2828 = vpop.permute.xlu0 %2827
      %2829 = vrot.lane.b32.xlu0 %v2076, 24
      %v2830 = vpop.permute.xlu0 %2829
      %2831 = vrot.lane.b32.xlu0 %v2078, 24
      %v2832 = vpop.permute.xlu0 %2831
      %2833 = vrot.lane.b32.xlu0 %v2079, 24
      %v2834 = vpop.permute.xlu0 %2833
      %2835 = vrot.lane.b32.xlu0 %v2081, 24
      %v2836 = vpop.permute.xlu0 %2835
      %2837 = vrot.lane.b32.xlu0 %v2082, 24
      %v2838 = vpop.permute.xlu0 %2837
      %2839 = vrot.lane.b32.xlu0 %v2084, 24
      %v2840 = vpop.permute.xlu0 %2839
      %2841 = vrot.lane.b32.xlu0 %v2085, 24
      %v2842 = vpop.permute.xlu0 %2841
      %2843 = vrot.lane.b32.xlu0 %v2087, 24
      %v2844 = vpop.permute.xlu0 %2843
      %2845 = vrot.lane.b32.xlu0 %v2088, 24
      %v2846 = vpop.permute.xlu0 %2845
      %2847 = vrot.lane.b32.xlu0 %v2090, 24
      %v2848 = vpop.permute.xlu0 %2847
      %2849 = vrot.lane.b32.xlu0 %v2091, 24
      %v2850 = vpop.permute.xlu0 %2849
      %2851 = vrot.lane.b32.xlu0 %v2093, 24
      %v2852 = vpop.permute.xlu0 %2851
      %2853 = vrot.lane.b32.xlu0 %v2094, 24
      %v2854 = vpop.permute.xlu0 %2853
      %2855 = vrot.lane.b32.xlu0 %v2096, 24
      %v2856 = vpop.permute.xlu0 %2855
      %2857 = vrot.lane.b32.xlu0 %v2097, 24
      %v2858 = vpop.permute.xlu0 %2857
      %2859 = vrot.lane.b32.xlu0 %v2099, 24
      %v2860 = vpop.permute.xlu0 %2859
      %2861 = vrot.lane.b32.xlu0 %v2100, 24
      %v2862 = vpop.permute.xlu0 %2861
      %2863 = vrot.lane.b32.xlu0 %v2102, 24
      %v2864 = vpop.permute.xlu0 %2863
      %2865 = vrot.lane.b32.xlu0 %v2103, 24
      %v2866 = vpop.permute.xlu0 %2865
      %2867 = vrot.lane.b32.xlu0 %v2105, 24
      %v2868 = vpop.permute.xlu0 %2867
      %2869 = vrot.lane.b32.xlu0 %v2106, 24
      %v2870 = vpop.permute.xlu0 %2869
      %2871 = vrot.lane.b32.xlu0 %v2108, 24
      %v2872 = vpop.permute.xlu0 %2871
      %2873 = vrot.lane.b32.xlu0 %v2109, 24
      %v2874 = vpop.permute.xlu0 %2873
      %2875 = vrot.lane.b32.xlu0 %v2111, 24
      %v2876 = vpop.permute.xlu0 %2875
      %2877 = vrot.lane.b32.xlu0 %v2112, 24
      %v2878 = vpop.permute.xlu0 %2877
      %2879 = vrot.lane.b32.xlu0 %v2114, 24
      %v2880 = vpop.permute.xlu0 %2879
      %2881 = vrot.lane.b32.xlu0 %v2115, 24
      %v2882 = vpop.permute.xlu0 %2881
      %2883 = vrot.lane.b32.xlu0 %v2117, 24
      %v2884 = vpop.permute.xlu0 %2883
      %2885 = vrot.lane.b32.xlu0 %v2118, 24
      %v2886 = vpop.permute.xlu0 %2885
      %v2920 = vrot.slane %v2117, 1
      %v2921 = vrot.slane %v2118, 1
      %v2922 = vsel %vm450, %v2920, %v2921
      %v2923 = vrot.slane %v2119, 1
      %v2924 = vsel %vm450, %v2921, %v2923
      %2925 = vrot.lane.b32.xlu0 %v2180, 28
      %v2926 = vpop.permute.xlu0 %2925
      %2927 = vrot.lane.b32.xlu0 %v2182, 28
      %v2928 = vpop.permute.xlu0 %2927
      %2929 = vrot.lane.b32.xlu0 %v2185, 28
      %v2930 = vpop.permute.xlu0 %2929
      %2931 = vrot.lane.b32.xlu0 %v2187, 28
      %v2932 = vpop.permute.xlu0 %2931
      %2933 = vrot.lane.b32.xlu0 %v2190, 28
      %v2934 = vpop.permute.xlu0 %2933
      %2935 = vrot.lane.b32.xlu0 %v2192, 28
      %v2936 = vpop.permute.xlu0 %2935
      %2937 = vrot.lane.b32.xlu0 %v2195, 28
      %v2938 = vpop.permute.xlu0 %2937
      %2939 = vrot.lane.b32.xlu0 %v2197, 28
      %v2940 = vpop.permute.xlu0 %2939
      %2941 = vrot.lane.b32.xlu0 %v2200, 28
      %v2942 = vpop.permute.xlu0 %2941
      %2943 = vrot.lane.b32.xlu0 %v2202, 28
      %v2944 = vpop.permute.xlu0 %2943
      %2945 = vrot.lane.b32.xlu0 %v2205, 28
      %v2946 = vpop.permute.xlu0 %2945
      %2947 = vrot.lane.b32.xlu0 %v2207, 28
      %v2948 = vpop.permute.xlu0 %2947
      %2949 = vrot.lane.b32.xlu0 %v2210, 28
      %v2950 = vpop.permute.xlu0 %2949
      %2951 = vrot.lane.b32.xlu0 %v2212, 28
      %v2952 = vpop.permute.xlu0 %2951
      %2953 = vrot.lane.b32.xlu0 %v2215, 28
      %v2954 = vpop.permute.xlu0 %2953
      %2955 = vrot.lane.b32.xlu0 %v2217, 28
      %v2956 = vpop.permute.xlu0 %2955
      %2957 = vrot.lane.b32.xlu0 %v2220, 28
      %v2958 = vpop.permute.xlu0 %2957
      %2959 = vrot.lane.b32.xlu0 %v2222, 28
      %v2960 = vpop.permute.xlu0 %2959
      %2961 = vrot.lane.b32.xlu0 %v2225, 28
      %v2962 = vpop.permute.xlu0 %2961
      %2963 = vrot.lane.b32.xlu0 %v2227, 28
      %v2964 = vpop.permute.xlu0 %2963
      %2965 = vrot.lane.b32.xlu0 %v2230, 28
      %v2966 = vpop.permute.xlu0 %2965
      %2967 = vrot.lane.b32.xlu0 %v2232, 28
      %v2968 = vpop.permute.xlu0 %2967
      %2969 = vrot.lane.b32.xlu0 %v2235, 28
      %v2970 = vpop.permute.xlu0 %2969
      %2971 = vrot.lane.b32.xlu0 %v2237, 28
      %v2972 = vpop.permute.xlu0 %2971
      %2973 = vrot.lane.b32.xlu0 %v2240, 28
      %v2974 = vpop.permute.xlu0 %2973
      %2975 = vrot.lane.b32.xlu0 %v2242, 28
      %v2976 = vpop.permute.xlu0 %2975
      %2977 = vrot.lane.b32.xlu0 %v2245, 28
      %v2978 = vpop.permute.xlu0 %2977
      %2979 = vrot.lane.b32.xlu0 %v2247, 28
      %v2980 = vpop.permute.xlu0 %2979
      %2981 = vrot.lane.b32.xlu0 %v2621, 28
      %v2982 = vpop.permute.xlu0 %2981
      %2983 = vrot.lane.b32.xlu0 %v2623, 28
      %v2984 = vpop.permute.xlu0 %2983
      %2985 = vrot.lane.b32.xlu0 %v2922, 28
      %v2986 = vpop.permute.xlu0 %2985
      %2987 = vrot.lane.b32.xlu0 %v2924, 28
      %v2988 = vpop.permute.xlu0 %2987
      %v3021 = vrot.slane %v2117, 2
      %v3022 = vrot.slane %v2118, 2
      %v3023 = vsel %vm695, %v3021, %v3022
      %v3024 = vrot.slane %v2119, 2
      %v3025 = vsel %vm695, %v3022, %v3024
      %3026 = vrot.lane.b32.xlu0 %v2356, 32
      %v3027 = vpop.permute.xlu0 %3026
      %3028 = vrot.lane.b32.xlu0 %v2358, 32
      %v3029 = vpop.permute.xlu0 %3028
      %3030 = vrot.lane.b32.xlu0 %v2361, 32
      %v3031 = vpop.permute.xlu0 %3030
      %3032 = vrot.lane.b32.xlu0 %v2363, 32
      %v3033 = vpop.permute.xlu0 %3032
      %3034 = vrot.lane.b32.xlu0 %v2366, 32
      %v3035 = vpop.permute.xlu0 %3034
      %3036 = vrot.lane.b32.xlu0 %v2368, 32
      %v3037 = vpop.permute.xlu0 %3036
      %3038 = vrot.lane.b32.xlu0 %v2371, 32
      %v3039 = vpop.permute.xlu0 %3038
      %3040 = vrot.lane.b32.xlu0 %v2373, 32
      %v3041 = vpop.permute.xlu0 %3040
      %3042 = vrot.lane.b32.xlu0 %v2376, 32
      %v3043 = vpop.permute.xlu0 %3042
      %3044 = vrot.lane.b32.xlu0 %v2378, 32
      %v3045 = vpop.permute.xlu0 %3044
      %3046 = vrot.lane.b32.xlu0 %v2381, 32
      %v3047 = vpop.permute.xlu0 %3046
      %3048 = vrot.lane.b32.xlu0 %v2383, 32
      %v3049 = vpop.permute.xlu0 %3048
      %3050 = vrot.lane.b32.xlu0 %v2386, 32
      %v3051 = vpop.permute.xlu0 %3050
      %3052 = vrot.lane.b32.xlu0 %v2388, 32
      %v3053 = vpop.permute.xlu0 %3052
      %3054 = vrot.lane.b32.xlu0 %v2391, 32
      %v3055 = vpop.permute.xlu0 %3054
      %3056 = vrot.lane.b32.xlu0 %v2393, 32
      %v3057 = vpop.permute.xlu0 %3056
      %3058 = vrot.lane.b32.xlu0 %v2396, 32
      %v3059 = vpop.permute.xlu0 %3058
      %3060 = vrot.lane.b32.xlu0 %v2398, 32
      %v3061 = vpop.permute.xlu0 %3060
      %3062 = vrot.lane.b32.xlu0 %v2401, 32
      %v3063 = vpop.permute.xlu0 %3062
      %3064 = vrot.lane.b32.xlu0 %v2403, 32
      %v3065 = vpop.permute.xlu0 %3064
      %3066 = vrot.lane.b32.xlu0 %v2406, 32
      %v3067 = vpop.permute.xlu0 %3066
      %3068 = vrot.lane.b32.xlu0 %v2408, 32
      %v3069 = vpop.permute.xlu0 %3068
      %3070 = vrot.lane.b32.xlu0 %v2411, 32
      %v3071 = vpop.permute.xlu0 %3070
      %3072 = vrot.lane.b32.xlu0 %v2413, 32
      %v3073 = vpop.permute.xlu0 %3072
      %3074 = vrot.lane.b32.xlu0 %v2416, 32
      %v3075 = vpop.permute.xlu0 %3074
      %3076 = vrot.lane.b32.xlu0 %v2418, 32
      %v3077 = vpop.permute.xlu0 %3076
      %3078 = vrot.lane.b32.xlu0 %v2421, 32
      %v3079 = vpop.permute.xlu0 %3078
      %3080 = vrot.lane.b32.xlu0 %v2423, 32
      %v3081 = vpop.permute.xlu0 %3080
      %3082 = vrot.lane.b32.xlu0 %v2722, 32
      %v3083 = vpop.permute.xlu0 %3082
      %3084 = vrot.lane.b32.xlu0 %v2724, 32
      %v3085 = vpop.permute.xlu0 %3084
      %3086 = vrot.lane.b32.xlu0 %v3023, 32
      %v3087 = vpop.permute.xlu0 %3086
      %3088 = vrot.lane.b32.xlu0 %v3025, 32
      %v3089 = vpop.permute.xlu0 %3088
      %v3122 = vsel %vm1991, %v2066, %v2249
      %v3123 = vsel %vm1991, %v2067, %v2251
      %v3124 = vsel %vm1991, %v2069, %v2253
      %v3125 = vsel %vm1991, %v2070, %v2255
      %v3126 = vsel %vm1991, %v2072, %v2257
      %v3127 = vsel %vm1991, %v2073, %v2259
      %v3128 = vsel %vm1991, %v2075, %v2261
      %v3129 = vsel %vm1991, %v2076, %v2263
      %v3130 = vsel %vm1991, %v2078, %v2265
      %v3131 = vsel %vm1991, %v2079, %v2267
      %v3132 = vsel %vm1991, %v2081, %v2269
      %v3133 = vsel %vm1991, %v2082, %v2271
      %v3134 = vsel %vm1991, %v2084, %v2273
      %v3135 = vsel %vm1991, %v2085, %v2275
      %v3136 = vsel %vm1991, %v2087, %v2277
      %v3137 = vsel %vm1991, %v2088, %v2279
      %v3138 = vsel %vm1991, %v2090, %v2281
      %v3139 = vsel %vm1991, %v2091, %v2283
      %v3140 = vsel %vm1991, %v2093, %v2285
      %v3141 = vsel %vm1991, %v2094, %v2287
      %v3142 = vsel %vm1991, %v2096, %v2289
      %v3143 = vsel %vm1991, %v2097, %v2291
      %v3144 = vsel %vm1991, %v2099, %v2293
      %v3145 = vsel %vm1991, %v2100, %v2295
      %v3146 = vsel %vm1991, %v2102, %v2297
      %v3147 = vsel %vm1991, %v2103, %v2299
      %v3148 = vsel %vm1991, %v2105, %v2301
      %v3149 = vsel %vm1991, %v2106, %v2303
      %v3150 = vsel %vm1991, %v2108, %v2305
      %v3151 = vsel %vm1991, %v2109, %v2307
      %v3152 = vsel %vm1991, %v2111, %v2309
      %v3153 = vsel %vm1991, %v2112, %v2311
      %vm3154 = vcmask 64512
      %v3155 = vsel %vm3154, %v3122, %v2425
      %v3156 = vsel %vm3154, %v3123, %v2427
      %v3157 = vsel %vm3154, %v3124, %v2429
      %v3158 = vsel %vm3154, %v3125, %v2431
      %v3159 = vsel %vm3154, %v3126, %v2433
      %v3160 = vsel %vm3154, %v3127, %v2435
      %v3161 = vsel %vm3154, %v3128, %v2437
      %v3162 = vsel %vm3154, %v3129, %v2439
      %v3163 = vsel %vm3154, %v3130, %v2441
      %v3164 = vsel %vm3154, %v3131, %v2443
      %v3165 = vsel %vm3154, %v3132, %v2445
      %v3166 = vsel %vm3154, %v3133, %v2447
      %v3167 = vsel %vm3154, %v3134, %v2449
      %v3168 = vsel %vm3154, %v3135, %v2451
      %v3169 = vsel %vm3154, %v3136, %v2453
      %v3170 = vsel %vm3154, %v3137, %v2455
      %v3171 = vsel %vm3154, %v3138, %v2457
      %v3172 = vsel %vm3154, %v3139, %v2459
      %v3173 = vsel %vm3154, %v3140, %v2461
      %v3174 = vsel %vm3154, %v3141, %v2463
      %v3175 = vsel %vm3154, %v3142, %v2465
      %v3176 = vsel %vm3154, %v3143, %v2467
      %v3177 = vsel %vm3154, %v3144, %v2469
      %v3178 = vsel %vm3154, %v3145, %v2471
      %v3179 = vsel %vm3154, %v3146, %v2473
      %v3180 = vsel %vm3154, %v3147, %v2475
      %v3181 = vsel %vm3154, %v3148, %v2477
      %v3182 = vsel %vm3154, %v3149, %v2479
      %v3183 = vsel %vm3154, %v3150, %v2481
      %v3184 = vsel %vm3154, %v3151, %v2483
      %v3185 = vsel %vm3154, %v3152, %v2485
      %v3186 = vsel %vm3154, %v3153, %v2487
      %vm3187 = vcmask 97280
      %v3188 = vsel %vm3187, %v3155, %v2523
      %v3189 = vsel %vm3187, %v3156, %v2525
      %v3190 = vsel %vm3187, %v3157, %v2527
      %v3191 = vsel %vm3187, %v3158, %v2529
      %v3192 = vsel %vm3187, %v3159, %v2531
      %v3193 = vsel %vm3187, %v3160, %v2533
      %v3194 = vsel %vm3187, %v3161, %v2535
      %v3195 = vsel %vm3187, %v3162, %v2537
      %v3196 = vsel %vm3187, %v3163, %v2539
      %v3197 = vsel %vm3187, %v3164, %v2541
      %v3198 = vsel %vm3187, %v3165, %v2543
      %v3199 = vsel %vm3187, %v3166, %v2545
      %v3200 = vsel %vm3187, %v3167, %v2547
      %v3201 = vsel %vm3187, %v3168, %v2549
      %v3202 = vsel %vm3187, %v3169, %v2551
      %v3203 = vsel %vm3187, %v3170, %v2553
      %v3204 = vsel %vm3187, %v3171, %v2555
      %v3205 = vsel %vm3187, %v3172, %v2557
      %v3206 = vsel %vm3187, %v3173, %v2559
      %v3207 = vsel %vm3187, %v3174, %v2561
      %v3208 = vsel %vm3187, %v3175, %v2563
      %v3209 = vsel %vm3187, %v3176, %v2565
      %v3210 = vsel %vm3187, %v3177, %v2567
      %v3211 = vsel %vm3187, %v3178, %v2569
      %v3212 = vsel %vm3187, %v3179, %v2571
      %v3213 = vsel %vm3187, %v3180, %v2573
      %v3214 = vsel %vm3187, %v3181, %v2575
      %v3215 = vsel %vm3187, %v3182, %v2577
      %v3216 = vsel %vm3187, %v3183, %v2579
      %v3217 = vsel %vm3187, %v3184, %v2581
      %v3218 = vsel %vm3187, %v3185, %v2583
      %v3219 = vsel %vm3187, %v3186, %v2585
      %vm3220 = vcmask 130048
      %v3221 = vsel %vm3220, %v3188, %v2625
      %v3222 = vsel %vm3220, %v3189, %v2627
      %v3223 = vsel %vm3220, %v3190, %v2629
      %v3224 = vsel %vm3220, %v3191, %v2631
      %v3225 = vsel %vm3220, %v3192, %v2633
      %v3226 = vsel %vm3220, %v3193, %v2635
      %v3227 = vsel %vm3220, %v3194, %v2637
      %v3228 = vsel %vm3220, %v3195, %v2639
      %v3229 = vsel %vm3220, %v3196, %v2641
      %v3230 = vsel %vm3220, %v3197, %v2643
      %v3231 = vsel %vm3220, %v3198, %v2645
      %v3232 = vsel %vm3220, %v3199, %v2647
      %v3233 = vsel %vm3220, %v3200, %v2649
      %v3234 = vsel %vm3220, %v3201, %v2651
      %v3235 = vsel %vm3220, %v3202, %v2653
      %v3236 = vsel %vm3220, %v3203, %v2655
      %v3237 = vsel %vm3220, %v3204, %v2657
      %v3238 = vsel %vm3220, %v3205, %v2659
      %v3239 = vsel %vm3220, %v3206, %v2661
      %v3240 = vsel %vm3220, %v3207, %v2663
      %v3241 = vsel %vm3220, %v3208, %v2665
      %v3242 = vsel %vm3220, %v3209, %v2667
      %v3243 = vsel %vm3220, %v3210, %v2669
      %v3244 = vsel %vm3220, %v3211, %v2671
      %v3245 = vsel %vm3220, %v3212, %v2673
      %v3246 = vsel %vm3220, %v3213, %v2675
      %v3247 = vsel %vm3220, %v3214, %v2677
      %v3248 = vsel %vm3220, %v3215, %v2679
      %v3249 = vsel %vm3220, %v3216, %v2681
      %v3250 = vsel %vm3220, %v3217, %v2683
      %v3251 = vsel %vm3220, %v3218, %v2685
      %v3252 = vsel %vm3220, %v3219, %v2687
      %vm3253 = vcmask 162816
      %v3254 = vsel %vm3253, %v3221, %v2726
      %v3255 = vsel %vm3253, %v3222, %v2728
      %v3256 = vsel %vm3253, %v3223, %v2730
      %v3257 = vsel %vm3253, %v3224, %v2732
      %v3258 = vsel %vm3253, %v3225, %v2734
      %v3259 = vsel %vm3253, %v3226, %v2736
      %v3260 = vsel %vm3253, %v3227, %v2738
      %v3261 = vsel %vm3253, %v3228, %v2740
      %v3262 = vsel %vm3253, %v3229, %v2742
      %v3263 = vsel %vm3253, %v3230, %v2744
      %v3264 = vsel %vm3253, %v3231, %v2746
      %v3265 = vsel %vm3253, %v3232, %v2748
      %v3266 = vsel %vm3253, %v3233, %v2750
      %v3267 = vsel %vm3253, %v3234, %v2752
      %v3268 = vsel %vm3253, %v3235, %v2754
      %v3269 = vsel %vm3253, %v3236, %v2756
      %v3270 = vsel %vm3253, %v3237, %v2758
      %v3271 = vsel %vm3253, %v3238, %v2760
      %v3272 = vsel %vm3253, %v3239, %v2762
      %v3273 = vsel %vm3253, %v3240, %v2764
      %v3274 = vsel %vm3253, %v3241, %v2766
      %v3275 = vsel %vm3253, %v3242, %v2768
      %v3276 = vsel %vm3253, %v3243, %v2770
      %v3277 = vsel %vm3253, %v3244, %v2772
      %v3278 = vsel %vm3253, %v3245, %v2774
      %v3279 = vsel %vm3253, %v3246, %v2776
      %v3280 = vsel %vm3253, %v3247, %v2778
      %v3281 = vsel %vm3253, %v3248, %v2780
      %v3282 = vsel %vm3253, %v3249, %v2782
      %v3283 = vsel %vm3253, %v3250, %v2784
      %v3284 = vsel %vm3253, %v3251, %v2786
      %v3285 = vsel %vm3253, %v3252, %v2788
      %vm3286 = vcmask 195584
      %v3287 = vsel %vm3286, %v3254, %v2824
      %v3288 = vsel %vm3286, %v3255, %v2826
      %v3289 = vsel %vm3286, %v3256, %v2828
      %v3290 = vsel %vm3286, %v3257, %v2830
      %v3291 = vsel %vm3286, %v3258, %v2832
      %v3292 = vsel %vm3286, %v3259, %v2834
      %v3293 = vsel %vm3286, %v3260, %v2836
      %v3294 = vsel %vm3286, %v3261, %v2838
      %v3295 = vsel %vm3286, %v3262, %v2840
      %v3296 = vsel %vm3286, %v3263, %v2842
      %v3297 = vsel %vm3286, %v3264, %v2844
      %v3298 = vsel %vm3286, %v3265, %v2846
      %v3299 = vsel %vm3286, %v3266, %v2848
      %v3300 = vsel %vm3286, %v3267, %v2850
      %v3301 = vsel %vm3286, %v3268, %v2852
      %v3302 = vsel %vm3286, %v3269, %v2854
      %v3303 = vsel %vm3286, %v3270, %v2856
      %v3304 = vsel %vm3286, %v3271, %v2858
      %v3305 = vsel %vm3286, %v3272, %v2860
      %v3306 = vsel %vm3286, %v3273, %v2862
      %v3307 = vsel %vm3286, %v3274, %v2864
      %v3308 = vsel %vm3286, %v3275, %v2866
      %v3309 = vsel %vm3286, %v3276, %v2868
      %v3310 = vsel %vm3286, %v3277, %v2870
      %v3311 = vsel %vm3286, %v3278, %v2872
      %v3312 = vsel %vm3286, %v3279, %v2874
      %v3313 = vsel %vm3286, %v3280, %v2876
      %v3314 = vsel %vm3286, %v3281, %v2878
      %v3315 = vsel %vm3286, %v3282, %v2880
      %v3316 = vsel %vm3286, %v3283, %v2882
      %v3317 = vsel %vm3286, %v3284, %v2884
      %v3318 = vsel %vm3286, %v3285, %v2886
      %vm3319 = vcmask 228352
      %v3320 = vsel %vm3319, %v3287, %v2926
      %v3321 = vsel %vm3319, %v3288, %v2928
      %v3322 = vsel %vm3319, %v3289, %v2930
      %v3323 = vsel %vm3319, %v3290, %v2932
      %v3324 = vsel %vm3319, %v3291, %v2934
      %v3325 = vsel %vm3319, %v3292, %v2936
      %v3326 = vsel %vm3319, %v3293, %v2938
      %v3327 = vsel %vm3319, %v3294, %v2940
      %v3328 = vsel %vm3319, %v3295, %v2942
      %v3329 = vsel %vm3319, %v3296, %v2944
      %v3330 = vsel %vm3319, %v3297, %v2946
      %v3331 = vsel %vm3319, %v3298, %v2948
      %v3332 = vsel %vm3319, %v3299, %v2950
      %v3333 = vsel %vm3319, %v3300, %v2952
      %v3334 = vsel %vm3319, %v3301, %v2954
      %v3335 = vsel %vm3319, %v3302, %v2956
      %v3336 = vsel %vm3319, %v3303, %v2958
      %v3337 = vsel %vm3319, %v3304, %v2960
      %v3338 = vsel %vm3319, %v3305, %v2962
      %v3339 = vsel %vm3319, %v3306, %v2964
      %v3340 = vsel %vm3319, %v3307, %v2966
      %v3341 = vsel %vm3319, %v3308, %v2968
      %v3342 = vsel %vm3319, %v3309, %v2970
      %v3343 = vsel %vm3319, %v3310, %v2972
      %v3344 = vsel %vm3319, %v3311, %v2974
      %v3345 = vsel %vm3319, %v3312, %v2976
      %v3346 = vsel %vm3319, %v3313, %v2978
      %v3347 = vsel %vm3319, %v3314, %v2980
      %v3348 = vsel %vm3319, %v3315, %v2982
      %v3349 = vsel %vm3319, %v3316, %v2984
      %v3350 = vsel %vm3319, %v3317, %v2986
      %v3351 = vsel %vm3319, %v3318, %v2988
      %vm3352 = vcmask 261120
      %v3353 = vsel %vm3352, %v3320, %v3027
      %v3354 = vsel %vm3352, %v3321, %v3029
      %v3355 = vsel %vm3352, %v3322, %v3031
      %v3356 = vsel %vm3352, %v3323, %v3033
      %v3357 = vsel %vm3352, %v3324, %v3035
      %v3358 = vsel %vm3352, %v3325, %v3037
      %v3359 = vsel %vm3352, %v3326, %v3039
      %v3360 = vsel %vm3352, %v3327, %v3041
      %v3361 = vsel %vm3352, %v3328, %v3043
      %v3362 = vsel %vm3352, %v3329, %v3045
      %v3363 = vsel %vm3352, %v3330, %v3047
      %v3364 = vsel %vm3352, %v3331, %v3049
      %v3365 = vsel %vm3352, %v3332, %v3051
      %v3366 = vsel %vm3352, %v3333, %v3053
      %v3367 = vsel %vm3352, %v3334, %v3055
      %v3368 = vsel %vm3352, %v3335, %v3057
      %v3369 = vsel %vm3352, %v3336, %v3059
      %v3370 = vsel %vm3352, %v3337, %v3061
      %v3371 = vsel %vm3352, %v3338, %v3063
      %v3372 = vsel %vm3352, %v3339, %v3065
      %v3373 = vsel %vm3352, %v3340, %v3067
      %v3374 = vsel %vm3352, %v3341, %v3069
      %v3375 = vsel %vm3352, %v3342, %v3071
      %v3376 = vsel %vm3352, %v3343, %v3073
      %v3377 = vsel %vm3352, %v3344, %v3075
      %v3378 = vsel %vm3352, %v3345, %v3077
      %v3379 = vsel %vm3352, %v3346, %v3079
      %v3380 = vsel %vm3352, %v3347, %v3081
      %v3381 = vsel %vm3352, %v3348, %v3083
      %v3382 = vsel %vm3352, %v3349, %v3085
      %v3383 = vsel %vm3352, %v3350, %v3087
      %v3384 = vsel %vm3352, %v3351, %v3089
      %v3385 = vpack.c.bf16 %v3354, %v3353
      %v3386 = vpack.c.bf16 %v3356, %v3355
      %v3387 = vpack.c.bf16 %v3358, %v3357
      %v3388 = vpack.c.bf16 %v3360, %v3359
      %v3389 = vpack.c.bf16 %v3362, %v3361
      %v3390 = vpack.c.bf16 %v3364, %v3363
      %v3391 = vpack.c.bf16 %v3366, %v3365
      %v3392 = vpack.c.bf16 %v3368, %v3367
      %v3393 = vpack.c.bf16 %v3370, %v3369
      %v3394 = vpack.c.bf16 %v3372, %v3371
      %v3395 = vpack.c.bf16 %v3374, %v3373
      %v3396 = vpack.c.bf16 %v3376, %v3375
      %v3397 = vpack.c.bf16 %v3378, %v3377
      %v3398 = vpack.c.bf16 %v3380, %v3379
      %v3399 = vpack.c.bf16 %v3382, %v3381
      %v3400 = vpack.c.bf16 %v3384, %v3383
      %v3401 = vld [vmem:[%s3] sm:$0xf]
      %v3402 = vld [vmem:[%s3 + $0x4] sm:$0xf]
      %v3403 = vld [vmem:[%s3 + $0x8] sm:$0xf]
      %v3404 = vld [vmem:[%s3 + $0xc] sm:$0xf]
      %v3405 = vld [vmem:[%s3 + $0x10] sm:$0x3]
      %v3406 = vld [vmem:[%s4] sm:$0x1]
      %v3408 = vlaneseq
      %v3409 = vshrl.u32 %v3408, 7
      %v3410 = vsub.s32 0, %v3409
      %v3411 = vrot.slane %v3406, %v3410
      %v3418 = vunpack.c.l.b16 %v3401
      %v3419 = vunpack.c.l.b16 %v3402
      %v3420 = vunpack.c.l.b16 %v3403
      %v3421 = vunpack.c.l.b16 %v3404
      %v3422 = vunpack.c.l.b16 %v3405
      %v3423 = vpack.c.b16 %v3419, %v3418
      %v3424 = vpack.c.b16 %v3421, %v3420
      %v3425 = vpack.c.b16 %v3422, %v3422
      %vm3428 = vcmask 293888
      %v3430 = vsel %vm3428, %v3385, 0
      %v3433 = vsel %vm3428, %v3386, 0
      %v3436 = vsel %vm3428, %v3387, 0
      %v3439 = vsel %vm3428, %v3388, 0
      %v3442 = vsel %vm3428, %v3389, 0
      %v3445 = vsel %vm3428, %v3390, 0
      %v3448 = vsel %vm3428, %v3391, 0
      %v3451 = vsel %vm3428, %v3392, 0
      %v3454 = vsel %vm3428, %v3393, 0
      %v3457 = vsel %vm3428, %v3394, 0
      %v3460 = vsel %vm3428, %v3395, 0
      %v3463 = vsel %vm3428, %v3396, 0
      %v3466 = vsel %vm3428, %v3397, 0
      %v3469 = vsel %vm3428, %v3398, 0
      %v3472 = vsel %vm3428, %v3399, 0
      %v3475 = vsel %vm3428, %v3400, 0
      %vm3477 = vcmask 1041408
      %v3479 = vsel %vm3477, %v3425, 0
      %3481 = vmatprep.subr.bf16.mxu0 0
      %3482 = vmatpush1.bf16.msra.mxu0 %v3423
      %3483 = vmatprep.subr.bf16.mxu0 0
      %3484 = vmatpush1.bf16.msra.mxu0 %v3424
      %3485 = vmatprep.subr.bf16.mxu0 0
      %3486 = vmatpush1.bf16.msra.mxu0 %v3479
      %3487 = vmatprep.subr.bf16.mxu0 0
      %3488 = vmatpush1.bf16.msra.mxu0 0
      %3489 = vmatprep.subr.bf16.mxu0 0
      %3490 = vmatpush1.bf16.msra.mxu0 0
      %3491 = vmatprep.subr.bf16.mxu0 0
      %3492 = vmatpush1.bf16.msra.mxu0 0
      %3493 = vmatprep.subr.bf16.mxu0 0
      %3494 = vmatpush1.bf16.msra.mxu0 0
      %3495 = vmatprep.subr.bf16.mxu0 0
      %3496 = vmatpush1.bf16.msra.mxu0 0
      %3497 = vmatprep.subr.bf16.mxu0 0
      %3498 = vmatpush1.bf16.msra.mxu0 0
      %3499 = vmatprep.subr.bf16.mxu0 0
      %3500 = vmatpush1.bf16.msra.mxu0 0
      %3501 = vmatprep.subr.bf16.mxu0 0
      %3502 = vmatpush1.bf16.msra.mxu0 0
      %3503 = vmatprep.subr.bf16.mxu0 0
      %3504 = vmatpush1.bf16.msra.mxu0 0
      %3505 = vmatprep.subr.bf16.mxu0 0
      %3506 = vmatpush1.bf16.msra.mxu0 0
      %3507 = vmatprep.subr.bf16.mxu0 0
      %3508 = vmatpush1.bf16.msra.mxu0 0
      %3509 = vmatprep.subr.bf16.mxu0 0
      %3510 = vmatpush1.bf16.msra.mxu0 0
      %3511 = vmatprep.subr.bf16.mxu0 0
      %3512 = vmatpush1.bf16.msra.mxu0 0
      %3513 = vmatprep.mubr.bf16.mxu0 0
      %3514 = vmatmul.mubr.bf16.gmra.mrb[0].mxu0 %v3430
      %v3515 = vpop.f32.mrb[0].mxu0
      %v3516 = vadd.f32 %v3411, %v3515
      %v3517 = vpop.f32.mrb[0].mxu0
      %v3518 = vpop.f32.mrb[0].mxu0
      %v3519 = vadd.f32 %v3411, %v3518
      %v3520 = vpop.f32.mrb[0].mxu0
      %3521 = vmatprep.mubr.bf16.mxu0 0
      %3522 = vmatmul.mubr.bf16.gmra.mrb[0].mxu0 %v3433
      %v3523 = vpop.f32.mrb[0].mxu0
      %v3524 = vadd.f32 %v3411, %v3523
      %v3525 = vpop.f32.mrb[0].mxu0
      %v3526 = vpop.f32.mrb[0].mxu0
      %v3527 = vadd.f32 %v3411, %v3526
      %v3528 = vpop.f32.mrb[0].mxu0
      %3529 = vmatprep.mubr.bf16.mxu0 0
      %3530 = vmatmul.mubr.bf16.gmra.mrb[0].mxu0 %v3436
      %v3531 = vpop.f32.mrb[0].mxu0
      %v3532 = vadd.f32 %v3411, %v3531
      %v3533 = vpop.f32.mrb[0].mxu0
      %v3534 = vpop.f32.mrb[0].mxu0
      %v3535 = vadd.f32 %v3411, %v3534
      %v3536 = vpop.f32.mrb[0].mxu0
      %3537 = vmatprep.mubr.bf16.mxu0 0
      %3538 = vmatmul.mubr.bf16.gmra.mrb[0].mxu0 %v3439
      %v3539 = vpop.f32.mrb[0].mxu0
      %v3540 = vadd.f32 %v3411, %v3539
      %v3541 = vpop.f32.mrb[0].mxu0
      %v3542 = vpop.f32.mrb[0].mxu0
      %v3543 = vadd.f32 %v3411, %v3542
      %v3544 = vpop.f32.mrb[0].mxu0
      %3545 = vmatprep.mubr.bf16.mxu0 0
      %3546 = vmatmul.mubr.bf16.gmra.mrb[0].mxu0 %v3442
      %v3547 = vpop.f32.mrb[0].mxu0
      %v3548 = vadd.f32 %v3411, %v3547
      %v3549 = vpop.f32.mrb[0].mxu0
      %v3550 = vpop.f32.mrb[0].mxu0
      %v3551 = vadd.f32 %v3411, %v3550
      %v3552 = vpop.f32.mrb[0].mxu0
      %3553 = vmatprep.mubr.bf16.mxu0 0
      %3554 = vmatmul.mubr.bf16.gmra.mrb[0].mxu0 %v3445
      %v3555 = vpop.f32.mrb[0].mxu0
      %v3556 = vadd.f32 %v3411, %v3555
      %v3557 = vpop.f32.mrb[0].mxu0
      %v3558 = vpop.f32.mrb[0].mxu0
      %v3559 = vadd.f32 %v3411, %v3558
      %v3560 = vpop.f32.mrb[0].mxu0
      %3561 = vmatprep.mubr.bf16.mxu0 0
      %3562 = vmatmul.mubr.bf16.gmra.mrb[0].mxu0 %v3448
      %v3563 = vpop.f32.mrb[0].mxu0
      %v3564 = vadd.f32 %v3411, %v3563
      %v3565 = vpop.f32.mrb[0].mxu0
      %v3566 = vpop.f32.mrb[0].mxu0
      %v3567 = vadd.f32 %v3411, %v3566
      %v3568 = vpop.f32.mrb[0].mxu0
      %3569 = vmatprep.mubr.bf16.mxu0 0
      %3570 = vmatmul.mubr.bf16.gmra.mrb[0].mxu0 %v3451
      %v3571 = vpop.f32.mrb[0].mxu0
      %v3572 = vadd.f32 %v3411, %v3571
      %v3573 = vpop.f32.mrb[0].mxu0
      %v3574 = vpop.f32.mrb[0].mxu0
      %v3575 = vadd.f32 %v3411, %v3574
      %v3576 = vpop.f32.mrb[0].mxu0
      %3577 = vmatprep.mubr.bf16.mxu0 0
      %3578 = vmatmul.mubr.bf16.gmra.mrb[0].mxu0 %v3454
      %v3579 = vpop.f32.mrb[0].mxu0
      %v3580 = vadd.f32 %v3411, %v3579
      %v3581 = vpop.f32.mrb[0].mxu0
      %v3582 = vpop.f32.mrb[0].mxu0
      %v3583 = vadd.f32 %v3411, %v3582
      %v3584 = vpop.f32.mrb[0].mxu0
      %3585 = vmatprep.mubr.bf16.mxu0 0
      %3586 = vmatmul.mubr.bf16.gmra.mrb[0].mxu0 %v3457
      %v3587 = vpop.f32.mrb[0].mxu0
      %v3588 = vadd.f32 %v3411, %v3587
      %v3589 = vpop.f32.mrb[0].mxu0
      %v3590 = vpop.f32.mrb[0].mxu0
      %v3591 = vadd.f32 %v3411, %v3590
      %v3592 = vpop.f32.mrb[0].mxu0
      %3593 = vmatprep.mubr.bf16.mxu0 0
      %3594 = vmatmul.mubr.bf16.gmra.mrb[0].mxu0 %v3460
      %v3595 = vpop.f32.mrb[0].mxu0
      %v3596 = vadd.f32 %v3411, %v3595
      %v3597 = vpop.f32.mrb[0].mxu0
      %v3598 = vpop.f32.mrb[0].mxu0
      %v3599 = vadd.f32 %v3411, %v3598
      %v3600 = vpop.f32.mrb[0].mxu0
      %3601 = vmatprep.mubr.bf16.mxu0 0
      %3602 = vmatmul.mubr.bf16.gmra.mrb[0].mxu0 %v3463
      %v3603 = vpop.f32.mrb[0].mxu0
      %v3604 = vadd.f32 %v3411, %v3603
      %v3605 = vpop.f32.mrb[0].mxu0
      %v3606 = vpop.f32.mrb[0].mxu0
      %v3607 = vadd.f32 %v3411, %v3606
      %v3608 = vpop.f32.mrb[0].mxu0
      %3609 = vmatprep.mubr.bf16.mxu0 0
      %3610 = vmatmul.mubr.bf16.gmra.mrb[0].mxu0 %v3466
      %v3611 = vpop.f32.mrb[0].mxu0
      %v3612 = vadd.f32 %v3411, %v3611
      %v3613 = vpop.f32.mrb[0].mxu0
      %v3614 = vpop.f32.mrb[0].mxu0
      %v3615 = vadd.f32 %v3411, %v3614
      %v3616 = vpop.f32.mrb[0].mxu0
      %3617 = vmatprep.mubr.bf16.mxu0 0
      %3618 = vmatmul.mubr.bf16.gmra.mrb[0].mxu0 %v3469
      %v3619 = vpop.f32.mrb[0].mxu0
      %v3620 = vadd.f32 %v3411, %v3619
      %v3621 = vpop.f32.mrb[0].mxu0
      %v3622 = vpop.f32.mrb[0].mxu0
      %v3623 = vadd.f32 %v3411, %v3622
      %v3624 = vpop.f32.mrb[0].mxu0
      %3625 = vmatprep.mubr.bf16.mxu0 0
      %3626 = vmatmul.mubr.bf16.gmra.mrb[0].mxu0 %v3472
      %v3627 = vpop.f32.mrb[0].mxu0
      %v3628 = vadd.f32 %v3411, %v3627
      %v3629 = vpop.f32.mrb[0].mxu0
      %v3630 = vpop.f32.mrb[0].mxu0
      %v3631 = vadd.f32 %v3411, %v3630
      %v3632 = vpop.f32.mrb[0].mxu0
      %3633 = vmatprep.mubr.bf16.mxu0 0
      %3634 = vmatmul.mubr.bf16.gmra.mrb[0].mxu0 %v3475
      %v3635 = vpop.f32.mrb[0].mxu0
      %v3636 = vadd.f32 %v3411, %v3635
      %v3637 = vpop.f32.mrb[0].mxu0
      %v3638 = vpop.f32.mrb[0].mxu0
      %v3639 = vadd.f32 %v3411, %v3638
      %v3640 = vpop.f32.mrb[0].mxu0
      %3641 = vdwg.mxu0
      %3642 = vxpose.xlu0.b32.start [1/16] %v3516, 128
      %3643 = vxpose.xlu0.b32.cont [2/16] %v3519, 128
      %3644 = vxpose.xlu0.b32.cont [3/16] %v3524, 128
      %3645 = vxpose.xlu0.b32.cont [4/16] %v3527, 128
      %3646 = vxpose.xlu0.b32.cont [5/16] %v3532, 128
      %3647 = vxpose.xlu0.b32.cont [6/16] %v3535, 128
      %3648 = vxpose.xlu0.b32.cont [7/16] %v3540, 128
      %3649 = vxpose.xlu0.b32.cont [8/16] %v3543, 128
      %3650 = vxpose.xlu0.b32.cont [9/16] %v3548, 128
      %3651 = vxpose.xlu0.b32.cont [10/16] %v3551, 128
      %3652 = vxpose.xlu0.b32.cont [11/16] %v3556, 128
      %3653 = vxpose.xlu0.b32.cont [12/16] %v3559, 128
      %3654 = vxpose.xlu0.b32.cont [13/16] %v3564, 128
      %3655 = vxpose.xlu0.b32.cont [14/16] %v3567, 128
      %3656 = vxpose.xlu0.b32.cont [15/16] %v3572, 128
      %3657 = vxpose.xlu0.b32.end [16/16] %v3575, 128
      %v3658 = vpop.trf.xlu0
      %v3659 = vpop.trf.xlu0
      %v3660 = vpop.trf.xlu0
      %v3661 = vpop.trf.xlu0
      %v3662 = vpop.trf.xlu0
      %v3663 = vpop.trf.xlu0
      %v3664 = vpop.trf.xlu0
      %v3665 = vpop.trf.xlu0
      %v3666 = vpop.trf.xlu0
      %v3667 = vpop.trf.xlu0
      %v3668 = vpop.trf.xlu0
      %v3669 = vpop.trf.xlu0
      %v3670 = vpop.trf.xlu0
      %v3671 = vpop.trf.xlu0
      %v3672 = vpop.trf.xlu0
      %v3673 = vpop.trf.xlu0
      %3674 = vxpose.xlu0.b32.start [1/16] %v3580, 128
      %3675 = vxpose.xlu0.b32.cont [2/16] %v3583, 128
      %3676 = vxpose.xlu0.b32.cont [3/16] %v3588, 128
      %3677 = vxpose.xlu0.b32.cont [4/16] %v3591, 128
      %3678 = vxpose.xlu0.b32.cont [5/16] %v3596, 128
      %3679 = vxpose.xlu0.b32.cont [6/16] %v3599, 128
      %3680 = vxpose.xlu0.b32.cont [7/16] %v3604, 128
      %3681 = vxpose.xlu0.b32.cont [8/16] %v3607, 128
      %3682 = vxpose.xlu0.b32.cont [9/16] %v3612, 128
      %3683 = vxpose.xlu0.b32.cont [10/16] %v3615, 128
      %3684 = vxpose.xlu0.b32.cont [11/16] %v3620, 128
      %3685 = vxpose.xlu0.b32.cont [12/16] %v3623, 128
      %3686 = vxpose.xlu0.b32.cont [13/16] %v3628, 128
      %3687 = vxpose.xlu0.b32.cont [14/16] %v3631, 128
      %3688 = vxpose.xlu0.b32.cont [15/16] %v3636, 128
      %3689 = vxpose.xlu0.b32.end [16/16] %v3639, 128
      %v3690 = vpop.trf.xlu0
      %v3691 = vpop.trf.xlu0
      %v3692 = vpop.trf.xlu0
      %v3693 = vpop.trf.xlu0
      %v3694 = vpop.trf.xlu0
      %v3695 = vpop.trf.xlu0
      %v3696 = vpop.trf.xlu0
      %v3697 = vpop.trf.xlu0
      %v3698 = vpop.trf.xlu0
      %v3699 = vpop.trf.xlu0
      %v3700 = vpop.trf.xlu0
      %v3701 = vpop.trf.xlu0
      %v3702 = vpop.trf.xlu0
      %v3703 = vpop.trf.xlu0
      %v3704 = vpop.trf.xlu0
      %v3705 = vpop.trf.xlu0
      %3706 = vst [vmem:[%s224] sm:$0xff] %v3658
      %3707 = vst [vmem:[%s224 + $0x8] sm:$0xff] %v3690
      %p3708 = scmp.lt.s32.totalorder %s16, 1
      %s3709 = scalar_select %p3708, %s16, 1
      %s3710 = smul.addr %s3709, 2
      %s3711 = smul.addr %s3710, 8
      %s3712 = scalar_lea.vmem %s5, %s3711
      // Predicated region
      $region41: #{depthwise_separable_conv_one.1} parent=39 // pred_check
        %p3713 = pneg %p144
      $region42: #{depthwise_separable_conv_one.1} parent=39 // pred_check_branch
        %3715 = sbr.rel (%p3713) target = $region44
      $region43: #{depthwise_separable_conv_one.1} parent=39 // pred_region
        _
      $region44: #{depthwise_separable_conv_one.1} parent=39 // pred_fallthru
        _
    $region40: #{depthwise_separable_conv_one.1} parent=5 // pred_fallthru
      _
    %p3716 = scmp.le.s32.totalorder 2, %s11
    // Predicated region
    $region45: #{depthwise_separable_conv_one.1} parent=5 // pred_check
      %p3717 = pneg %p3716
    $region46: #{depthwise_separable_conv_one.1} parent=5 // pred_check_branch
      %3719 = sbr.rel (%p3717) target = $region48
    $region47: #{depthwise_separable_conv_one.1} parent=5 // pred_region
      %s3720 = ssub.s32 %s11, 2
      // Predicated region
      $region49: #{depthwise_separable_conv_one.1} parent=47 // pred_check
        %p3721 = pneg %p150
      $region50: #{depthwise_separable_conv_one.1} parent=47 // pred_check_branch
        %3723 = sbr.rel (%p3721) target = $region52
      $region51: #{depthwise_separable_conv_one.1} parent=47 // pred_region
        %p3724 = scmp.lt.s32.totalorder %s17, 1
        %s3725 = scalar_select %p3724, %s17, 1
        %s3726 = smul.addr %s3725, 2
        %s3727 = smul.addr %s3726, 8
        %s3728 = scalar_lea.vmem %s5, %s3727
      $region52: #{depthwise_separable_conv_one.1} parent=47 // pred_fallthru
        _
    $region48: #{depthwise_separable_conv_one.1} parent=5 // pred_fallthru
      _
  $region6: #{depthwise_separable_conv_one.1} parent=0 // loop_footer
    %s15 = sadd.s32 1, %s11
  $region7: #{depthwise_separable_conv_one.1} parent=0 // loop_footer_branch
    %10 = sbr.rel target = $region3
  $region8: #{depthwise_separable_conv_one.1} parent=0 // loop_exit
    _

</llo_original>
